<compile_context>
chip_gen: v7x
topology: tpu7x:2x2x1
jax: 0.10.0
libtpu: 0.0.40
codegen_flags: <defaults>
</compile_context>

<pallas_src>
import jax
import jax.numpy as jnp
from jax import lax
from jax.experimental import pallas as pl
from jax.experimental.pallas import tpu as pltpu

EPS = 1e-5


def _round_up(x, m):
    return (x + m - 1) // m * m


def _build_double_conv_call(N, H, W, Cin, Cmid, Cout):
    HW = H * W
    PADW = W + 1                          # halo: every 3x3 tap stays in-bounds
    CK = _round_up(max(Cin, Cmid), 8)     # aligned K for the MXU dots

    def kernel(x_ref, w1_ref, w2_ref, g1_ref, be1_ref, g2_ref, be2_ref,
               mask_ref, o_ref, xp_ref):
        f32 = jnp.float32
        m_left = mask_ref[0:1, :]          # 0 where col == 0   (dx = -1 taps)
        m_right = mask_ref[1:2, :]         # 0 where col == W-1 (dx = +1 taps)

        # One-time scratch init: zero ONLY the halo strips and the channel rows
        # stage 1 does not write (no full zero-fill + interior overwrite).
        xp_ref[:, :PADW] = jnp.zeros((CK, PADW), f32)
        xp_ref[:, PADW + HW:] = jnp.zeros((CK, PADW), f32)
        if Cin < CK:
            xp_ref[Cin:, PADW:PADW + HW] = jnp.zeros((CK - Cin, HW), f32)

        def conv3x3(w_ref, co):
            # 9 accumulated MXU dots straight off the padded scratch row;
            # no materialised im2col buffer.
            acc = jnp.zeros((co, HW), f32)
            for ky in range(3):
                for kx in range(3):
                    off = (ky - 1) * W + (kx - 1)
                    rhs = xp_ref[:, PADW + off:PADW + off + HW]   # (CK, HW)
                    if kx == 0:
                        rhs = rhs * m_left
                    elif kx == 2:
                        rhs = rhs * m_right
                    acc = acc + jnp.dot(w_ref[ky * 3 + kx], rhs,
                                        preferred_element_type=f32)
            return acc

        def bn_relu(convs, gamma, beta):
            # Training-mode BatchNorm over all N*H*W pixels per channel
            # (biased variance, centred two-pass form) + ReLU.
            inv_p = 1.0 / (len(convs) * HW)
            mean = sum(jnp.sum(c, axis=1, keepdims=True) for c in convs) * inv_p
            var = sum(jnp.sum((c - mean) * (c - mean), axis=1, keepdims=True)
                      for c in convs) * inv_p
            scale = gamma * lax.rsqrt(var + EPS)      # (C, 1)
            shift = beta - mean * scale               # (C, 1)
            return [jnp.maximum(c * scale + shift, 0.0) for c in convs]

        # ---------------- stage 1: conv3x3 -> BN -> ReLU ----------------
        conv1 = []
        for n in range(N):
            xp_ref[:Cin, PADW:PADW + HW] = x_ref[n * Cin:(n + 1) * Cin, :]
            conv1.append(conv3x3(w1_ref, Cmid))
        y1 = bn_relu(conv1, g1_ref[...], be1_ref[...])

        # ---------------- stage 2: conv3x3 -> BN -> ReLU ----------------
        # Intermediate activation stays in vregs / VMEM; never touches HBM.
        conv2 = []
        for n in range(N):
            xp_ref[:Cmid, PADW:PADW + HW] = y1[n]
            conv2.append(conv3x3(w2_ref, Cout))
        y2 = bn_relu(conv2, g2_ref[...], be2_ref[...])

        # Lane-dense, sublane-aligned output stores: (Cout, H*W) at row n*Cout.
        for n in range(N):
            o_ref[n * Cout:(n + 1) * Cout, :] = y2[n].astype(o_ref.dtype)

    return pl.pallas_call(
        kernel,
        out_shape=jax.ShapeDtypeStruct((N * Cout, HW), jnp.float32),
        grid=(1,),
        in_specs=[
            pl.BlockSpec((N * Cin, HW), lambda i: (0, 0)),
            pl.BlockSpec((9, Cmid, CK), lambda i: (0, 0, 0)),
            pl.BlockSpec((9, Cout, CK), lambda i: (0, 0, 0)),
            pl.BlockSpec((Cmid, 1), lambda i: (0, 0)),
            pl.BlockSpec((Cmid, 1), lambda i: (0, 0)),
            pl.BlockSpec((Cout, 1), lambda i: (0, 0)),
            pl.BlockSpec((Cout, 1), lambda i: (0, 0)),
            pl.BlockSpec((2, HW), lambda i: (0, 0)),
        ],
        out_specs=pl.BlockSpec((N * Cout, HW), lambda i: (0, 0)),
        scratch_shapes=[pltpu.VMEM((CK, HW + 2 * PADW), jnp.float32)],
        compiler_params=pltpu.CompilerParams(
            dimension_semantics=("arbitrary",),
            vmem_limit_bytes=32 * 1024 * 1024,
        ),
    )


@jax.jit
def double_conv_forward(x_nchw, params):
    """DoubleConv forward.  NCHW in / NCHW out, matching the PyTorch module."""
    N, Cin, H, W = x_nchw.shape
    w1, w2 = params["w1"], params["w2"]          # OIHW, like torch.nn.Conv2d
    Cmid, Cout = w1.shape[0], w2.shape[0]
    HW = H * W
    CK = _round_up(max(Cin, Cmid), 8)

    # Free reshapes only -- no NCHW<->NHWC transpose round trips.
    x2d = x_nchw.reshape(N * Cin, HW)

    # Per-tap weight matrices (9, Cout, Cin), K zero-padded to the aligned CK.
    # (Tiny trace-time tensors; fused / folded by XLA.)
    w1t = jnp.pad(jnp.transpose(w1, (2, 3, 0, 1)).reshape(9, Cmid, Cin),
                  ((0, 0), (0, 0), (0, CK - Cin)))
    w2t = jnp.pad(jnp.transpose(w2, (2, 3, 0, 1)).reshape(9, Cout, Cmid),
                  ((0, 0), (0, 0), (0, CK - Cmid)))

    # Column-edge masks for the dx = -1 / +1 taps (flat row-wrap positions).
    col = jnp.arange(HW, dtype=jnp.int32) % W
    masks = jnp.stack([(col != 0), (col != W - 1)]).astype(jnp.float32)

    # Conv biases params["b1"]/["b2"] are intentionally NOT passed: a
    # per-channel constant is exactly cancelled by training-mode BatchNorm's
    # mean subtraction.
    call = _build_double_conv_call(N, H, W, Cin, Cmid, Cout)
    out2d = call(
        x2d, w1t, w2t,
        params["g1"].reshape(Cmid, 1), params["be1"].reshape(Cmid, 1),
        params["g2"].reshape(Cout, 1), params["be2"].reshape(Cout, 1),
        masks,
    )
    return out2d.reshape(N, Cout, H, W)          # free reshape back to NCHW


# ---------------- pure-JAX reference (for correctness check) ----------------
def _ref_stage(x_nchw, w, b, gamma, beta):
    conv = lax.conv_general_dilated(
        x_nchw, w, window_strides=(1, 1), padding=((1, 1), (1, 1)),
        dimension_numbers=("NCHW", "OIHW", "NCHW"),
    ) + b.reshape(1, -1, 1, 1)
    mean = jnp.mean(conv, axis=(0, 2, 3), keepdims=True)
    var = jnp.mean((conv - mean) ** 2, axis=(0, 2, 3), keepdims=True)
    y = ((conv - mean) * lax.rsqrt(var + EPS) * gamma.reshape(1, -1, 1, 1)
         + beta.reshape(1, -1, 1, 1))
    return jnp.maximum(y, 0.0)


def _ref_forward(x_nchw, p):
    x = _ref_stage(x_nchw, p["w1"], p["b1"], p["g1"], p["be1"])
    return _ref_stage(x, p["w2"], p["b2"], p["g2"], p["be2"])


if __name__ == "__main__":
    # DoubleConv(in_channels=4, out_channels=8) -> mid_channels = 8.
    N, Cin, Cout, H, W = 2, 4, 8, 16, 16
    Cmid = Cout
    key = jax.random.PRNGKey(0)
    k = jax.random.split(key, 9)

    x = jax.random.normal(k[0], (N, Cin, H, W), jnp.float32)      # NCHW
    params = {
        # conv1: in -> mid, 3x3, OIHW (PyTorch layout)
        "w1": 0.1 * jax.random.normal(k[1], (Cmid, Cin, 3, 3), jnp.float32),
        "b1": 0.1 * jax.random.normal(k[2], (Cmid,), jnp.float32),
        "g1": 1.0 + 0.1 * jax.random.normal(k[3], (Cmid,), jnp.float32),
        "be1": 0.1 * jax.random.normal(k[4], (Cmid,), jnp.float32),
        # conv2: mid -> out, 3x3
        "w2": 0.1 * jax.random.normal(k[5], (Cout, Cmid, 3, 3), jnp.float32),
        "b2": 0.1 * jax.random.normal(k[6], (Cout,), jnp.float32),
        "g2": 1.0 + 0.1 * jax.random.normal(k[7], (Cout,), jnp.float32),
        "be2": 0.1 * jax.random.normal(k[8], (Cout,), jnp.float32),
    }

    out = jax.block_until_ready(double_conv_forward(x, params))
    ref = _ref_forward(x, params)

    assert out.shape == (N, Cout, H, W), out.shape
    max_err = float(jnp.max(jnp.abs(out - ref)))
    assert jnp.allclose(out, ref, atol=2e-4, rtol=2e-4), max_err
    print("KERNEL_OK")
</pallas_src>

<mosaic_0001>
module attributes {stable_mosaic.version = 11 : i64} {
  func.func @kernel(%arg0: i32, %arg1: memref<8x256xf32, #tpu.memory_space<vmem>>, %arg2: memref<9x8x8xf32, #tpu.memory_space<vmem>>, %arg3: memref<9x8x8xf32, #tpu.memory_space<vmem>>, %arg4: memref<8x1xf32, #tpu.memory_space<vmem>>, %arg5: memref<8x1xf32, #tpu.memory_space<vmem>>, %arg6: memref<8x1xf32, #tpu.memory_space<vmem>>, %arg7: memref<8x1xf32, #tpu.memory_space<vmem>>, %arg8: memref<2x256xf32, #tpu.memory_space<vmem>>, %arg9: memref<16x256xf32, #tpu.memory_space<vmem>>, %arg10: memref<8x290xf32, #tpu.memory_space<vmem>>) attributes {dimension_semantics = [#tpu.dimension_semantics<arbitrary>], iteration_bounds = array<i64: 1>, scalar_prefetch = 0 : i64, scratch_operands = 1 : i64, tpu.core_type = #tpu.core_type<tc>, window_params = [{pipeline_mode = #tpu.pipeline_mode<synchronous>, transform_indices = @transform_0, window_bounds = array<i64: 8, 256>}, {pipeline_mode = #tpu.pipeline_mode<synchronous>, transform_indices = @transform_1, window_bounds = array<i64: 9, 8, 8>}, {pipeline_mode = #tpu.pipeline_mode<synchronous>, transform_indices = @transform_2, window_bounds = array<i64: 9, 8, 8>}, {pipeline_mode = #tpu.pipeline_mode<synchronous>, transform_indices = @transform_3, window_bounds = array<i64: 8, 1>}, {pipeline_mode = #tpu.pipeline_mode<synchronous>, transform_indices = @transform_4, window_bounds = array<i64: 8, 1>}, {pipeline_mode = #tpu.pipeline_mode<synchronous>, transform_indices = @transform_5, window_bounds = array<i64: 8, 1>}, {pipeline_mode = #tpu.pipeline_mode<synchronous>, transform_indices = @transform_6, window_bounds = array<i64: 8, 1>}, {pipeline_mode = #tpu.pipeline_mode<synchronous>, transform_indices = @transform_7, window_bounds = array<i64: 2, 256>}, {pipeline_mode = #tpu.pipeline_mode<synchronous>, transform_indices = @transform_8, window_bounds = array<i64: 16, 256>}]} {
    %c0 = arith.constant 0 : index
    %c0_0 = arith.constant 0 : index
    %0 = vector.load %arg8[%c0, %c0_0] : memref<2x256xf32, #tpu.memory_space<vmem>>, vector<1x256xf32>
    %c1 = arith.constant 1 : index
    %c0_1 = arith.constant 0 : index
    %1 = vector.load %arg8[%c1, %c0_1] : memref<2x256xf32, #tpu.memory_space<vmem>>, vector<1x256xf32>
    %cst = arith.constant 0.000000e+00 : f32
    %2 = vector.broadcast %cst : f32 to vector<8x17xf32>
    %c0_2 = arith.constant 0 : index
    %c0_3 = arith.constant 0 : index
    %3 = vector.load %arg10[%c0_2, %c0_3] : memref<8x290xf32, #tpu.memory_space<vmem>>, vector<8x17xf32>
    tpu.vector_store %arg10[%c0_2, %c0_3], %2 {strides = array<i32>} : memref<8x290xf32, #tpu.memory_space<vmem>>, vector<8x17xf32>,
    %cst_4 = arith.constant 0.000000e+00 : f32
    %4 = vector.broadcast %cst_4 : f32 to vector<8x17xf32>
    %c0_5 = arith.constant 0 : index
    %c273 = arith.constant 273 : index
    %5 = vector.load %arg10[%c0_5, %c273] : memref<8x290xf32, #tpu.memory_space<vmem>>, vector<8x17xf32>
    tpu.vector_store %arg10[%c0_5, %c273], %4 {strides = array<i32>} : memref<8x290xf32, #tpu.memory_space<vmem>>, vector<8x17xf32>,
    %cst_6 = arith.constant 0.000000e+00 : f32
    %6 = vector.broadcast %cst_6 : f32 to vector<4x256xf32>
    %c4 = arith.constant 4 : index
    %c17 = arith.constant 17 : index
    %7 = vector.load %arg10[%c4, %c17] : memref<8x290xf32, #tpu.memory_space<vmem>>, vector<4x256xf32>
    tpu.vector_store %arg10[%c4, %c17], %6 {strides = array<i32>} : memref<8x290xf32, #tpu.memory_space<vmem>>, vector<4x256xf32>,
    %c0_7 = arith.constant 0 : index
    %c0_8 = arith.constant 0 : index
    %8 = vector.load %arg1[%c0_7, %c0_8] : memref<8x256xf32, #tpu.memory_space<vmem>>, vector<4x256xf32>
    %c0_9 = arith.constant 0 : index
    %c17_10 = arith.constant 17 : index
    %9 = vector.load %arg10[%c0_9, %c17_10] : memref<8x290xf32, #tpu.memory_space<vmem>>, vector<4x256xf32>
    tpu.vector_store %arg10[%c0_9, %c17_10], %8 {strides = array<i32>} : memref<8x290xf32, #tpu.memory_space<vmem>>, vector<4x256xf32>,
    %cst_11 = arith.constant 0.000000e+00 : f32
    %10 = vector.broadcast %cst_11 : f32 to vector<8x256xf32>
    %c0_12 = arith.constant 0 : index
    %c0_13 = arith.constant 0 : index
    %11 = vector.load %arg10[%c0_12, %c0_13] : memref<8x290xf32, #tpu.memory_space<vmem>>, vector<8x256xf32>
    %12 = vector.broadcast %0 : vector<1x256xf32> to vector<8x256xf32>
    %13 = arith.mulf %11, %12 : vector<8x256xf32>
    %c0_14 = arith.constant 0 : index
    %c0_15 = arith.constant 0 : index
    %c0_16 = arith.constant 0 : index
    %14 = vector.load %arg2[%c0_14, %c0_15, %c0_16] : memref<9x8x8xf32, #tpu.memory_space<vmem>>, vector<1x8x8xf32>
    %15 = vector.shape_cast %14 : vector<1x8x8xf32> to vector<8x8xf32>
    %cst_17 = arith.constant dense<0.000000e+00> : vector<8x256xf32>
    %16 = tpu.matmul %15, %13, %cst_17 {dimension_numbers = #tpu.dot_dimension_numbers<[1], [0], [0], [1], [0, 0, 1, 1], [], []>} : vector<8x8xf32>, vector<8x256xf32>, vector<8x256xf32> -> vector<8x256xf32>
    %17 = arith.addf %10, %16 : vector<8x256xf32>
    %c0_18 = arith.constant 0 : index
    %c1_19 = arith.constant 1 : index
    %18 = vector.load %arg10[%c0_18, %c1_19] : memref<8x290xf32, #tpu.memory_space<vmem>>, vector<8x256xf32>
    %c1_20 = arith.constant 1 : index
    %c0_21 = arith.constant 0 : index
    %c0_22 = arith.constant 0 : index
    %19 = vector.load %arg2[%c1_20, %c0_21, %c0_22] : memref<9x8x8xf32, #tpu.memory_space<vmem>>, vector<1x8x8xf32>
    %20 = vector.shape_cast %19 : vector<1x8x8xf32> to vector<8x8xf32>
    %cst_23 = arith.constant dense<0.000000e+00> : vector<8x256xf32>
    %21 = tpu.matmul %20, %18, %cst_23 {dimension_numbers = #tpu.dot_dimension_numbers<[1], [0], [0], [1], [0, 0, 1, 1], [], []>} : vector<8x8xf32>, vector<8x256xf32>, vector<8x256xf32> -> vector<8x256xf32>
    %22 = arith.addf %17, %21 : vector<8x256xf32>
    %c0_24 = arith.constant 0 : index
    %c2 = arith.constant 2 : index
    %23 = vector.load %arg10[%c0_24, %c2] : memref<8x290xf32, #tpu.memory_space<vmem>>, vector<8x256xf32>
    %24 = vector.broadcast %1 : vector<1x256xf32> to vector<8x256xf32>
    %25 = arith.mulf %23, %24 : vector<8x256xf32>
    %c2_25 = arith.constant 2 : index
    %c0_26 = arith.constant 0 : index
    %c0_27 = arith.constant 0 : index
    %26 = vector.load %arg2[%c2_25, %c0_26, %c0_27] : memref<9x8x8xf32, #tpu.memory_space<vmem>>, vector<1x8x8xf32>
    %27 = vector.shape_cast %26 : vector<1x8x8xf32> to vector<8x8xf32>
    %cst_28 = arith.constant dense<0.000000e+00> : vector<8x256xf32>
    %28 = tpu.matmul %27, %25, %cst_28 {dimension_numbers = #tpu.dot_dimension_numbers<[1], [0], [0], [1], [0, 0, 1, 1], [], []>} : vector<8x8xf32>, vector<8x256xf32>, vector<8x256xf32> -> vector<8x256xf32>
    %29 = arith.addf %22, %28 : vector<8x256xf32>
    %c0_29 = arith.constant 0 : index
    %c16 = arith.constant 16 : index
    %30 = vector.load %arg10[%c0_29, %c16] : memref<8x290xf32, #tpu.memory_space<vmem>>, vector<8x256xf32>
    %31 = vector.broadcast %0 : vector<1x256xf32> to vector<8x256xf32>
    %32 = arith.mulf %30, %31 : vector<8x256xf32>
    %c3 = arith.constant 3 : index
    %c0_30 = arith.constant 0 : index
    %c0_31 = arith.constant 0 : index
    %33 = vector.load %arg2[%c3, %c0_30, %c0_31] : memref<9x8x8xf32, #tpu.memory_space<vmem>>, vector<1x8x8xf32>
    %34 = vector.shape_cast %33 : vector<1x8x8xf32> to vector<8x8xf32>
    %cst_32 = arith.constant dense<0.000000e+00> : vector<8x256xf32>
    %35 = tpu.matmul %34, %32, %cst_32 {dimension_numbers = #tpu.dot_dimension_numbers<[1], [0], [0], [1], [0, 0, 1, 1], [], []>} : vector<8x8xf32>, vector<8x256xf32>, vector<8x256xf32> -> vector<8x256xf32>
    %36 = arith.addf %29, %35 : vector<8x256xf32>
    %c0_33 = arith.constant 0 : index
    %c17_34 = arith.constant 17 : index
    %37 = vector.load %arg10[%c0_33, %c17_34] : memref<8x290xf32, #tpu.memory_space<vmem>>, vector<8x256xf32>
    %c4_35 = arith.constant 4 : index
    %c0_36 = arith.constant 0 : index
    %c0_37 = arith.constant 0 : index
    %38 = vector.load %arg2[%c4_35, %c0_36, %c0_37] : memref<9x8x8xf32, #tpu.memory_space<vmem>>, vector<1x8x8xf32>
    %39 = vector.shape_cast %38 : vector<1x8x8xf32> to vector<8x8xf32>
    %cst_38 = arith.constant dense<0.000000e+00> : vector<8x256xf32>
    %40 = tpu.matmul %39, %37, %cst_38 {dimension_numbers = #tpu.dot_dimension_numbers<[1], [0], [0], [1], [0, 0, 1, 1], [], []>} : vector<8x8xf32>, vector<8x256xf32>, vector<8x256xf32> -> vector<8x256xf32>
    %41 = arith.addf %36, %40 : vector<8x256xf32>
    %c0_39 = arith.constant 0 : index
    %c18 = arith.constant 18 : index
    %42 = vector.load %arg10[%c0_39, %c18] : memref<8x290xf32, #tpu.memory_space<vmem>>, vector<8x256xf32>
    %43 = vector.broadcast %1 : vector<1x256xf32> to vector<8x256xf32>
    %44 = arith.mulf %42, %43 : vector<8x256xf32>
    %c5 = arith.constant 5 : index
    %c0_40 = arith.constant 0 : index
    %c0_41 = arith.constant 0 : index
    %45 = vector.load %arg2[%c5, %c0_40, %c0_41] : memref<9x8x8xf32, #tpu.memory_space<vmem>>, vector<1x8x8xf32>
    %46 = vector.shape_cast %45 : vector<1x8x8xf32> to vector<8x8xf32>
    %cst_42 = arith.constant dense<0.000000e+00> : vector<8x256xf32>
    %47 = tpu.matmul %46, %44, %cst_42 {dimension_numbers = #tpu.dot_dimension_numbers<[1], [0], [0], [1], [0, 0, 1, 1], [], []>} : vector<8x8xf32>, vector<8x256xf32>, vector<8x256xf32> -> vector<8x256xf32>
    %48 = arith.addf %41, %47 : vector<8x256xf32>
    %c0_43 = arith.constant 0 : index
    %c32 = arith.constant 32 : index
    %49 = vector.load %arg10[%c0_43, %c32] : memref<8x290xf32, #tpu.memory_space<vmem>>, vector<8x256xf32>
    %50 = vector.broadcast %0 : vector<1x256xf32> to vector<8x256xf32>
    %51 = arith.mulf %49, %50 : vector<8x256xf32>
    %c6 = arith.constant 6 : index
    %c0_44 = arith.constant 0 : index
    %c0_45 = arith.constant 0 : index
    %52 = vector.load %arg2[%c6, %c0_44, %c0_45] : memref<9x8x8xf32, #tpu.memory_space<vmem>>, vector<1x8x8xf32>
    %53 = vector.shape_cast %52 : vector<1x8x8xf32> to vector<8x8xf32>
    %cst_46 = arith.constant dense<0.000000e+00> : vector<8x256xf32>
    %54 = tpu.matmul %53, %51, %cst_46 {dimension_numbers = #tpu.dot_dimension_numbers<[1], [0], [0], [1], [0, 0, 1, 1], [], []>} : vector<8x8xf32>, vector<8x256xf32>, vector<8x256xf32> -> vector<8x256xf32>
    %55 = arith.addf %48, %54 : vector<8x256xf32>
    %c0_47 = arith.constant 0 : index
    %c33 = arith.constant 33 : index
    %56 = vector.load %arg10[%c0_47, %c33] : memref<8x290xf32, #tpu.memory_space<vmem>>, vector<8x256xf32>
    %c7 = arith.constant 7 : index
    %c0_48 = arith.constant 0 : index
    %c0_49 = arith.constant 0 : index
    %57 = vector.load %arg2[%c7, %c0_48, %c0_49] : memref<9x8x8xf32, #tpu.memory_space<vmem>>, vector<1x8x8xf32>
    %58 = vector.shape_cast %57 : vector<1x8x8xf32> to vector<8x8xf32>
    %cst_50 = arith.constant dense<0.000000e+00> : vector<8x256xf32>
    %59 = tpu.matmul %58, %56, %cst_50 {dimension_numbers = #tpu.dot_dimension_numbers<[1], [0], [0], [1], [0, 0, 1, 1], [], []>} : vector<8x8xf32>, vector<8x256xf32>, vector<8x256xf32> -> vector<8x256xf32>
    %60 = arith.addf %55, %59 : vector<8x256xf32>
    %c0_51 = arith.constant 0 : index
    %c34 = arith.constant 34 : index
    %61 = vector.load %arg10[%c0_51, %c34] : memref<8x290xf32, #tpu.memory_space<vmem>>, vector<8x256xf32>
    %62 = vector.broadcast %1 : vector<1x256xf32> to vector<8x256xf32>
    %63 = arith.mulf %61, %62 : vector<8x256xf32>
    %c8 = arith.constant 8 : index
    %c0_52 = arith.constant 0 : index
    %c0_53 = arith.constant 0 : index
    %64 = vector.load %arg2[%c8, %c0_52, %c0_53] : memref<9x8x8xf32, #tpu.memory_space<vmem>>, vector<1x8x8xf32>
    %65 = vector.shape_cast %64 : vector<1x8x8xf32> to vector<8x8xf32>
    %cst_54 = arith.constant dense<0.000000e+00> : vector<8x256xf32>
    %66 = tpu.matmul %65, %63, %cst_54 {dimension_numbers = #tpu.dot_dimension_numbers<[1], [0], [0], [1], [0, 0, 1, 1], [], []>} : vector<8x8xf32>, vector<8x256xf32>, vector<8x256xf32> -> vector<8x256xf32>
    %67 = arith.addf %60, %66 : vector<8x256xf32>
    %c4_55 = arith.constant 4 : index
    %c0_56 = arith.constant 0 : index
    %68 = vector.load %arg1[%c4_55, %c0_56] : memref<8x256xf32, #tpu.memory_space<vmem>>, vector<4x256xf32>
    %c0_57 = arith.constant 0 : index
    %c17_58 = arith.constant 17 : index
    %69 = vector.load %arg10[%c0_57, %c17_58] : memref<8x290xf32, #tpu.memory_space<vmem>>, vector<4x256xf32>
    tpu.vector_store %arg10[%c0_57, %c17_58], %68 {strides = array<i32>} : memref<8x290xf32, #tpu.memory_space<vmem>>, vector<4x256xf32>,
    %cst_59 = arith.constant 0.000000e+00 : f32
    %70 = vector.broadcast %cst_59 : f32 to vector<8x256xf32>
    %c0_60 = arith.constant 0 : index
    %c0_61 = arith.constant 0 : index
    %71 = vector.load %arg10[%c0_60, %c0_61] : memref<8x290xf32, #tpu.memory_space<vmem>>, vector<8x256xf32>
    %72 = vector.broadcast %0 : vector<1x256xf32> to vector<8x256xf32>
    %73 = arith.mulf %71, %72 : vector<8x256xf32>
    %c0_62 = arith.constant 0 : index
    %c0_63 = arith.constant 0 : index
    %c0_64 = arith.constant 0 : index
    %74 = vector.load %arg2[%c0_62, %c0_63, %c0_64] : memref<9x8x8xf32, #tpu.memory_space<vmem>>, vector<1x8x8xf32>
    %75 = vector.shape_cast %74 : vector<1x8x8xf32> to vector<8x8xf32>
    %cst_65 = arith.constant dense<0.000000e+00> : vector<8x256xf32>
    %76 = tpu.matmul %75, %73, %cst_65 {dimension_numbers = #tpu.dot_dimension_numbers<[1], [0], [0], [1], [0, 0, 1, 1], [], []>} : vector<8x8xf32>, vector<8x256xf32>, vector<8x256xf32> -> vector<8x256xf32>
    %77 = arith.addf %70, %76 : vector<8x256xf32>
    %c0_66 = arith.constant 0 : index
    %c1_67 = arith.constant 1 : index
    %78 = vector.load %arg10[%c0_66, %c1_67] : memref<8x290xf32, #tpu.memory_space<vmem>>, vector<8x256xf32>
    %c1_68 = arith.constant 1 : index
    %c0_69 = arith.constant 0 : index
    %c0_70 = arith.constant 0 : index
    %79 = vector.load %arg2[%c1_68, %c0_69, %c0_70] : memref<9x8x8xf32, #tpu.memory_space<vmem>>, vector<1x8x8xf32>
    %80 = vector.shape_cast %79 : vector<1x8x8xf32> to vector<8x8xf32>
    %cst_71 = arith.constant dense<0.000000e+00> : vector<8x256xf32>
    %81 = tpu.matmul %80, %78, %cst_71 {dimension_numbers = #tpu.dot_dimension_numbers<[1], [0], [0], [1], [0, 0, 1, 1], [], []>} : vector<8x8xf32>, vector<8x256xf32>, vector<8x256xf32> -> vector<8x256xf32>
    %82 = arith.addf %77, %81 : vector<8x256xf32>
    %c0_72 = arith.constant 0 : index
    %c2_73 = arith.constant 2 : index
    %83 = vector.load %arg10[%c0_72, %c2_73] : memref<8x290xf32, #tpu.memory_space<vmem>>, vector<8x256xf32>
    %84 = vector.broadcast %1 : vector<1x256xf32> to vector<8x256xf32>
    %85 = arith.mulf %83, %84 : vector<8x256xf32>
    %c2_74 = arith.constant 2 : index
    %c0_75 = arith.constant 0 : index
    %c0_76 = arith.constant 0 : index
    %86 = vector.load %arg2[%c2_74, %c0_75, %c0_76] : memref<9x8x8xf32, #tpu.memory_space<vmem>>, vector<1x8x8xf32>
    %87 = vector.shape_cast %86 : vector<1x8x8xf32> to vector<8x8xf32>
    %cst_77 = arith.constant dense<0.000000e+00> : vector<8x256xf32>
    %88 = tpu.matmul %87, %85, %cst_77 {dimension_numbers = #tpu.dot_dimension_numbers<[1], [0], [0], [1], [0, 0, 1, 1], [], []>} : vector<8x8xf32>, vector<8x256xf32>, vector<8x256xf32> -> vector<8x256xf32>
    %89 = arith.addf %82, %88 : vector<8x256xf32>
    %c0_78 = arith.constant 0 : index
    %c16_79 = arith.constant 16 : index
    %90 = vector.load %arg10[%c0_78, %c16_79] : memref<8x290xf32, #tpu.memory_space<vmem>>, vector<8x256xf32>
    %91 = vector.broadcast %0 : vector<1x256xf32> to vector<8x256xf32>
    %92 = arith.mulf %90, %91 : vector<8x256xf32>
    %c3_80 = arith.constant 3 : index
    %c0_81 = arith.constant 0 : index
    %c0_82 = arith.constant 0 : index
    %93 = vector.load %arg2[%c3_80, %c0_81, %c0_82] : memref<9x8x8xf32, #tpu.memory_space<vmem>>, vector<1x8x8xf32>
    %94 = vector.shape_cast %93 : vector<1x8x8xf32> to vector<8x8xf32>
    %cst_83 = arith.constant dense<0.000000e+00> : vector<8x256xf32>
    %95 = tpu.matmul %94, %92, %cst_83 {dimension_numbers = #tpu.dot_dimension_numbers<[1], [0], [0], [1], [0, 0, 1, 1], [], []>} : vector<8x8xf32>, vector<8x256xf32>, vector<8x256xf32> -> vector<8x256xf32>
    %96 = arith.addf %89, %95 : vector<8x256xf32>
    %c0_84 = arith.constant 0 : index
    %c17_85 = arith.constant 17 : index
    %97 = vector.load %arg10[%c0_84, %c17_85] : memref<8x290xf32, #tpu.memory_space<vmem>>, vector<8x256xf32>
    %c4_86 = arith.constant 4 : index
    %c0_87 = arith.constant 0 : index
    %c0_88 = arith.constant 0 : index
    %98 = vector.load %arg2[%c4_86, %c0_87, %c0_88] : memref<9x8x8xf32, #tpu.memory_space<vmem>>, vector<1x8x8xf32>
    %99 = vector.shape_cast %98 : vector<1x8x8xf32> to vector<8x8xf32>
    %cst_89 = arith.constant dense<0.000000e+00> : vector<8x256xf32>
    %100 = tpu.matmul %99, %97, %cst_89 {dimension_numbers = #tpu.dot_dimension_numbers<[1], [0], [0], [1], [0, 0, 1, 1], [], []>} : vector<8x8xf32>, vector<8x256xf32>, vector<8x256xf32> -> vector<8x256xf32>
    %101 = arith.addf %96, %100 : vector<8x256xf32>
    %c0_90 = arith.constant 0 : index
    %c18_91 = arith.constant 18 : index
    %102 = vector.load %arg10[%c0_90, %c18_91] : memref<8x290xf32, #tpu.memory_space<vmem>>, vector<8x256xf32>
    %103 = vector.broadcast %1 : vector<1x256xf32> to vector<8x256xf32>
    %104 = arith.mulf %102, %103 : vector<8x256xf32>
    %c5_92 = arith.constant 5 : index
    %c0_93 = arith.constant 0 : index
    %c0_94 = arith.constant 0 : index
    %105 = vector.load %arg2[%c5_92, %c0_93, %c0_94] : memref<9x8x8xf32, #tpu.memory_space<vmem>>, vector<1x8x8xf32>
    %106 = vector.shape_cast %105 : vector<1x8x8xf32> to vector<8x8xf32>
    %cst_95 = arith.constant dense<0.000000e+00> : vector<8x256xf32>
    %107 = tpu.matmul %106, %104, %cst_95 {dimension_numbers = #tpu.dot_dimension_numbers<[1], [0], [0], [1], [0, 0, 1, 1], [], []>} : vector<8x8xf32>, vector<8x256xf32>, vector<8x256xf32> -> vector<8x256xf32>
    %108 = arith.addf %101, %107 : vector<8x256xf32>
    %c0_96 = arith.constant 0 : index
    %c32_97 = arith.constant 32 : index
    %109 = vector.load %arg10[%c0_96, %c32_97] : memref<8x290xf32, #tpu.memory_space<vmem>>, vector<8x256xf32>
    %110 = vector.broadcast %0 : vector<1x256xf32> to vector<8x256xf32>
    %111 = arith.mulf %109, %110 : vector<8x256xf32>
    %c6_98 = arith.constant 6 : index
    %c0_99 = arith.constant 0 : index
    %c0_100 = arith.constant 0 : index
    %112 = vector.load %arg2[%c6_98, %c0_99, %c0_100] : memref<9x8x8xf32, #tpu.memory_space<vmem>>, vector<1x8x8xf32>
    %113 = vector.shape_cast %112 : vector<1x8x8xf32> to vector<8x8xf32>
    %cst_101 = arith.constant dense<0.000000e+00> : vector<8x256xf32>
    %114 = tpu.matmul %113, %111, %cst_101 {dimension_numbers = #tpu.dot_dimension_numbers<[1], [0], [0], [1], [0, 0, 1, 1], [], []>} : vector<8x8xf32>, vector<8x256xf32>, vector<8x256xf32> -> vector<8x256xf32>
    %115 = arith.addf %108, %114 : vector<8x256xf32>
    %c0_102 = arith.constant 0 : index
    %c33_103 = arith.constant 33 : index
    %116 = vector.load %arg10[%c0_102, %c33_103] : memref<8x290xf32, #tpu.memory_space<vmem>>, vector<8x256xf32>
    %c7_104 = arith.constant 7 : index
    %c0_105 = arith.constant 0 : index
    %c0_106 = arith.constant 0 : index
    %117 = vector.load %arg2[%c7_104, %c0_105, %c0_106] : memref<9x8x8xf32, #tpu.memory_space<vmem>>, vector<1x8x8xf32>
    %118 = vector.shape_cast %117 : vector<1x8x8xf32> to vector<8x8xf32>
    %cst_107 = arith.constant dense<0.000000e+00> : vector<8x256xf32>
    %119 = tpu.matmul %118, %116, %cst_107 {dimension_numbers = #tpu.dot_dimension_numbers<[1], [0], [0], [1], [0, 0, 1, 1], [], []>} : vector<8x8xf32>, vector<8x256xf32>, vector<8x256xf32> -> vector<8x256xf32>
    %120 = arith.addf %115, %119 : vector<8x256xf32>
    %c0_108 = arith.constant 0 : index
    %c34_109 = arith.constant 34 : index
    %121 = vector.load %arg10[%c0_108, %c34_109] : memref<8x290xf32, #tpu.memory_space<vmem>>, vector<8x256xf32>
    %122 = vector.broadcast %1 : vector<1x256xf32> to vector<8x256xf32>
    %123 = arith.mulf %121, %122 : vector<8x256xf32>
    %c8_110 = arith.constant 8 : index
    %c0_111 = arith.constant 0 : index
    %c0_112 = arith.constant 0 : index
    %124 = vector.load %arg2[%c8_110, %c0_111, %c0_112] : memref<9x8x8xf32, #tpu.memory_space<vmem>>, vector<1x8x8xf32>
    %125 = vector.shape_cast %124 : vector<1x8x8xf32> to vector<8x8xf32>
    %cst_113 = arith.constant dense<0.000000e+00> : vector<8x256xf32>
    %126 = tpu.matmul %125, %123, %cst_113 {dimension_numbers = #tpu.dot_dimension_numbers<[1], [0], [0], [1], [0, 0, 1, 1], [], []>} : vector<8x8xf32>, vector<8x256xf32>, vector<8x256xf32> -> vector<8x256xf32>
    %127 = arith.addf %120, %126 : vector<8x256xf32>
    %c0_114 = arith.constant 0 : index
    %c0_115 = arith.constant 0 : index
    %128 = vector.load %arg4[%c0_114, %c0_115] : memref<8x1xf32, #tpu.memory_space<vmem>>, vector<8x1xf32>
    %c0_116 = arith.constant 0 : index
    %c0_117 = arith.constant 0 : index
    %129 = vector.load %arg5[%c0_116, %c0_117] : memref<8x1xf32, #tpu.memory_space<vmem>>, vector<8x1xf32>
    %cst_118 = arith.constant dense<0.000000e+00> : vector<8xf32>
    %130 = vector.multi_reduction <add>, %67, %cst_118 [1] : vector<8x256xf32> to vector<8xf32>
    %131 = vector.shape_cast %130 : vector<8xf32> to vector<8x1xf32>
    %cst_119 = arith.constant 0.000000e+00 : f32
    %132 = vector.broadcast %cst_119 : f32 to vector<8x1xf32>
    %133 = arith.addf %132, %131 : vector<8x1xf32>
    %cst_120 = arith.constant dense<0.000000e+00> : vector<8xf32>
    %134 = vector.multi_reduction <add>, %127, %cst_120 [1] : vector<8x256xf32> to vector<8xf32>
    %135 = vector.shape_cast %134 : vector<8xf32> to vector<8x1xf32>
    %136 = arith.addf %133, %135 : vector<8x1xf32>
    %cst_121 = arith.constant 0.001953125 : f32
    %137 = vector.broadcast %cst_121 : f32 to vector<8x1xf32>
    %138 = arith.mulf %136, %137 : vector<8x1xf32>
    %139 = vector.broadcast %138 : vector<8x1xf32> to vector<8x256xf32>
    %140 = arith.subf %67, %139 : vector<8x256xf32>
    %141 = vector.broadcast %138 : vector<8x1xf32> to vector<8x256xf32>
    %142 = arith.subf %67, %141 : vector<8x256xf32>
    %143 = arith.mulf %140, %142 : vector<8x256xf32>
    %cst_122 = arith.constant dense<0.000000e+00> : vector<8xf32>
    %144 = vector.multi_reduction <add>, %143, %cst_122 [1] : vector<8x256xf32> to vector<8xf32>
    %145 = vector.shape_cast %144 : vector<8xf32> to vector<8x1xf32>
    %cst_123 = arith.constant 0.000000e+00 : f32
    %146 = vector.broadcast %cst_123 : f32 to vector<8x1xf32>
    %147 = arith.addf %146, %145 : vector<8x1xf32>
    %148 = vector.broadcast %138 : vector<8x1xf32> to vector<8x256xf32>
    %149 = arith.subf %127, %148 : vector<8x256xf32>
    %150 = vector.broadcast %138 : vector<8x1xf32> to vector<8x256xf32>
    %151 = arith.subf %127, %150 : vector<8x256xf32>
    %152 = arith.mulf %149, %151 : vector<8x256xf32>
    %cst_124 = arith.constant dense<0.000000e+00> : vector<8xf32>
    %153 = vector.multi_reduction <add>, %152, %cst_124 [1] : vector<8x256xf32> to vector<8xf32>
    %154 = vector.shape_cast %153 : vector<8xf32> to vector<8x1xf32>
    %155 = arith.addf %147, %154 : vector<8x1xf32>
    %cst_125 = arith.constant 0.001953125 : f32
    %156 = vector.broadcast %cst_125 : f32 to vector<8x1xf32>
    %157 = arith.mulf %155, %156 : vector<8x1xf32>
    %cst_126 = arith.constant 9.99999974E-6 : f32
    %158 = vector.broadcast %cst_126 : f32 to vector<8x1xf32>
    %159 = arith.addf %157, %158 : vector<8x1xf32>
    %160 = math.rsqrt %159 : vector<8x1xf32>
    %161 = arith.mulf %128, %160 : vector<8x1xf32>
    %162 = arith.mulf %138, %161 : vector<8x1xf32>
    %163 = arith.subf %129, %162 : vector<8x1xf32>
    %164 = vector.broadcast %161 : vector<8x1xf32> to vector<8x256xf32>
    %165 = arith.mulf %67, %164 : vector<8x256xf32>
    %166 = vector.broadcast %163 : vector<8x1xf32> to vector<8x256xf32>
    %167 = arith.addf %165, %166 : vector<8x256xf32>
    %cst_127 = arith.constant 0.000000e+00 : f32
    %168 = vector.broadcast %cst_127 : f32 to vector<8x256xf32>
    %169 = arith.maximumf %167, %168 : vector<8x256xf32>
    %170 = vector.broadcast %161 : vector<8x1xf32> to vector<8x256xf32>
    %171 = arith.mulf %127, %170 : vector<8x256xf32>
    %172 = vector.broadcast %163 : vector<8x1xf32> to vector<8x256xf32>
    %173 = arith.addf %171, %172 : vector<8x256xf32>
    %cst_128 = arith.constant 0.000000e+00 : f32
    %174 = vector.broadcast %cst_128 : f32 to vector<8x256xf32>
    %175 = arith.maximumf %173, %174 : vector<8x256xf32>
    %c0_129 = arith.constant 0 : index
    %c17_130 = arith.constant 17 : index
    %176 = vector.load %arg10[%c0_129, %c17_130] : memref<8x290xf32, #tpu.memory_space<vmem>>, vector<8x256xf32>
    tpu.vector_store %arg10[%c0_129, %c17_130], %169 {strides = array<i32>} : memref<8x290xf32, #tpu.memory_space<vmem>>, vector<8x256xf32>,
    %cst_131 = arith.constant 0.000000e+00 : f32
    %177 = vector.broadcast %cst_131 : f32 to vector<8x256xf32>
    %c0_132 = arith.constant 0 : index
    %c0_133 = arith.constant 0 : index
    %178 = vector.load %arg10[%c0_132, %c0_133] : memref<8x290xf32, #tpu.memory_space<vmem>>, vector<8x256xf32>
    %179 = vector.broadcast %0 : vector<1x256xf32> to vector<8x256xf32>
    %180 = arith.mulf %178, %179 : vector<8x256xf32>
    %c0_134 = arith.constant 0 : index
    %c0_135 = arith.constant 0 : index
    %c0_136 = arith.constant 0 : index
    %181 = vector.load %arg3[%c0_134, %c0_135, %c0_136] : memref<9x8x8xf32, #tpu.memory_space<vmem>>, vector<1x8x8xf32>
    %182 = vector.shape_cast %181 : vector<1x8x8xf32> to vector<8x8xf32>
    %cst_137 = arith.constant dense<0.000000e+00> : vector<8x256xf32>
    %183 = tpu.matmul %182, %180, %cst_137 {dimension_numbers = #tpu.dot_dimension_numbers<[1], [0], [0], [1], [0, 0, 1, 1], [], []>} : vector<8x8xf32>, vector<8x256xf32>, vector<8x256xf32> -> vector<8x256xf32>
    %184 = arith.addf %177, %183 : vector<8x256xf32>
    %c0_138 = arith.constant 0 : index
    %c1_139 = arith.constant 1 : index
    %185 = vector.load %arg10[%c0_138, %c1_139] : memref<8x290xf32, #tpu.memory_space<vmem>>, vector<8x256xf32>
    %c1_140 = arith.constant 1 : index
    %c0_141 = arith.constant 0 : index
    %c0_142 = arith.constant 0 : index
    %186 = vector.load %arg3[%c1_140, %c0_141, %c0_142] : memref<9x8x8xf32, #tpu.memory_space<vmem>>, vector<1x8x8xf32>
    %187 = vector.shape_cast %186 : vector<1x8x8xf32> to vector<8x8xf32>
    %cst_143 = arith.constant dense<0.000000e+00> : vector<8x256xf32>
    %188 = tpu.matmul %187, %185, %cst_143 {dimension_numbers = #tpu.dot_dimension_numbers<[1], [0], [0], [1], [0, 0, 1, 1], [], []>} : vector<8x8xf32>, vector<8x256xf32>, vector<8x256xf32> -> vector<8x256xf32>
    %189 = arith.addf %184, %188 : vector<8x256xf32>
    %c0_144 = arith.constant 0 : index
    %c2_145 = arith.constant 2 : index
    %190 = vector.load %arg10[%c0_144, %c2_145] : memref<8x290xf32, #tpu.memory_space<vmem>>, vector<8x256xf32>
    %191 = vector.broadcast %1 : vector<1x256xf32> to vector<8x256xf32>
    %192 = arith.mulf %190, %191 : vector<8x256xf32>
    %c2_146 = arith.constant 2 : index
    %c0_147 = arith.constant 0 : index
    %c0_148 = arith.constant 0 : index
    %193 = vector.load %arg3[%c2_146, %c0_147, %c0_148] : memref<9x8x8xf32, #tpu.memory_space<vmem>>, vector<1x8x8xf32>
    %194 = vector.shape_cast %193 : vector<1x8x8xf32> to vector<8x8xf32>
    %cst_149 = arith.constant dense<0.000000e+00> : vector<8x256xf32>
    %195 = tpu.matmul %194, %192, %cst_149 {dimension_numbers = #tpu.dot_dimension_numbers<[1], [0], [0], [1], [0, 0, 1, 1], [], []>} : vector<8x8xf32>, vector<8x256xf32>, vector<8x256xf32> -> vector<8x256xf32>
    %196 = arith.addf %189, %195 : vector<8x256xf32>
    %c0_150 = arith.constant 0 : index
    %c16_151 = arith.constant 16 : index
    %197 = vector.load %arg10[%c0_150, %c16_151] : memref<8x290xf32, #tpu.memory_space<vmem>>, vector<8x256xf32>
    %198 = vector.broadcast %0 : vector<1x256xf32> to vector<8x256xf32>
    %199 = arith.mulf %197, %198 : vector<8x256xf32>
    %c3_152 = arith.constant 3 : index
    %c0_153 = arith.constant 0 : index
    %c0_154 = arith.constant 0 : index
    %200 = vector.load %arg3[%c3_152, %c0_153, %c0_154] : memref<9x8x8xf32, #tpu.memory_space<vmem>>, vector<1x8x8xf32>
    %201 = vector.shape_cast %200 : vector<1x8x8xf32> to vector<8x8xf32>
    %cst_155 = arith.constant dense<0.000000e+00> : vector<8x256xf32>
    %202 = tpu.matmul %201, %199, %cst_155 {dimension_numbers = #tpu.dot_dimension_numbers<[1], [0], [0], [1], [0, 0, 1, 1], [], []>} : vector<8x8xf32>, vector<8x256xf32>, vector<8x256xf32> -> vector<8x256xf32>
    %203 = arith.addf %196, %202 : vector<8x256xf32>
    %c0_156 = arith.constant 0 : index
    %c17_157 = arith.constant 17 : index
    %204 = vector.load %arg10[%c0_156, %c17_157] : memref<8x290xf32, #tpu.memory_space<vmem>>, vector<8x256xf32>
    %c4_158 = arith.constant 4 : index
    %c0_159 = arith.constant 0 : index
    %c0_160 = arith.constant 0 : index
    %205 = vector.load %arg3[%c4_158, %c0_159, %c0_160] : memref<9x8x8xf32, #tpu.memory_space<vmem>>, vector<1x8x8xf32>
    %206 = vector.shape_cast %205 : vector<1x8x8xf32> to vector<8x8xf32>
    %cst_161 = arith.constant dense<0.000000e+00> : vector<8x256xf32>
    %207 = tpu.matmul %206, %204, %cst_161 {dimension_numbers = #tpu.dot_dimension_numbers<[1], [0], [0], [1], [0, 0, 1, 1], [], []>} : vector<8x8xf32>, vector<8x256xf32>, vector<8x256xf32> -> vector<8x256xf32>
    %208 = arith.addf %203, %207 : vector<8x256xf32>
    %c0_162 = arith.constant 0 : index
    %c18_163 = arith.constant 18 : index
    %209 = vector.load %arg10[%c0_162, %c18_163] : memref<8x290xf32, #tpu.memory_space<vmem>>, vector<8x256xf32>
    %210 = vector.broadcast %1 : vector<1x256xf32> to vector<8x256xf32>
    %211 = arith.mulf %209, %210 : vector<8x256xf32>
    %c5_164 = arith.constant 5 : index
    %c0_165 = arith.constant 0 : index
    %c0_166 = arith.constant 0 : index
    %212 = vector.load %arg3[%c5_164, %c0_165, %c0_166] : memref<9x8x8xf32, #tpu.memory_space<vmem>>, vector<1x8x8xf32>
    %213 = vector.shape_cast %212 : vector<1x8x8xf32> to vector<8x8xf32>
    %cst_167 = arith.constant dense<0.000000e+00> : vector<8x256xf32>
    %214 = tpu.matmul %213, %211, %cst_167 {dimension_numbers = #tpu.dot_dimension_numbers<[1], [0], [0], [1], [0, 0, 1, 1], [], []>} : vector<8x8xf32>, vector<8x256xf32>, vector<8x256xf32> -> vector<8x256xf32>
    %215 = arith.addf %208, %214 : vector<8x256xf32>
    %c0_168 = arith.constant 0 : index
    %c32_169 = arith.constant 32 : index
    %216 = vector.load %arg10[%c0_168, %c32_169] : memref<8x290xf32, #tpu.memory_space<vmem>>, vector<8x256xf32>
    %217 = vector.broadcast %0 : vector<1x256xf32> to vector<8x256xf32>
    %218 = arith.mulf %216, %217 : vector<8x256xf32>
    %c6_170 = arith.constant 6 : index
    %c0_171 = arith.constant 0 : index
    %c0_172 = arith.constant 0 : index
    %219 = vector.load %arg3[%c6_170, %c0_171, %c0_172] : memref<9x8x8xf32, #tpu.memory_space<vmem>>, vector<1x8x8xf32>
    %220 = vector.shape_cast %219 : vector<1x8x8xf32> to vector<8x8xf32>
    %cst_173 = arith.constant dense<0.000000e+00> : vector<8x256xf32>
    %221 = tpu.matmul %220, %218, %cst_173 {dimension_numbers = #tpu.dot_dimension_numbers<[1], [0], [0], [1], [0, 0, 1, 1], [], []>} : vector<8x8xf32>, vector<8x256xf32>, vector<8x256xf32> -> vector<8x256xf32>
    %222 = arith.addf %215, %221 : vector<8x256xf32>
    %c0_174 = arith.constant 0 : index
    %c33_175 = arith.constant 33 : index
    %223 = vector.load %arg10[%c0_174, %c33_175] : memref<8x290xf32, #tpu.memory_space<vmem>>, vector<8x256xf32>
    %c7_176 = arith.constant 7 : index
    %c0_177 = arith.constant 0 : index
    %c0_178 = arith.constant 0 : index
    %224 = vector.load %arg3[%c7_176, %c0_177, %c0_178] : memref<9x8x8xf32, #tpu.memory_space<vmem>>, vector<1x8x8xf32>
    %225 = vector.shape_cast %224 : vector<1x8x8xf32> to vector<8x8xf32>
    %cst_179 = arith.constant dense<0.000000e+00> : vector<8x256xf32>
    %226 = tpu.matmul %225, %223, %cst_179 {dimension_numbers = #tpu.dot_dimension_numbers<[1], [0], [0], [1], [0, 0, 1, 1], [], []>} : vector<8x8xf32>, vector<8x256xf32>, vector<8x256xf32> -> vector<8x256xf32>
    %227 = arith.addf %222, %226 : vector<8x256xf32>
    %c0_180 = arith.constant 0 : index
    %c34_181 = arith.constant 34 : index
    %228 = vector.load %arg10[%c0_180, %c34_181] : memref<8x290xf32, #tpu.memory_space<vmem>>, vector<8x256xf32>
    %229 = vector.broadcast %1 : vector<1x256xf32> to vector<8x256xf32>
    %230 = arith.mulf %228, %229 : vector<8x256xf32>
    %c8_182 = arith.constant 8 : index
    %c0_183 = arith.constant 0 : index
    %c0_184 = arith.constant 0 : index
    %231 = vector.load %arg3[%c8_182, %c0_183, %c0_184] : memref<9x8x8xf32, #tpu.memory_space<vmem>>, vector<1x8x8xf32>
    %232 = vector.shape_cast %231 : vector<1x8x8xf32> to vector<8x8xf32>
    %cst_185 = arith.constant dense<0.000000e+00> : vector<8x256xf32>
    %233 = tpu.matmul %232, %230, %cst_185 {dimension_numbers = #tpu.dot_dimension_numbers<[1], [0], [0], [1], [0, 0, 1, 1], [], []>} : vector<8x8xf32>, vector<8x256xf32>, vector<8x256xf32> -> vector<8x256xf32>
    %234 = arith.addf %227, %233 : vector<8x256xf32>
    %c0_186 = arith.constant 0 : index
    %c17_187 = arith.constant 17 : index
    %235 = vector.load %arg10[%c0_186, %c17_187] : memref<8x290xf32, #tpu.memory_space<vmem>>, vector<8x256xf32>
    tpu.vector_store %arg10[%c0_186, %c17_187], %175 {strides = array<i32>} : memref<8x290xf32, #tpu.memory_space<vmem>>, vector<8x256xf32>,
    %cst_188 = arith.constant 0.000000e+00 : f32
    %236 = vector.broadcast %cst_188 : f32 to vector<8x256xf32>
    %c0_189 = arith.constant 0 : index
    %c0_190 = arith.constant 0 : index
    %237 = vector.load %arg10[%c0_189, %c0_190] : memref<8x290xf32, #tpu.memory_space<vmem>>, vector<8x256xf32>
    %238 = vector.broadcast %0 : vector<1x256xf32> to vector<8x256xf32>
    %239 = arith.mulf %237, %238 : vector<8x256xf32>
    %c0_191 = arith.constant 0 : index
    %c0_192 = arith.constant 0 : index
    %c0_193 = arith.constant 0 : index
    %240 = vector.load %arg3[%c0_191, %c0_192, %c0_193] : memref<9x8x8xf32, #tpu.memory_space<vmem>>, vector<1x8x8xf32>
    %241 = vector.shape_cast %240 : vector<1x8x8xf32> to vector<8x8xf32>
    %cst_194 = arith.constant dense<0.000000e+00> : vector<8x256xf32>
    %242 = tpu.matmul %241, %239, %cst_194 {dimension_numbers = #tpu.dot_dimension_numbers<[1], [0], [0], [1], [0, 0, 1, 1], [], []>} : vector<8x8xf32>, vector<8x256xf32>, vector<8x256xf32> -> vector<8x256xf32>
    %243 = arith.addf %236, %242 : vector<8x256xf32>
    %c0_195 = arith.constant 0 : index
    %c1_196 = arith.constant 1 : index
    %244 = vector.load %arg10[%c0_195, %c1_196] : memref<8x290xf32, #tpu.memory_space<vmem>>, vector<8x256xf32>
    %c1_197 = arith.constant 1 : index
    %c0_198 = arith.constant 0 : index
    %c0_199 = arith.constant 0 : index
    %245 = vector.load %arg3[%c1_197, %c0_198, %c0_199] : memref<9x8x8xf32, #tpu.memory_space<vmem>>, vector<1x8x8xf32>
    %246 = vector.shape_cast %245 : vector<1x8x8xf32> to vector<8x8xf32>
    %cst_200 = arith.constant dense<0.000000e+00> : vector<8x256xf32>
    %247 = tpu.matmul %246, %244, %cst_200 {dimension_numbers = #tpu.dot_dimension_numbers<[1], [0], [0], [1], [0, 0, 1, 1], [], []>} : vector<8x8xf32>, vector<8x256xf32>, vector<8x256xf32> -> vector<8x256xf32>
    %248 = arith.addf %243, %247 : vector<8x256xf32>
    %c0_201 = arith.constant 0 : index
    %c2_202 = arith.constant 2 : index
    %249 = vector.load %arg10[%c0_201, %c2_202] : memref<8x290xf32, #tpu.memory_space<vmem>>, vector<8x256xf32>
    %250 = vector.broadcast %1 : vector<1x256xf32> to vector<8x256xf32>
    %251 = arith.mulf %249, %250 : vector<8x256xf32>
    %c2_203 = arith.constant 2 : index
    %c0_204 = arith.constant 0 : index
    %c0_205 = arith.constant 0 : index
    %252 = vector.load %arg3[%c2_203, %c0_204, %c0_205] : memref<9x8x8xf32, #tpu.memory_space<vmem>>, vector<1x8x8xf32>
    %253 = vector.shape_cast %252 : vector<1x8x8xf32> to vector<8x8xf32>
    %cst_206 = arith.constant dense<0.000000e+00> : vector<8x256xf32>
    %254 = tpu.matmul %253, %251, %cst_206 {dimension_numbers = #tpu.dot_dimension_numbers<[1], [0], [0], [1], [0, 0, 1, 1], [], []>} : vector<8x8xf32>, vector<8x256xf32>, vector<8x256xf32> -> vector<8x256xf32>
    %255 = arith.addf %248, %254 : vector<8x256xf32>
    %c0_207 = arith.constant 0 : index
    %c16_208 = arith.constant 16 : index
    %256 = vector.load %arg10[%c0_207, %c16_208] : memref<8x290xf32, #tpu.memory_space<vmem>>, vector<8x256xf32>
    %257 = vector.broadcast %0 : vector<1x256xf32> to vector<8x256xf32>
    %258 = arith.mulf %256, %257 : vector<8x256xf32>
    %c3_209 = arith.constant 3 : index
    %c0_210 = arith.constant 0 : index
    %c0_211 = arith.constant 0 : index
    %259 = vector.load %arg3[%c3_209, %c0_210, %c0_211] : memref<9x8x8xf32, #tpu.memory_space<vmem>>, vector<1x8x8xf32>
    %260 = vector.shape_cast %259 : vector<1x8x8xf32> to vector<8x8xf32>
    %cst_212 = arith.constant dense<0.000000e+00> : vector<8x256xf32>
    %261 = tpu.matmul %260, %258, %cst_212 {dimension_numbers = #tpu.dot_dimension_numbers<[1], [0], [0], [1], [0, 0, 1, 1], [], []>} : vector<8x8xf32>, vector<8x256xf32>, vector<8x256xf32> -> vector<8x256xf32>
    %262 = arith.addf %255, %261 : vector<8x256xf32>
    %c0_213 = arith.constant 0 : index
    %c17_214 = arith.constant 17 : index
    %263 = vector.load %arg10[%c0_213, %c17_214] : memref<8x290xf32, #tpu.memory_space<vmem>>, vector<8x256xf32>
    %c4_215 = arith.constant 4 : index
    %c0_216 = arith.constant 0 : index
    %c0_217 = arith.constant 0 : index
    %264 = vector.load %arg3[%c4_215, %c0_216, %c0_217] : memref<9x8x8xf32, #tpu.memory_space<vmem>>, vector<1x8x8xf32>
    %265 = vector.shape_cast %264 : vector<1x8x8xf32> to vector<8x8xf32>
    %cst_218 = arith.constant dense<0.000000e+00> : vector<8x256xf32>
    %266 = tpu.matmul %265, %263, %cst_218 {dimension_numbers = #tpu.dot_dimension_numbers<[1], [0], [0], [1], [0, 0, 1, 1], [], []>} : vector<8x8xf32>, vector<8x256xf32>, vector<8x256xf32> -> vector<8x256xf32>
    %267 = arith.addf %262, %266 : vector<8x256xf32>
    %c0_219 = arith.constant 0 : index
    %c18_220 = arith.constant 18 : index
    %268 = vector.load %arg10[%c0_219, %c18_220] : memref<8x290xf32, #tpu.memory_space<vmem>>, vector<8x256xf32>
    %269 = vector.broadcast %1 : vector<1x256xf32> to vector<8x256xf32>
    %270 = arith.mulf %268, %269 : vector<8x256xf32>
    %c5_221 = arith.constant 5 : index
    %c0_222 = arith.constant 0 : index
    %c0_223 = arith.constant 0 : index
    %271 = vector.load %arg3[%c5_221, %c0_222, %c0_223] : memref<9x8x8xf32, #tpu.memory_space<vmem>>, vector<1x8x8xf32>
    %272 = vector.shape_cast %271 : vector<1x8x8xf32> to vector<8x8xf32>
    %cst_224 = arith.constant dense<0.000000e+00> : vector<8x256xf32>
    %273 = tpu.matmul %272, %270, %cst_224 {dimension_numbers = #tpu.dot_dimension_numbers<[1], [0], [0], [1], [0, 0, 1, 1], [], []>} : vector<8x8xf32>, vector<8x256xf32>, vector<8x256xf32> -> vector<8x256xf32>
    %274 = arith.addf %267, %273 : vector<8x256xf32>
    %c0_225 = arith.constant 0 : index
    %c32_226 = arith.constant 32 : index
    %275 = vector.load %arg10[%c0_225, %c32_226] : memref<8x290xf32, #tpu.memory_space<vmem>>, vector<8x256xf32>
    %276 = vector.broadcast %0 : vector<1x256xf32> to vector<8x256xf32>
    %277 = arith.mulf %275, %276 : vector<8x256xf32>
    %c6_227 = arith.constant 6 : index
    %c0_228 = arith.constant 0 : index
    %c0_229 = arith.constant 0 : index
    %278 = vector.load %arg3[%c6_227, %c0_228, %c0_229] : memref<9x8x8xf32, #tpu.memory_space<vmem>>, vector<1x8x8xf32>
    %279 = vector.shape_cast %278 : vector<1x8x8xf32> to vector<8x8xf32>
    %cst_230 = arith.constant dense<0.000000e+00> : vector<8x256xf32>
    %280 = tpu.matmul %279, %277, %cst_230 {dimension_numbers = #tpu.dot_dimension_numbers<[1], [0], [0], [1], [0, 0, 1, 1], [], []>} : vector<8x8xf32>, vector<8x256xf32>, vector<8x256xf32> -> vector<8x256xf32>
    %281 = arith.addf %274, %280 : vector<8x256xf32>
    %c0_231 = arith.constant 0 : index
    %c33_232 = arith.constant 33 : index
    %282 = vector.load %arg10[%c0_231, %c33_232] : memref<8x290xf32, #tpu.memory_space<vmem>>, vector<8x256xf32>
    %c7_233 = arith.constant 7 : index
    %c0_234 = arith.constant 0 : index
    %c0_235 = arith.constant 0 : index
    %283 = vector.load %arg3[%c7_233, %c0_234, %c0_235] : memref<9x8x8xf32, #tpu.memory_space<vmem>>, vector<1x8x8xf32>
    %284 = vector.shape_cast %283 : vector<1x8x8xf32> to vector<8x8xf32>
    %cst_236 = arith.constant dense<0.000000e+00> : vector<8x256xf32>
    %285 = tpu.matmul %284, %282, %cst_236 {dimension_numbers = #tpu.dot_dimension_numbers<[1], [0], [0], [1], [0, 0, 1, 1], [], []>} : vector<8x8xf32>, vector<8x256xf32>, vector<8x256xf32> -> vector<8x256xf32>
    %286 = arith.addf %281, %285 : vector<8x256xf32>
    %c0_237 = arith.constant 0 : index
    %c34_238 = arith.constant 34 : index
    %287 = vector.load %arg10[%c0_237, %c34_238] : memref<8x290xf32, #tpu.memory_space<vmem>>, vector<8x256xf32>
    %288 = vector.broadcast %1 : vector<1x256xf32> to vector<8x256xf32>
    %289 = arith.mulf %287, %288 : vector<8x256xf32>
    %c8_239 = arith.constant 8 : index
    %c0_240 = arith.constant 0 : index
    %c0_241 = arith.constant 0 : index
    %290 = vector.load %arg3[%c8_239, %c0_240, %c0_241] : memref<9x8x8xf32, #tpu.memory_space<vmem>>, vector<1x8x8xf32>
    %291 = vector.shape_cast %290 : vector<1x8x8xf32> to vector<8x8xf32>
    %cst_242 = arith.constant dense<0.000000e+00> : vector<8x256xf32>
    %292 = tpu.matmul %291, %289, %cst_242 {dimension_numbers = #tpu.dot_dimension_numbers<[1], [0], [0], [1], [0, 0, 1, 1], [], []>} : vector<8x8xf32>, vector<8x256xf32>, vector<8x256xf32> -> vector<8x256xf32>
    %293 = arith.addf %286, %292 : vector<8x256xf32>
    %c0_243 = arith.constant 0 : index
    %c0_244 = arith.constant 0 : index
    %294 = vector.load %arg6[%c0_243, %c0_244] : memref<8x1xf32, #tpu.memory_space<vmem>>, vector<8x1xf32>
    %c0_245 = arith.constant 0 : index
    %c0_246 = arith.constant 0 : index
    %295 = vector.load %arg7[%c0_245, %c0_246] : memref<8x1xf32, #tpu.memory_space<vmem>>, vector<8x1xf32>
    %cst_247 = arith.constant dense<0.000000e+00> : vector<8xf32>
    %296 = vector.multi_reduction <add>, %234, %cst_247 [1] : vector<8x256xf32> to vector<8xf32>
    %297 = vector.shape_cast %296 : vector<8xf32> to vector<8x1xf32>
    %cst_248 = arith.constant 0.000000e+00 : f32
    %298 = vector.broadcast %cst_248 : f32 to vector<8x1xf32>
    %299 = arith.addf %298, %297 : vector<8x1xf32>
    %cst_249 = arith.constant dense<0.000000e+00> : vector<8xf32>
    %300 = vector.multi_reduction <add>, %293, %cst_249 [1] : vector<8x256xf32> to vector<8xf32>
    %301 = vector.shape_cast %300 : vector<8xf32> to vector<8x1xf32>
    %302 = arith.addf %299, %301 : vector<8x1xf32>
    %cst_250 = arith.constant 0.001953125 : f32
    %303 = vector.broadcast %cst_250 : f32 to vector<8x1xf32>
    %304 = arith.mulf %302, %303 : vector<8x1xf32>
    %305 = vector.broadcast %304 : vector<8x1xf32> to vector<8x256xf32>
    %306 = arith.subf %234, %305 : vector<8x256xf32>
    %307 = vector.broadcast %304 : vector<8x1xf32> to vector<8x256xf32>
    %308 = arith.subf %234, %307 : vector<8x256xf32>
    %309 = arith.mulf %306, %308 : vector<8x256xf32>
    %cst_251 = arith.constant dense<0.000000e+00> : vector<8xf32>
    %310 = vector.multi_reduction <add>, %309, %cst_251 [1] : vector<8x256xf32> to vector<8xf32>
    %311 = vector.shape_cast %310 : vector<8xf32> to vector<8x1xf32>
    %cst_252 = arith.constant 0.000000e+00 : f32
    %312 = vector.broadcast %cst_252 : f32 to vector<8x1xf32>
    %313 = arith.addf %312, %311 : vector<8x1xf32>
    %314 = vector.broadcast %304 : vector<8x1xf32> to vector<8x256xf32>
    %315 = arith.subf %293, %314 : vector<8x256xf32>
    %316 = vector.broadcast %304 : vector<8x1xf32> to vector<8x256xf32>
    %317 = arith.subf %293, %316 : vector<8x256xf32>
    %318 = arith.mulf %315, %317 : vector<8x256xf32>
    %cst_253 = arith.constant dense<0.000000e+00> : vector<8xf32>
    %319 = vector.multi_reduction <add>, %318, %cst_253 [1] : vector<8x256xf32> to vector<8xf32>
    %320 = vector.shape_cast %319 : vector<8xf32> to vector<8x1xf32>
    %321 = arith.addf %313, %320 : vector<8x1xf32>
    %cst_254 = arith.constant 0.001953125 : f32
    %322 = vector.broadcast %cst_254 : f32 to vector<8x1xf32>
    %323 = arith.mulf %321, %322 : vector<8x1xf32>
    %cst_255 = arith.constant 9.99999974E-6 : f32
    %324 = vector.broadcast %cst_255 : f32 to vector<8x1xf32>
    %325 = arith.addf %323, %324 : vector<8x1xf32>
    %326 = math.rsqrt %325 : vector<8x1xf32>
    %327 = arith.mulf %294, %326 : vector<8x1xf32>
    %328 = arith.mulf %304, %327 : vector<8x1xf32>
    %329 = arith.subf %295, %328 : vector<8x1xf32>
    %330 = vector.broadcast %327 : vector<8x1xf32> to vector<8x256xf32>
    %331 = arith.mulf %234, %330 : vector<8x256xf32>
    %332 = vector.broadcast %329 : vector<8x1xf32> to vector<8x256xf32>
    %333 = arith.addf %331, %332 : vector<8x256xf32>
    %cst_256 = arith.constant 0.000000e+00 : f32
    %334 = vector.broadcast %cst_256 : f32 to vector<8x256xf32>
    %335 = arith.maximumf %333, %334 : vector<8x256xf32>
    %336 = vector.broadcast %327 : vector<8x1xf32> to vector<8x256xf32>
    %337 = arith.mulf %293, %336 : vector<8x256xf32>
    %338 = vector.broadcast %329 : vector<8x1xf32> to vector<8x256xf32>
    %339 = arith.addf %337, %338 : vector<8x256xf32>
    %cst_257 = arith.constant 0.000000e+00 : f32
    %340 = vector.broadcast %cst_257 : f32 to vector<8x256xf32>
    %341 = arith.maximumf %339, %340 : vector<8x256xf32>
    %c0_258 = arith.constant 0 : index
    %c0_259 = arith.constant 0 : index
    %342 = vector.load %arg9[%c0_258, %c0_259] : memref<16x256xf32, #tpu.memory_space<vmem>>, vector<8x256xf32>
    tpu.vector_store %arg9[%c0_258, %c0_259], %335 {strides = array<i32>} : memref<16x256xf32, #tpu.memory_space<vmem>>, vector<8x256xf32>,
    %c8_260 = arith.constant 8 : index
    %c0_261 = arith.constant 0 : index
    %343 = vector.load %arg9[%c8_260, %c0_261] : memref<16x256xf32, #tpu.memory_space<vmem>>, vector<8x256xf32>
    tpu.vector_store %arg9[%c8_260, %c0_261], %341 {strides = array<i32>} : memref<16x256xf32, #tpu.memory_space<vmem>>, vector<8x256xf32>,
    return
  }
  func.func @transform_0(%arg0: i32) -> (i32, i32) {
    %c0_i32 = arith.constant 0 : i32
    %c0_i32_0 = arith.constant 0 : i32
    %c0_i32_1 = arith.constant 0 : i32
    return %c0_i32, %c0_i32_0 : i32, i32
  }
  func.func @transform_1(%arg0: i32) -> (i32, i32, i32) {
    %c0_i32 = arith.constant 0 : i32
    %c0_i32_0 = arith.constant 0 : i32
    %c0_i32_1 = arith.constant 0 : i32
    %c0_i32_2 = arith.constant 0 : i32
    return %c0_i32, %c0_i32_0, %c0_i32_1 : i32, i32, i32
  }
  func.func @transform_2(%arg0: i32) -> (i32, i32, i32) {
    %c0_i32 = arith.constant 0 : i32
    %c0_i32_0 = arith.constant 0 : i32
    %c0_i32_1 = arith.constant 0 : i32
    %c0_i32_2 = arith.constant 0 : i32
    return %c0_i32, %c0_i32_0, %c0_i32_1 : i32, i32, i32
  }
  func.func @transform_3(%arg0: i32) -> (i32, i32) {
    %c0_i32 = arith.constant 0 : i32
    %c0_i32_0 = arith.constant 0 : i32
    %c0_i32_1 = arith.constant 0 : i32
    return %c0_i32, %c0_i32_0 : i32, i32
  }
  func.func @transform_4(%arg0: i32) -> (i32, i32) {
    %c0_i32 = arith.constant 0 : i32
    %c0_i32_0 = arith.constant 0 : i32
    %c0_i32_1 = arith.constant 0 : i32
    return %c0_i32, %c0_i32_0 : i32, i32
  }
  func.func @transform_5(%arg0: i32) -> (i32, i32) {
    %c0_i32 = arith.constant 0 : i32
    %c0_i32_0 = arith.constant 0 : i32
    %c0_i32_1 = arith.constant 0 : i32
    return %c0_i32, %c0_i32_0 : i32, i32
  }
  func.func @transform_6(%arg0: i32) -> (i32, i32) {
    %c0_i32 = arith.constant 0 : i32
    %c0_i32_0 = arith.constant 0 : i32
    %c0_i32_1 = arith.constant 0 : i32
    return %c0_i32, %c0_i32_0 : i32, i32
  }
  func.func @transform_7(%arg0: i32) -> (i32, i32) {
    %c0_i32 = arith.constant 0 : i32
    %c0_i32_0 = arith.constant 0 : i32
    %c0_i32_1 = arith.constant 0 : i32
    return %c0_i32, %c0_i32_0 : i32, i32
  }
  func.func @transform_8(%arg0: i32) -> (i32, i32) {
    %c0_i32 = arith.constant 0 : i32
    %c0_i32_0 = arith.constant 0 : i32
    %c0_i32_1 = arith.constant 0 : i32
    return %c0_i32, %c0_i32_0 : i32, i32
  }
}

</mosaic_0001>

<llo_original>
// kernel: double_conv_forward.1
$region0: #{double_conv_forward.1}
  #allocation0 [shape = 'u32[]', space=smem, size = 0x4, offset = 0x4, fixed_abs, tag = 'smem constant byte address 0x4 - core index']
  #allocation1 [shape = 'u32[144,128]{1,0:T(1,128)}', space=vmem, size = 0x12000, scoped, tag = 'internal scratch']
  #allocation2 [shape = 'f32[8,290]{1,0:T(8,128)}', space=vmem, size = 0x3000, scoped, tag = 'scratch operand']
  %s0 = inlined_call_operand.vmem [shape: f32[8,256], index: 0, kind: input, shape index: {}]
  %s1 = inlined_call_operand.vmem [shape: f32[9,8,8], index: 1, kind: input, shape index: {}]
  %s2 = inlined_call_operand.vmem [shape: f32[9,8,8], index: 2, kind: input, shape index: {}]
  %s3 = inlined_call_operand.vmem [shape: f32[8,1], index: 3, kind: input, shape index: {}]
  %s4 = inlined_call_operand.vmem [shape: f32[8,1], index: 4, kind: input, shape index: {}]
  %s5 = inlined_call_operand.vmem [shape: f32[8,1], index: 5, kind: input, shape index: {}]
  %s6 = inlined_call_operand.vmem [shape: f32[8,1], index: 6, kind: input, shape index: {}]
  %s7 = inlined_call_operand.vmem [shape: f32[2,256], index: 7, kind: input, shape index: {}]
  %s8 = inlined_call_operand.vmem [shape: f32[16,256], index: 8, kind: output, shape index: {}]
  %s9 = sld [smem:[#allocation0]]
  $region42: #{double_conv_forward.1} parent=0
    _
  %s11 = ssub.s32 1, %s9
  %s12 = scalar_select 0, %s11, %s9
  // Predicated region
  $region2: #{double_conv_forward.1} parent=0 // pred_check
    _
  $region3: #{double_conv_forward.1} parent=0 // pred_check_branch
    %14 = sbr.rel (0) target = $region5
  $region4: #{double_conv_forward.1} parent=0 // pred_region
    _
  $region5: #{double_conv_forward.1} parent=0 // pred_fallthru
    _
  // Predicated region
  $region6: #{double_conv_forward.1} parent=0 // pred_check
    _
  $region7: #{double_conv_forward.1} parent=0 // pred_check_branch
    %16 = sbr.rel (0) target = $region9
  $region8: #{double_conv_forward.1} parent=0 // pred_region
    _
  $region9: #{double_conv_forward.1} parent=0 // pred_fallthru
    _
  // Predicated region
  $region10: #{double_conv_forward.1} parent=0 // pred_check
    _
  $region11: #{double_conv_forward.1} parent=0 // pred_check_branch
    %18 = sbr.rel (0) target = $region13
  $region12: #{double_conv_forward.1} parent=0 // pred_region
    _
  $region13: #{double_conv_forward.1} parent=0 // pred_fallthru
    _
  // Predicated region
  $region14: #{double_conv_forward.1} parent=0 // pred_check
    _
  $region15: #{double_conv_forward.1} parent=0 // pred_check_branch
    %20 = sbr.rel (0) target = $region17
  $region16: #{double_conv_forward.1} parent=0 // pred_region
    _
  $region17: #{double_conv_forward.1} parent=0 // pred_fallthru
    _
  // Predicated region
  $region18: #{double_conv_forward.1} parent=0 // pred_check
    _
  $region19: #{double_conv_forward.1} parent=0 // pred_check_branch
    %22 = sbr.rel (0) target = $region21
  $region20: #{double_conv_forward.1} parent=0 // pred_region
    _
  $region21: #{double_conv_forward.1} parent=0 // pred_fallthru
    _
  // Predicated region
  $region22: #{double_conv_forward.1} parent=0 // pred_check
    _
  $region23: #{double_conv_forward.1} parent=0 // pred_check_branch
    %24 = sbr.rel (0) target = $region25
  $region24: #{double_conv_forward.1} parent=0 // pred_region
    _
  $region25: #{double_conv_forward.1} parent=0 // pred_fallthru
    _
  // Predicated region
  $region26: #{double_conv_forward.1} parent=0 // pred_check
    _
  $region27: #{double_conv_forward.1} parent=0 // pred_check_branch
    %26 = sbr.rel (0) target = $region29
  $region28: #{double_conv_forward.1} parent=0 // pred_region
    _
  $region29: #{double_conv_forward.1} parent=0 // pred_fallthru
    _
  // Predicated region
  $region30: #{double_conv_forward.1} parent=0 // pred_check
    _
  $region31: #{double_conv_forward.1} parent=0 // pred_check_branch
    %28 = sbr.rel (0) target = $region33
  $region32: #{double_conv_forward.1} parent=0 // pred_region
    _
  $region33: #{double_conv_forward.1} parent=0 // pred_fallthru
    _
  %v29 = vld [vmem:[%s7] ss:$2 sm:$0x3]
  %s30 = scalar_lea.vmem %s7, 1
  %v31 = vld [vmem:[%s30] ss:$2 sm:$0x3]
  %vm32 = vcmask 138240
  %33 = vst.msk [vmem:[#allocation2] sm:$0xff] %vm32, 0.0
  %vm34 = vcmask 277640
  %35 = vst.msk [vmem:[#allocation2 + $0x10] sm:$0xff] %vm34, 0.0
  %vm36 = vcmask 1047692
  %37 = vst.msk [vmem:[#allocation2] sm:$0xf0] %vm36, 0.0
  %38 = vst [vmem:[#allocation2 + $0x8] sm:$0xf0] 0.0
  %vm39 = vcmask 138244
  %40 = vst.msk [vmem:[#allocation2 + $0x10] sm:$0xf0] %vm39, 0.0
  %v41 = vld [vmem:[%s0] sm:$0xf]
  %v42 = vld [vmem:[%s0 + $0x8] sm:$0xf]
  %45 = vrot.lane.b32.xlu0 %v41, 17
  %v46 = vpop.permute.xlu0 %45
  %47 = vrot.lane.b32.xlu0 %v42, 17
  %v48 = vpop.permute.xlu0 %47
  %v49 = vsel %vm32, %v46, %v48
  %vm53 = vcmask 1043592
  %54 = vst.msk [vmem:[#allocation2] sm:$0xf] %vm53, %v46
  %55 = vst [vmem:[#allocation2 + $0x8] sm:$0xf] %v49
  %vm56 = vcmask 134144
  %57 = vst.msk [vmem:[#allocation2 + $0x10] sm:$0xf] %vm56, %v48
  %v58 = vld [vmem:[#allocation2] sm:$0xff]
  %v59 = vld [vmem:[#allocation2 + $0x8] sm:$0xff]
  %v61 = vlaneseq
  %v62 = vshrl.u32 %v61, 7
  %v63 = vsub.s32 0, %v62
  %v64 = vrot.slane %v29, %v63
  %v65 = vlaneseq
  %v66 = vshrl.u32 %v65, 7
  %v67 = vsub.s32 1, %v66
  %v68 = vrot.slane %v29, %v67
  %v71 = vmul.f32 %v58, %v64
  %v72 = vmul.f32 %v59, %v68
  %v73 = vld [vmem:[%s1] sm:$0xff]
  %v74 = vld [vmem:[#allocation2 + $0x10] sm:$0xff]
  %s75 = scalar_lea.vmem %s1, 8
  %v76 = vld [vmem:[%s75] sm:$0xff]
  %80 = vrot.lane.b32.xlu0 %v58, 127
  %v81 = vpop.permute.xlu0 %80
  %82 = vrot.lane.b32.xlu0 %v59, 127
  %v83 = vpop.permute.xlu0 %82
  %84 = vrot.lane.b32.xlu0 %v74, 127
  %v85 = vpop.permute.xlu0 %84
  %vm86 = vcmask 1039360
  %v87 = vsel %vm86, %v81, %v83
  %v88 = vsel %vm86, %v83, %v85
  %vm91 = vcmask 64512
  %v93 = vsel %vm91, %v76, 0
  %95 = vmatprep.subr.mxu0 %v88
  %96 = vmatpush1.msra.mxu0 %v87
  %97 = vmatprep.subr.mxu0 0.0
  %98 = vmatpush1.msra.mxu0 0.0
  %99 = vmatprep.subr.mxu0 0.0
  %100 = vmatpush1.msra.mxu0 0.0
  %101 = vmatprep.subr.mxu0 0.0
  %102 = vmatpush1.msra.mxu0 0.0
  %103 = vmatprep.subr.mxu0 0.0
  %104 = vmatpush1.msra.mxu0 0.0
  %105 = vmatprep.subr.mxu0 0.0
  %106 = vmatpush1.msra.mxu0 0.0
  %107 = vmatprep.subr.mxu0 0.0
  %108 = vmatpush1.msra.mxu0 0.0
  %109 = vmatprep.subr.mxu0 0.0
  %110 = vmatpush1.msra.mxu0 0.0
  %111 = vmatprep.subr.mxu0 0.0
  %112 = vmatpush1.msra.mxu0 0.0
  %113 = vmatprep.subr.mxu0 0.0
  %114 = vmatpush1.msra.mxu0 0.0
  %115 = vmatprep.subr.mxu0 0.0
  %116 = vmatpush1.msra.mxu0 0.0
  %117 = vmatprep.subr.mxu0 0.0
  %118 = vmatpush1.msra.mxu0 0.0
  %119 = vmatprep.subr.mxu0 0.0
  %120 = vmatpush1.msra.mxu0 0.0
  %121 = vmatprep.subr.mxu0 0.0
  %122 = vmatpush1.msra.mxu0 0.0
  %123 = vmatprep.subr.mxu0 0.0
  %124 = vmatpush1.msra.mxu0 0.0
  %125 = vmatprep.subr.mxu0 0.0
  %126 = vmatpush1.msra.mxu0 0.0
  %127 = vmatprep.subr.mxu0 0.0
  %128 = vmatpush1.msra.mxu0 0.0
  %129 = vmatprep.subr.mxu0 0.0
  %130 = vmatpush1.msra.mxu0 0.0
  %131 = vmatprep.subr.mxu0 0.0
  %132 = vmatpush1.msra.mxu0 0.0
  %133 = vmatprep.subr.mxu0 0.0
  %134 = vmatpush1.msra.mxu0 0.0
  %135 = vmatprep.subr.mxu0 0.0
  %136 = vmatpush1.msra.mxu0 0.0
  %137 = vmatprep.subr.mxu0 0.0
  %138 = vmatpush1.msra.mxu0 0.0
  %139 = vmatprep.subr.mxu0 0.0
  %140 = vmatpush1.msra.mxu0 0.0
  %141 = vmatprep.subr.mxu0 0.0
  %142 = vmatpush1.msra.mxu0 0.0
  %143 = vmatprep.subr.mxu0 0.0
  %144 = vmatpush1.msra.mxu0 0.0
  %145 = vmatprep.subr.mxu0 0.0
  %146 = vmatpush1.msra.mxu0 0.0
  %147 = vmatprep.subr.mxu0 0.0
  %148 = vmatpush1.msra.mxu0 0.0
  %149 = vmatprep.subr.mxu0 0.0
  %150 = vmatpush1.msra.mxu0 0.0
  %151 = vmatprep.subr.mxu0 0.0
  %152 = vmatpush1.msra.mxu0 0.0
  %153 = vmatprep.subr.mxu0 0.0
  %154 = vmatpush1.msra.mxu0 0.0
  %155 = vmatprep.subr.mxu0 0.0
  %156 = vmatpush1.msra.mxu0 0.0
  %157 = vmatprep.subr.mxu0 0.0
  %158 = vmatpush1.msra.mxu0 0.0
  %159 = vmatprep.mubr.f32.mxu0 0.0
  %160 = vmatmul.mubr.f32.gmra.mrb[0].mxu0 %v93
  %v161 = vpop.f32.mrb[0].mxu0
  %v162 = vadd.f32 0.0, %v161
  %v163 = vpop.f32.mrb[0].mxu0
  %v164 = vadd.f32 0.0, %v163
  %165 = vdwg.mxu0
  %v167 = vsel %vm91, %v73, 0
  %169 = vmatprep.subr.mxu0 %v72
  %170 = vmatpush1.msra.mxu0 %v71
  %171 = vmatprep.subr.mxu0 0.0
  %172 = vmatpush1.msra.mxu0 0.0
  %173 = vmatprep.subr.mxu0 0.0
  %174 = vmatpush1.msra.mxu0 0.0
  %175 = vmatprep.subr.mxu0 0.0
  %176 = vmatpush1.msra.mxu0 0.0
  %177 = vmatprep.subr.mxu0 0.0
  %178 = vmatpush1.msra.mxu0 0.0
  %179 = vmatprep.subr.mxu0 0.0
  %180 = vmatpush1.msra.mxu0 0.0
  %181 = vmatprep.subr.mxu0 0.0
  %182 = vmatpush1.msra.mxu0 0.0
  %183 = vmatprep.subr.mxu0 0.0
  %184 = vmatpush1.msra.mxu0 0.0
  %185 = vmatprep.subr.mxu0 0.0
  %186 = vmatpush1.msra.mxu0 0.0
  %187 = vmatprep.subr.mxu0 0.0
  %188 = vmatpush1.msra.mxu0 0.0
  %189 = vmatprep.subr.mxu0 0.0
  %190 = vmatpush1.msra.mxu0 0.0
  %191 = vmatprep.subr.mxu0 0.0
  %192 = vmatpush1.msra.mxu0 0.0
  %193 = vmatprep.subr.mxu0 0.0
  %194 = vmatpush1.msra.mxu0 0.0
  %195 = vmatprep.subr.mxu0 0.0
  %196 = vmatpush1.msra.mxu0 0.0
  %197 = vmatprep.subr.mxu0 0.0
  %198 = vmatpush1.msra.mxu0 0.0
  %199 = vmatprep.subr.mxu0 0.0
  %200 = vmatpush1.msra.mxu0 0.0
  %201 = vmatprep.subr.mxu0 0.0
  %202 = vmatpush1.msra.mxu0 0.0
  %203 = vmatprep.subr.mxu0 0.0
  %204 = vmatpush1.msra.mxu0 0.0
  %205 = vmatprep.subr.mxu0 0.0
  %206 = vmatpush1.msra.mxu0 0.0
  %207 = vmatprep.subr.mxu0 0.0
  %208 = vmatpush1.msra.mxu0 0.0
  %209 = vmatprep.subr.mxu0 0.0
  %210 = vmatpush1.msra.mxu0 0.0
  %211 = vmatprep.subr.mxu0 0.0
  %212 = vmatpush1.msra.mxu0 0.0
  %213 = vmatprep.subr.mxu0 0.0
  %214 = vmatpush1.msra.mxu0 0.0
  %215 = vmatprep.subr.mxu0 0.0
  %216 = vmatpush1.msra.mxu0 0.0
  %217 = vmatprep.subr.mxu0 0.0
  %218 = vmatpush1.msra.mxu0 0.0
  %219 = vmatprep.subr.mxu0 0.0
  %220 = vmatpush1.msra.mxu0 0.0
  %221 = vmatprep.subr.mxu0 0.0
  %222 = vmatpush1.msra.mxu0 0.0
  %223 = vmatprep.subr.mxu0 0.0
  %224 = vmatpush1.msra.mxu0 0.0
  %225 = vmatprep.subr.mxu0 0.0
  %226 = vmatpush1.msra.mxu0 0.0
  %227 = vmatprep.subr.mxu0 0.0
  %228 = vmatpush1.msra.mxu0 0.0
  %229 = vmatprep.subr.mxu0 0.0
  %230 = vmatpush1.msra.mxu0 0.0
  %231 = vmatprep.subr.mxu0 0.0
  %232 = vmatpush1.msra.mxu0 0.0
  %233 = vmatprep.mubr.f32.mxu0 0.0
  %234 = vmatmul.mubr.f32.gmra.mrb[0].mxu0 %v167
  %v235 = vpop.f32.mrb[0].mxu0
  %v236 = vadd.f32 %v162, %v235
  %v237 = vpop.f32.mrb[0].mxu0
  %v238 = vadd.f32 %v164, %v237
  %239 = vdwg.mxu0
  %v241 = vlaneseq
  %v242 = vshrl.u32 %v241, 7
  %v243 = vsub.s32 0, %v242
  %v244 = vrot.slane %v31, %v243
  %v245 = vlaneseq
  %v246 = vshrl.u32 %v245, 7
  %v247 = vsub.s32 1, %v246
  %v248 = vrot.slane %v31, %v247
  %249 = vrot.lane.b32.xlu0 %v244, 2
  %v250 = vpop.permute.xlu0 %249
  %251 = vrot.lane.b32.xlu0 %v248, 2
  %v252 = vpop.permute.xlu0 %251
  %vm253 = vcmask 15360
  %v254 = vsel %vm253, %v250, %v252
  %v258 = vmul.f32 %v58, %v250
  %v259 = vmul.f32 %v59, %v254
  %v260 = vmul.f32 %v74, %v252
  %s261 = scalar_lea.vmem %s1, 16
  %v262 = vld [vmem:[%s261] sm:$0xff]
  %266 = vrot.lane.b32.xlu0 %v258, 126
  %v267 = vpop.permute.xlu0 %266
  %268 = vrot.lane.b32.xlu0 %v259, 126
  %v269 = vpop.permute.xlu0 %268
  %270 = vrot.lane.b32.xlu0 %v260, 126
  %v271 = vpop.permute.xlu0 %270
  %vm272 = vcmask 1031168
  %v273 = vsel %vm272, %v267, %v269
  %v274 = vsel %vm272, %v269, %v271
  %v278 = vsel %vm91, %v262, 0
  %280 = vmatprep.subr.mxu0 %v274
  %281 = vmatpush1.msra.mxu0 %v273
  %282 = vmatprep.subr.mxu0 0.0
  %283 = vmatpush1.msra.mxu0 0.0
  %284 = vmatprep.subr.mxu0 0.0
  %285 = vmatpush1.msra.mxu0 0.0
  %286 = vmatprep.subr.mxu0 0.0
  %287 = vmatpush1.msra.mxu0 0.0
  %288 = vmatprep.subr.mxu0 0.0
  %289 = vmatpush1.msra.mxu0 0.0
  %290 = vmatprep.subr.mxu0 0.0
  %291 = vmatpush1.msra.mxu0 0.0
  %292 = vmatprep.subr.mxu0 0.0
  %293 = vmatpush1.msra.mxu0 0.0
  %294 = vmatprep.subr.mxu0 0.0
  %295 = vmatpush1.msra.mxu0 0.0
  %296 = vmatprep.subr.mxu0 0.0
  %297 = vmatpush1.msra.mxu0 0.0
  %298 = vmatprep.subr.mxu0 0.0
  %299 = vmatpush1.msra.mxu0 0.0
  %300 = vmatprep.subr.mxu0 0.0
  %301 = vmatpush1.msra.mxu0 0.0
  %302 = vmatprep.subr.mxu0 0.0
  %303 = vmatpush1.msra.mxu0 0.0
  %304 = vmatprep.subr.mxu0 0.0
  %305 = vmatpush1.msra.mxu0 0.0
  %306 = vmatprep.subr.mxu0 0.0
  %307 = vmatpush1.msra.mxu0 0.0
  %308 = vmatprep.subr.mxu0 0.0
  %309 = vmatpush1.msra.mxu0 0.0
  %310 = vmatprep.subr.mxu0 0.0
  %311 = vmatpush1.msra.mxu0 0.0
  %312 = vmatprep.subr.mxu0 0.0
  %313 = vmatpush1.msra.mxu0 0.0
  %314 = vmatprep.subr.mxu0 0.0
  %315 = vmatpush1.msra.mxu0 0.0
  %316 = vmatprep.subr.mxu0 0.0
  %317 = vmatpush1.msra.mxu0 0.0
  %318 = vmatprep.subr.mxu0 0.0
  %319 = vmatpush1.msra.mxu0 0.0
  %320 = vmatprep.subr.mxu0 0.0
  %321 = vmatpush1.msra.mxu0 0.0
  %322 = vmatprep.subr.mxu0 0.0
  %323 = vmatpush1.msra.mxu0 0.0
  %324 = vmatprep.subr.mxu0 0.0
  %325 = vmatpush1.msra.mxu0 0.0
  %326 = vmatprep.subr.mxu0 0.0
  %327 = vmatpush1.msra.mxu0 0.0
  %328 = vmatprep.subr.mxu0 0.0
  %329 = vmatpush1.msra.mxu0 0.0
  %330 = vmatprep.subr.mxu0 0.0
  %331 = vmatpush1.msra.mxu0 0.0
  %332 = vmatprep.subr.mxu0 0.0
  %333 = vmatpush1.msra.mxu0 0.0
  %334 = vmatprep.subr.mxu0 0.0
  %335 = vmatpush1.msra.mxu0 0.0
  %336 = vmatprep.subr.mxu0 0.0
  %337 = vmatpush1.msra.mxu0 0.0
  %338 = vmatprep.subr.mxu0 0.0
  %339 = vmatpush1.msra.mxu0 0.0
  %340 = vmatprep.subr.mxu0 0.0
  %341 = vmatpush1.msra.mxu0 0.0
  %342 = vmatprep.subr.mxu0 0.0
  %343 = vmatpush1.msra.mxu0 0.0
  %344 = vmatprep.mubr.f32.mxu0 0.0
  %345 = vmatmul.mubr.f32.gmra.mrb[0].mxu0 %v278
  %v346 = vpop.f32.mrb[0].mxu0
  %v347 = vadd.f32 0.0, %v346
  %v348 = vpop.f32.mrb[0].mxu0
  %v349 = vadd.f32 0.0, %v348
  %350 = vdwg.mxu0
  %v351 = vadd.f32 %v236, %v347
  %v352 = vadd.f32 %v238, %v349
  %353 = vrot.lane.b32.xlu0 %v64, 16
  %v354 = vpop.permute.xlu0 %353
  %355 = vrot.lane.b32.xlu0 %v68, 16
  %v356 = vpop.permute.xlu0 %355
  %vm357 = vcmask 130048
  %v358 = vsel %vm357, %v354, %v356
  %v362 = vmul.f32 %v58, %v354
  %v363 = vmul.f32 %v59, %v358
  %v364 = vmul.f32 %v74, %v356
  %s365 = scalar_lea.vmem %s1, 24
  %v366 = vld [vmem:[%s365] sm:$0xff]
  %370 = vrot.lane.b32.xlu0 %v362, 112
  %v371 = vpop.permute.xlu0 %370
  %372 = vrot.lane.b32.xlu0 %v363, 112
  %v373 = vpop.permute.xlu0 %372
  %374 = vrot.lane.b32.xlu0 %v364, 112
  %v375 = vpop.permute.xlu0 %374
  %vm376 = vcmask 916480
  %v377 = vsel %vm376, %v371, %v373
  %v378 = vsel %vm376, %v373, %v375
  %v382 = vsel %vm91, %v366, 0
  %384 = vmatprep.subr.mxu0 %v378
  %385 = vmatpush1.msra.mxu0 %v377
  %386 = vmatprep.subr.mxu0 0.0
  %387 = vmatpush1.msra.mxu0 0.0
  %388 = vmatprep.subr.mxu0 0.0
  %389 = vmatpush1.msra.mxu0 0.0
  %390 = vmatprep.subr.mxu0 0.0
  %391 = vmatpush1.msra.mxu0 0.0
  %392 = vmatprep.subr.mxu0 0.0
  %393 = vmatpush1.msra.mxu0 0.0
  %394 = vmatprep.subr.mxu0 0.0
  %395 = vmatpush1.msra.mxu0 0.0
  %396 = vmatprep.subr.mxu0 0.0
  %397 = vmatpush1.msra.mxu0 0.0
  %398 = vmatprep.subr.mxu0 0.0
  %399 = vmatpush1.msra.mxu0 0.0
  %400 = vmatprep.subr.mxu0 0.0
  %401 = vmatpush1.msra.mxu0 0.0
  %402 = vmatprep.subr.mxu0 0.0
  %403 = vmatpush1.msra.mxu0 0.0
  %404 = vmatprep.subr.mxu0 0.0
  %405 = vmatpush1.msra.mxu0 0.0
  %406 = vmatprep.subr.mxu0 0.0
  %407 = vmatpush1.msra.mxu0 0.0
  %408 = vmatprep.subr.mxu0 0.0
  %409 = vmatpush1.msra.mxu0 0.0
  %410 = vmatprep.subr.mxu0 0.0
  %411 = vmatpush1.msra.mxu0 0.0
  %412 = vmatprep.subr.mxu0 0.0
  %413 = vmatpush1.msra.mxu0 0.0
  %414 = vmatprep.subr.mxu0 0.0
  %415 = vmatpush1.msra.mxu0 0.0
  %416 = vmatprep.subr.mxu0 0.0
  %417 = vmatpush1.msra.mxu0 0.0
  %418 = vmatprep.subr.mxu0 0.0
  %419 = vmatpush1.msra.mxu0 0.0
  %420 = vmatprep.subr.mxu0 0.0
  %421 = vmatpush1.msra.mxu0 0.0
  %422 = vmatprep.subr.mxu0 0.0
  %423 = vmatpush1.msra.mxu0 0.0
  %424 = vmatprep.subr.mxu0 0.0
  %425 = vmatpush1.msra.mxu0 0.0
  %426 = vmatprep.subr.mxu0 0.0
  %427 = vmatpush1.msra.mxu0 0.0
  %428 = vmatprep.subr.mxu0 0.0
  %429 = vmatpush1.msra.mxu0 0.0
  %430 = vmatprep.subr.mxu0 0.0
  %431 = vmatpush1.msra.mxu0 0.0
  %432 = vmatprep.subr.mxu0 0.0
  %433 = vmatpush1.msra.mxu0 0.0
  %434 = vmatprep.subr.mxu0 0.0
  %435 = vmatpush1.msra.mxu0 0.0
  %436 = vmatprep.subr.mxu0 0.0
  %437 = vmatpush1.msra.mxu0 0.0
  %438 = vmatprep.subr.mxu0 0.0
  %439 = vmatpush1.msra.mxu0 0.0
  %440 = vmatprep.subr.mxu0 0.0
  %441 = vmatpush1.msra.mxu0 0.0
  %442 = vmatprep.subr.mxu0 0.0
  %443 = vmatpush1.msra.mxu0 0.0
  %444 = vmatprep.subr.mxu0 0.0
  %445 = vmatpush1.msra.mxu0 0.0
  %446 = vmatprep.subr.mxu0 0.0
  %447 = vmatpush1.msra.mxu0 0.0
  %448 = vmatprep.mubr.f32.mxu0 0.0
  %449 = vmatmul.mubr.f32.gmra.mrb[0].mxu0 %v382
  %v450 = vpop.f32.mrb[0].mxu0
  %v451 = vadd.f32 0.0, %v450
  %v452 = vpop.f32.mrb[0].mxu0
  %v453 = vadd.f32 0.0, %v452
  %454 = vdwg.mxu0
  %v455 = vadd.f32 %v351, %v451
  %v456 = vadd.f32 %v352, %v453
  %s457 = scalar_lea.vmem %s1, 32
  %v458 = vld [vmem:[%s457] sm:$0xff]
  %459 = vrot.lane.b32.xlu0 %v58, 111
  %v460 = vpop.permute.xlu0 %459
  %461 = vrot.lane.b32.xlu0 %v59, 111
  %v462 = vpop.permute.xlu0 %461
  %463 = vrot.lane.b32.xlu0 %v74, 111
  %v464 = vpop.permute.xlu0 %463
  %vm465 = vcmask 908288
  %v466 = vsel %vm465, %v460, %v462
  %v467 = vsel %vm465, %v462, %v464
  %v471 = vsel %vm91, %v458, 0
  %473 = vmatprep.subr.mxu0 %v467
  %474 = vmatpush1.msra.mxu0 %v466
  %475 = vmatprep.subr.mxu0 0.0
  %476 = vmatpush1.msra.mxu0 0.0
  %477 = vmatprep.subr.mxu0 0.0
  %478 = vmatpush1.msra.mxu0 0.0
  %479 = vmatprep.subr.mxu0 0.0
  %480 = vmatpush1.msra.mxu0 0.0
  %481 = vmatprep.subr.mxu0 0.0
  %482 = vmatpush1.msra.mxu0 0.0
  %483 = vmatprep.subr.mxu0 0.0
  %484 = vmatpush1.msra.mxu0 0.0
  %485 = vmatprep.subr.mxu0 0.0
  %486 = vmatpush1.msra.mxu0 0.0
  %487 = vmatprep.subr.mxu0 0.0
  %488 = vmatpush1.msra.mxu0 0.0
  %489 = vmatprep.subr.mxu0 0.0
  %490 = vmatpush1.msra.mxu0 0.0
  %491 = vmatprep.subr.mxu0 0.0
  %492 = vmatpush1.msra.mxu0 0.0
  %493 = vmatprep.subr.mxu0 0.0
  %494 = vmatpush1.msra.mxu0 0.0
  %495 = vmatprep.subr.mxu0 0.0
  %496 = vmatpush1.msra.mxu0 0.0
  %497 = vmatprep.subr.mxu0 0.0
  %498 = vmatpush1.msra.mxu0 0.0
  %499 = vmatprep.subr.mxu0 0.0
  %500 = vmatpush1.msra.mxu0 0.0
  %501 = vmatprep.subr.mxu0 0.0
  %502 = vmatpush1.msra.mxu0 0.0
  %503 = vmatprep.subr.mxu0 0.0
  %504 = vmatpush1.msra.mxu0 0.0
  %505 = vmatprep.subr.mxu0 0.0
  %506 = vmatpush1.msra.mxu0 0.0
  %507 = vmatprep.subr.mxu0 0.0
  %508 = vmatpush1.msra.mxu0 0.0
  %509 = vmatprep.subr.mxu0 0.0
  %510 = vmatpush1.msra.mxu0 0.0
  %511 = vmatprep.subr.mxu0 0.0
  %512 = vmatpush1.msra.mxu0 0.0
  %513 = vmatprep.subr.mxu0 0.0
  %514 = vmatpush1.msra.mxu0 0.0
  %515 = vmatprep.subr.mxu0 0.0
  %516 = vmatpush1.msra.mxu0 0.0
  %517 = vmatprep.subr.mxu0 0.0
  %518 = vmatpush1.msra.mxu0 0.0
  %519 = vmatprep.subr.mxu0 0.0
  %520 = vmatpush1.msra.mxu0 0.0
  %521 = vmatprep.subr.mxu0 0.0
  %522 = vmatpush1.msra.mxu0 0.0
  %523 = vmatprep.subr.mxu0 0.0
  %524 = vmatpush1.msra.mxu0 0.0
  %525 = vmatprep.subr.mxu0 0.0
  %526 = vmatpush1.msra.mxu0 0.0
  %527 = vmatprep.subr.mxu0 0.0
  %528 = vmatpush1.msra.mxu0 0.0
  %529 = vmatprep.subr.mxu0 0.0
  %530 = vmatpush1.msra.mxu0 0.0
  %531 = vmatprep.subr.mxu0 0.0
  %532 = vmatpush1.msra.mxu0 0.0
  %533 = vmatprep.subr.mxu0 0.0
  %534 = vmatpush1.msra.mxu0 0.0
  %535 = vmatprep.subr.mxu0 0.0
  %536 = vmatpush1.msra.mxu0 0.0
  %537 = vmatprep.mubr.f32.mxu0 0.0
  %538 = vmatmul.mubr.f32.gmra.mrb[0].mxu0 %v471
  %v539 = vpop.f32.mrb[0].mxu0
  %v540 = vadd.f32 0.0, %v539
  %v541 = vpop.f32.mrb[0].mxu0
  %v542 = vadd.f32 0.0, %v541
  %543 = vdwg.mxu0
  %v544 = vadd.f32 %v455, %v540
  %v545 = vadd.f32 %v456, %v542
  %546 = vrot.lane.b32.xlu0 %v244, 18
  %v547 = vpop.permute.xlu0 %546
  %548 = vrot.lane.b32.xlu0 %v248, 18
  %v549 = vpop.permute.xlu0 %548
  %vm550 = vcmask 146432
  %v551 = vsel %vm550, %v547, %v549
  %v555 = vmul.f32 %v58, %v547
  %v556 = vmul.f32 %v59, %v551
  %v557 = vmul.f32 %v74, %v549
  %s558 = scalar_lea.vmem %s1, 40
  %v559 = vld [vmem:[%s558] sm:$0xff]
  %563 = vrot.lane.b32.xlu0 %v555, 110
  %v564 = vpop.permute.xlu0 %563
  %565 = vrot.lane.b32.xlu0 %v556, 110
  %v566 = vpop.permute.xlu0 %565
  %567 = vrot.lane.b32.xlu0 %v557, 110
  %v568 = vpop.permute.xlu0 %567
  %vm569 = vcmask 900096
  %v570 = vsel %vm569, %v564, %v566
  %v571 = vsel %vm569, %v566, %v568
  %v575 = vsel %vm91, %v559, 0
  %577 = vmatprep.subr.mxu0 %v571
  %578 = vmatpush1.msra.mxu0 %v570
  %579 = vmatprep.subr.mxu0 0.0
  %580 = vmatpush1.msra.mxu0 0.0
  %581 = vmatprep.subr.mxu0 0.0
  %582 = vmatpush1.msra.mxu0 0.0
  %583 = vmatprep.subr.mxu0 0.0
  %584 = vmatpush1.msra.mxu0 0.0
  %585 = vmatprep.subr.mxu0 0.0
  %586 = vmatpush1.msra.mxu0 0.0
  %587 = vmatprep.subr.mxu0 0.0
  %588 = vmatpush1.msra.mxu0 0.0
  %589 = vmatprep.subr.mxu0 0.0
  %590 = vmatpush1.msra.mxu0 0.0
  %591 = vmatprep.subr.mxu0 0.0
  %592 = vmatpush1.msra.mxu0 0.0
  %593 = vmatprep.subr.mxu0 0.0
  %594 = vmatpush1.msra.mxu0 0.0
  %595 = vmatprep.subr.mxu0 0.0
  %596 = vmatpush1.msra.mxu0 0.0
  %597 = vmatprep.subr.mxu0 0.0
  %598 = vmatpush1.msra.mxu0 0.0
  %599 = vmatprep.subr.mxu0 0.0
  %600 = vmatpush1.msra.mxu0 0.0
  %601 = vmatprep.subr.mxu0 0.0
  %602 = vmatpush1.msra.mxu0 0.0
  %603 = vmatprep.subr.mxu0 0.0
  %604 = vmatpush1.msra.mxu0 0.0
  %605 = vmatprep.subr.mxu0 0.0
  %606 = vmatpush1.msra.mxu0 0.0
  %607 = vmatprep.subr.mxu0 0.0
  %608 = vmatpush1.msra.mxu0 0.0
  %609 = vmatprep.subr.mxu0 0.0
  %610 = vmatpush1.msra.mxu0 0.0
  %611 = vmatprep.subr.mxu0 0.0
  %612 = vmatpush1.msra.mxu0 0.0
  %613 = vmatprep.subr.mxu0 0.0
  %614 = vmatpush1.msra.mxu0 0.0
  %615 = vmatprep.subr.mxu0 0.0
  %616 = vmatpush1.msra.mxu0 0.0
  %617 = vmatprep.subr.mxu0 0.0
  %618 = vmatpush1.msra.mxu0 0.0
  %619 = vmatprep.subr.mxu0 0.0
  %620 = vmatpush1.msra.mxu0 0.0
  %621 = vmatprep.subr.mxu0 0.0
  %622 = vmatpush1.msra.mxu0 0.0
  %623 = vmatprep.subr.mxu0 0.0
  %624 = vmatpush1.msra.mxu0 0.0
  %625 = vmatprep.subr.mxu0 0.0
  %626 = vmatpush1.msra.mxu0 0.0
  %627 = vmatprep.subr.mxu0 0.0
  %628 = vmatpush1.msra.mxu0 0.0
  %629 = vmatprep.subr.mxu0 0.0
  %630 = vmatpush1.msra.mxu0 0.0
  %631 = vmatprep.subr.mxu0 0.0
  %632 = vmatpush1.msra.mxu0 0.0
  %633 = vmatprep.subr.mxu0 0.0
  %634 = vmatpush1.msra.mxu0 0.0
  %635 = vmatprep.subr.mxu0 0.0
  %636 = vmatpush1.msra.mxu0 0.0
  %637 = vmatprep.subr.mxu0 0.0
  %638 = vmatpush1.msra.mxu0 0.0
  %639 = vmatprep.subr.mxu0 0.0
  %640 = vmatpush1.msra.mxu0 0.0
  %641 = vmatprep.mubr.f32.mxu0 0.0
  %642 = vmatmul.mubr.f32.gmra.mrb[0].mxu0 %v575
  %v643 = vpop.f32.mrb[0].mxu0
  %v644 = vadd.f32 0.0, %v643
  %v645 = vpop.f32.mrb[0].mxu0
  %v646 = vadd.f32 0.0, %v645
  %647 = vdwg.mxu0
  %v648 = vadd.f32 %v544, %v644
  %v649 = vadd.f32 %v545, %v646
  %650 = vrot.lane.b32.xlu0 %v64, 32
  %v651 = vpop.permute.xlu0 %650
  %652 = vrot.lane.b32.xlu0 %v68, 32
  %v653 = vpop.permute.xlu0 %652
  %vm654 = vcmask 261120
  %v655 = vsel %vm654, %v651, %v653
  %v659 = vmul.f32 %v58, %v651
  %v660 = vmul.f32 %v59, %v655
  %v661 = vmul.f32 %v74, %v653
  %s662 = scalar_lea.vmem %s1, 48
  %v663 = vld [vmem:[%s662] sm:$0xff]
  %667 = vrot.lane.b32.xlu0 %v659, 96
  %v668 = vpop.permute.xlu0 %667
  %669 = vrot.lane.b32.xlu0 %v660, 96
  %v670 = vpop.permute.xlu0 %669
  %671 = vrot.lane.b32.xlu0 %v661, 96
  %v672 = vpop.permute.xlu0 %671
  %vm673 = vcmask 785408
  %v674 = vsel %vm673, %v668, %v670
  %v675 = vsel %vm673, %v670, %v672
  %v679 = vsel %vm91, %v663, 0
  %681 = vmatprep.subr.mxu0 %v675
  %682 = vmatpush1.msra.mxu0 %v674
  %683 = vmatprep.subr.mxu0 0.0
  %684 = vmatpush1.msra.mxu0 0.0
  %685 = vmatprep.subr.mxu0 0.0
  %686 = vmatpush1.msra.mxu0 0.0
  %687 = vmatprep.subr.mxu0 0.0
  %688 = vmatpush1.msra.mxu0 0.0
  %689 = vmatprep.subr.mxu0 0.0
  %690 = vmatpush1.msra.mxu0 0.0
  %691 = vmatprep.subr.mxu0 0.0
  %692 = vmatpush1.msra.mxu0 0.0
  %693 = vmatprep.subr.mxu0 0.0
  %694 = vmatpush1.msra.mxu0 0.0
  %695 = vmatprep.subr.mxu0 0.0
  %696 = vmatpush1.msra.mxu0 0.0
  %697 = vmatprep.subr.mxu0 0.0
  %698 = vmatpush1.msra.mxu0 0.0
  %699 = vmatprep.subr.mxu0 0.0
  %700 = vmatpush1.msra.mxu0 0.0
  %701 = vmatprep.subr.mxu0 0.0
  %702 = vmatpush1.msra.mxu0 0.0
  %703 = vmatprep.subr.mxu0 0.0
  %704 = vmatpush1.msra.mxu0 0.0
  %705 = vmatprep.subr.mxu0 0.0
  %706 = vmatpush1.msra.mxu0 0.0
  %707 = vmatprep.subr.mxu0 0.0
  %708 = vmatpush1.msra.mxu0 0.0
  %709 = vmatprep.subr.mxu0 0.0
  %710 = vmatpush1.msra.mxu0 0.0
  %711 = vmatprep.subr.mxu0 0.0
  %712 = vmatpush1.msra.mxu0 0.0
  %713 = vmatprep.subr.mxu0 0.0
  %714 = vmatpush1.msra.mxu0 0.0
  %715 = vmatprep.subr.mxu0 0.0
  %716 = vmatpush1.msra.mxu0 0.0
  %717 = vmatprep.subr.mxu0 0.0
  %718 = vmatpush1.msra.mxu0 0.0
  %719 = vmatprep.subr.mxu0 0.0
  %720 = vmatpush1.msra.mxu0 0.0
  %721 = vmatprep.subr.mxu0 0.0
  %722 = vmatpush1.msra.mxu0 0.0
  %723 = vmatprep.subr.mxu0 0.0
  %724 = vmatpush1.msra.mxu0 0.0
  %725 = vmatprep.subr.mxu0 0.0
  %726 = vmatpush1.msra.mxu0 0.0
  %727 = vmatprep.subr.mxu0 0.0
  %728 = vmatpush1.msra.mxu0 0.0
  %729 = vmatprep.subr.mxu0 0.0
  %730 = vmatpush1.msra.mxu0 0.0
  %731 = vmatprep.subr.mxu0 0.0
  %732 = vmatpush1.msra.mxu0 0.0
  %733 = vmatprep.subr.mxu0 0.0
  %734 = vmatpush1.msra.mxu0 0.0
  %735 = vmatprep.subr.mxu0 0.0
  %736 = vmatpush1.msra.mxu0 0.0
  %737 = vmatprep.subr.mxu0 0.0
  %738 = vmatpush1.msra.mxu0 0.0
  %739 = vmatprep.subr.mxu0 0.0
  %740 = vmatpush1.msra.mxu0 0.0
  %741 = vmatprep.subr.mxu0 0.0
  %742 = vmatpush1.msra.mxu0 0.0
  %743 = vmatprep.subr.mxu0 0.0
  %744 = vmatpush1.msra.mxu0 0.0
  %745 = vmatprep.mubr.f32.mxu0 0.0
  %746 = vmatmul.mubr.f32.gmra.mrb[0].mxu0 %v679
  %v747 = vpop.f32.mrb[0].mxu0
  %v748 = vadd.f32 0.0, %v747
  %v749 = vpop.f32.mrb[0].mxu0
  %v750 = vadd.f32 0.0, %v749
  %751 = vdwg.mxu0
  %v752 = vadd.f32 %v648, %v748
  %v753 = vadd.f32 %v649, %v750
  %s754 = scalar_lea.vmem %s1, 56
  %v755 = vld [vmem:[%s754] sm:$0xff]
  %756 = vrot.lane.b32.xlu0 %v58, 95
  %v757 = vpop.permute.xlu0 %756
  %758 = vrot.lane.b32.xlu0 %v59, 95
  %v759 = vpop.permute.xlu0 %758
  %760 = vrot.lane.b32.xlu0 %v74, 95
  %v761 = vpop.permute.xlu0 %760
  %vm762 = vcmask 777216
  %v763 = vsel %vm762, %v757, %v759
  %v764 = vsel %vm762, %v759, %v761
  %v768 = vsel %vm91, %v755, 0
  %770 = vmatprep.subr.mxu0 %v764
  %771 = vmatpush1.msra.mxu0 %v763
  %772 = vmatprep.subr.mxu0 0.0
  %773 = vmatpush1.msra.mxu0 0.0
  %774 = vmatprep.subr.mxu0 0.0
  %775 = vmatpush1.msra.mxu0 0.0
  %776 = vmatprep.subr.mxu0 0.0
  %777 = vmatpush1.msra.mxu0 0.0
  %778 = vmatprep.subr.mxu0 0.0
  %779 = vmatpush1.msra.mxu0 0.0
  %780 = vmatprep.subr.mxu0 0.0
  %781 = vmatpush1.msra.mxu0 0.0
  %782 = vmatprep.subr.mxu0 0.0
  %783 = vmatpush1.msra.mxu0 0.0
  %784 = vmatprep.subr.mxu0 0.0
  %785 = vmatpush1.msra.mxu0 0.0
  %786 = vmatprep.subr.mxu0 0.0
  %787 = vmatpush1.msra.mxu0 0.0
  %788 = vmatprep.subr.mxu0 0.0
  %789 = vmatpush1.msra.mxu0 0.0
  %790 = vmatprep.subr.mxu0 0.0
  %791 = vmatpush1.msra.mxu0 0.0
  %792 = vmatprep.subr.mxu0 0.0
  %793 = vmatpush1.msra.mxu0 0.0
  %794 = vmatprep.subr.mxu0 0.0
  %795 = vmatpush1.msra.mxu0 0.0
  %796 = vmatprep.subr.mxu0 0.0
  %797 = vmatpush1.msra.mxu0 0.0
  %798 = vmatprep.subr.mxu0 0.0
  %799 = vmatpush1.msra.mxu0 0.0
  %800 = vmatprep.subr.mxu0 0.0
  %801 = vmatpush1.msra.mxu0 0.0
  %802 = vmatprep.subr.mxu0 0.0
  %803 = vmatpush1.msra.mxu0 0.0
  %804 = vmatprep.subr.mxu0 0.0
  %805 = vmatpush1.msra.mxu0 0.0
  %806 = vmatprep.subr.mxu0 0.0
  %807 = vmatpush1.msra.mxu0 0.0
  %808 = vmatprep.subr.mxu0 0.0
  %809 = vmatpush1.msra.mxu0 0.0
  %810 = vmatprep.subr.mxu0 0.0
  %811 = vmatpush1.msra.mxu0 0.0
  %812 = vmatprep.subr.mxu0 0.0
  %813 = vmatpush1.msra.mxu0 0.0
  %814 = vmatprep.subr.mxu0 0.0
  %815 = vmatpush1.msra.mxu0 0.0
  %816 = vmatprep.subr.mxu0 0.0
  %817 = vmatpush1.msra.mxu0 0.0
  %818 = vmatprep.subr.mxu0 0.0
  %819 = vmatpush1.msra.mxu0 0.0
  %820 = vmatprep.subr.mxu0 0.0
  %821 = vmatpush1.msra.mxu0 0.0
  %822 = vmatprep.subr.mxu0 0.0
  %823 = vmatpush1.msra.mxu0 0.0
  %824 = vmatprep.subr.mxu0 0.0
  %825 = vmatpush1.msra.mxu0 0.0
  %826 = vmatprep.subr.mxu0 0.0
  %827 = vmatpush1.msra.mxu0 0.0
  %828 = vmatprep.subr.mxu0 0.0
  %829 = vmatpush1.msra.mxu0 0.0
  %830 = vmatprep.subr.mxu0 0.0
  %831 = vmatpush1.msra.mxu0 0.0
  %832 = vmatprep.subr.mxu0 0.0
  %833 = vmatpush1.msra.mxu0 0.0
  %834 = vmatprep.mubr.f32.mxu0 0.0
  %835 = vmatmul.mubr.f32.gmra.mrb[0].mxu0 %v768
  %v836 = vpop.f32.mrb[0].mxu0
  %v837 = vadd.f32 0.0, %v836
  %v838 = vpop.f32.mrb[0].mxu0
  %v839 = vadd.f32 0.0, %v838
  %840 = vdwg.mxu0
  %v841 = vadd.f32 %v752, %v837
  %v842 = vadd.f32 %v753, %v839
  %843 = vrot.lane.b32.xlu0 %v244, 34
  %v844 = vpop.permute.xlu0 %843
  %845 = vrot.lane.b32.xlu0 %v248, 34
  %v846 = vpop.permute.xlu0 %845
  %vm847 = vcmask 277504
  %v848 = vsel %vm847, %v844, %v846
  %v852 = vmul.f32 %v58, %v844
  %v853 = vmul.f32 %v59, %v848
  %v854 = vmul.f32 %v74, %v846
  %s855 = scalar_lea.vmem %s1, 64
  %v856 = vld [vmem:[%s855] sm:$0xff]
  %860 = vrot.lane.b32.xlu0 %v852, 94
  %v861 = vpop.permute.xlu0 %860
  %862 = vrot.lane.b32.xlu0 %v853, 94
  %v863 = vpop.permute.xlu0 %862
  %864 = vrot.lane.b32.xlu0 %v854, 94
  %v865 = vpop.permute.xlu0 %864
  %vm866 = vcmask 769024
  %v867 = vsel %vm866, %v861, %v863
  %v868 = vsel %vm866, %v863, %v865
  %v872 = vsel %vm91, %v856, 0
  %874 = vmatprep.subr.mxu0 %v868
  %875 = vmatpush1.msra.mxu0 %v867
  %876 = vmatprep.subr.mxu0 0.0
  %877 = vmatpush1.msra.mxu0 0.0
  %878 = vmatprep.subr.mxu0 0.0
  %879 = vmatpush1.msra.mxu0 0.0
  %880 = vmatprep.subr.mxu0 0.0
  %881 = vmatpush1.msra.mxu0 0.0
  %882 = vmatprep.subr.mxu0 0.0
  %883 = vmatpush1.msra.mxu0 0.0
  %884 = vmatprep.subr.mxu0 0.0
  %885 = vmatpush1.msra.mxu0 0.0
  %886 = vmatprep.subr.mxu0 0.0
  %887 = vmatpush1.msra.mxu0 0.0
  %888 = vmatprep.subr.mxu0 0.0
  %889 = vmatpush1.msra.mxu0 0.0
  %890 = vmatprep.subr.mxu0 0.0
  %891 = vmatpush1.msra.mxu0 0.0
  %892 = vmatprep.subr.mxu0 0.0
  %893 = vmatpush1.msra.mxu0 0.0
  %894 = vmatprep.subr.mxu0 0.0
  %895 = vmatpush1.msra.mxu0 0.0
  %896 = vmatprep.subr.mxu0 0.0
  %897 = vmatpush1.msra.mxu0 0.0
  %898 = vmatprep.subr.mxu0 0.0
  %899 = vmatpush1.msra.mxu0 0.0
  %900 = vmatprep.subr.mxu0 0.0
  %901 = vmatpush1.msra.mxu0 0.0
  %902 = vmatprep.subr.mxu0 0.0
  %903 = vmatpush1.msra.mxu0 0.0
  %904 = vmatprep.subr.mxu0 0.0
  %905 = vmatpush1.msra.mxu0 0.0
  %906 = vmatprep.subr.mxu0 0.0
  %907 = vmatpush1.msra.mxu0 0.0
  %908 = vmatprep.subr.mxu0 0.0
  %909 = vmatpush1.msra.mxu0 0.0
  %910 = vmatprep.subr.mxu0 0.0
  %911 = vmatpush1.msra.mxu0 0.0
  %912 = vmatprep.subr.mxu0 0.0
  %913 = vmatpush1.msra.mxu0 0.0
  %914 = vmatprep.subr.mxu0 0.0
  %915 = vmatpush1.msra.mxu0 0.0
  %916 = vmatprep.subr.mxu0 0.0
  %917 = vmatpush1.msra.mxu0 0.0
  %918 = vmatprep.subr.mxu0 0.0
  %919 = vmatpush1.msra.mxu0 0.0
  %920 = vmatprep.subr.mxu0 0.0
  %921 = vmatpush1.msra.mxu0 0.0
  %922 = vmatprep.subr.mxu0 0.0
  %923 = vmatpush1.msra.mxu0 0.0
  %924 = vmatprep.subr.mxu0 0.0
  %925 = vmatpush1.msra.mxu0 0.0
  %926 = vmatprep.subr.mxu0 0.0
  %927 = vmatpush1.msra.mxu0 0.0
  %928 = vmatprep.subr.mxu0 0.0
  %929 = vmatpush1.msra.mxu0 0.0
  %930 = vmatprep.subr.mxu0 0.0
  %931 = vmatpush1.msra.mxu0 0.0
  %932 = vmatprep.subr.mxu0 0.0
  %933 = vmatpush1.msra.mxu0 0.0
  %934 = vmatprep.subr.mxu0 0.0
  %935 = vmatpush1.msra.mxu0 0.0
  %936 = vmatprep.subr.mxu0 0.0
  %937 = vmatpush1.msra.mxu0 0.0
  %938 = vmatprep.mubr.f32.mxu0 0.0
  %939 = vmatmul.mubr.f32.gmra.mrb[0].mxu0 %v872
  %v940 = vpop.f32.mrb[0].mxu0
  %v941 = vadd.f32 0.0, %v940
  %v942 = vpop.f32.mrb[0].mxu0
  %v943 = vadd.f32 0.0, %v942
  %944 = vdwg.mxu0
  %v945 = vadd.f32 %v841, %v941
  %v946 = vadd.f32 %v842, %v943
  %v947 = vld [vmem:[%s0] sm:$0xf0]
  %v948 = vld [vmem:[%s0 + $0x8] sm:$0xf0]
  %v951 = vrot.slane %v947, 4
  %v952 = vrot.slane %v948, 4
  %953 = vrot.lane.b32.xlu0 %v951, 17
  %v954 = vpop.permute.xlu0 %953
  %955 = vrot.lane.b32.xlu0 %v952, 17
  %v956 = vpop.permute.xlu0 %955
  %v957 = vsel %vm32, %v954, %v956
  %961 = vst.msk [vmem:[#allocation2] sm:$0xf] %vm53, %v954
  %962 = vst [vmem:[#allocation2 + $0x8] sm:$0xf] %v957
  %963 = vst.msk [vmem:[#allocation2 + $0x10] sm:$0xf] %vm56, %v956
  %v964 = vld [vmem:[#allocation2] sm:$0xff]
  %v965 = vld [vmem:[#allocation2 + $0x8] sm:$0xff]
  %v966 = vmul.f32 %v964, %v64
  %v967 = vmul.f32 %v965, %v68
  %v968 = vld [vmem:[%s1] sm:$0xff]
  %v969 = vld [vmem:[#allocation2 + $0x10] sm:$0xff]
  %v970 = vld [vmem:[%s75] sm:$0xff]
  %974 = vrot.lane.b32.xlu0 %v964, 127
  %v975 = vpop.permute.xlu0 %974
  %976 = vrot.lane.b32.xlu0 %v965, 127
  %v977 = vpop.permute.xlu0 %976
  %978 = vrot.lane.b32.xlu0 %v969, 127
  %v979 = vpop.permute.xlu0 %978
  %v980 = vsel %vm86, %v975, %v977
  %v981 = vsel %vm86, %v977, %v979
  %v985 = vsel %vm91, %v970, 0
  %987 = vmatprep.subr.mxu0 %v981
  %988 = vmatpush1.msra.mxu0 %v980
  %989 = vmatprep.subr.mxu0 0.0
  %990 = vmatpush1.msra.mxu0 0.0
  %991 = vmatprep.subr.mxu0 0.0
  %992 = vmatpush1.msra.mxu0 0.0
  %993 = vmatprep.subr.mxu0 0.0
  %994 = vmatpush1.msra.mxu0 0.0
  %995 = vmatprep.subr.mxu0 0.0
  %996 = vmatpush1.msra.mxu0 0.0
  %997 = vmatprep.subr.mxu0 0.0
  %998 = vmatpush1.msra.mxu0 0.0
  %999 = vmatprep.subr.mxu0 0.0
  %1000 = vmatpush1.msra.mxu0 0.0
  %1001 = vmatprep.subr.mxu0 0.0
  %1002 = vmatpush1.msra.mxu0 0.0
  %1003 = vmatprep.subr.mxu0 0.0
  %1004 = vmatpush1.msra.mxu0 0.0
  %1005 = vmatprep.subr.mxu0 0.0
  %1006 = vmatpush1.msra.mxu0 0.0
  %1007 = vmatprep.subr.mxu0 0.0
  %1008 = vmatpush1.msra.mxu0 0.0
  %1009 = vmatprep.subr.mxu0 0.0
  %1010 = vmatpush1.msra.mxu0 0.0
  %1011 = vmatprep.subr.mxu0 0.0
  %1012 = vmatpush1.msra.mxu0 0.0
  %1013 = vmatprep.subr.mxu0 0.0
  %1014 = vmatpush1.msra.mxu0 0.0
  %1015 = vmatprep.subr.mxu0 0.0
  %1016 = vmatpush1.msra.mxu0 0.0
  %1017 = vmatprep.subr.mxu0 0.0
  %1018 = vmatpush1.msra.mxu0 0.0
  %1019 = vmatprep.subr.mxu0 0.0
  %1020 = vmatpush1.msra.mxu0 0.0
  %1021 = vmatprep.subr.mxu0 0.0
  %1022 = vmatpush1.msra.mxu0 0.0
  %1023 = vmatprep.subr.mxu0 0.0
  %1024 = vmatpush1.msra.mxu0 0.0
  %1025 = vmatprep.subr.mxu0 0.0
  %1026 = vmatpush1.msra.mxu0 0.0
  %1027 = vmatprep.subr.mxu0 0.0
  %1028 = vmatpush1.msra.mxu0 0.0
  %1029 = vmatprep.subr.mxu0 0.0
  %1030 = vmatpush1.msra.mxu0 0.0
  %1031 = vmatprep.subr.mxu0 0.0
  %1032 = vmatpush1.msra.mxu0 0.0
  %1033 = vmatprep.subr.mxu0 0.0
  %1034 = vmatpush1.msra.mxu0 0.0
  %1035 = vmatprep.subr.mxu0 0.0
  %1036 = vmatpush1.msra.mxu0 0.0
  %1037 = vmatprep.subr.mxu0 0.0
  %1038 = vmatpush1.msra.mxu0 0.0
  %1039 = vmatprep.subr.mxu0 0.0
  %1040 = vmatpush1.msra.mxu0 0.0
  %1041 = vmatprep.subr.mxu0 0.0
  %1042 = vmatpush1.msra.mxu0 0.0
  %1043 = vmatprep.subr.mxu0 0.0
  %1044 = vmatpush1.msra.mxu0 0.0
  %1045 = vmatprep.subr.mxu0 0.0
  %1046 = vmatpush1.msra.mxu0 0.0
  %1047 = vmatprep.subr.mxu0 0.0
  %1048 = vmatpush1.msra.mxu0 0.0
  %1049 = vmatprep.subr.mxu0 0.0
  %1050 = vmatpush1.msra.mxu0 0.0
  %1051 = vmatprep.mubr.f32.mxu0 0.0
  %1052 = vmatmul.mubr.f32.gmra.mrb[0].mxu0 %v985
  %v1053 = vpop.f32.mrb[0].mxu0
  %v1054 = vadd.f32 0.0, %v1053
  %v1055 = vpop.f32.mrb[0].mxu0
  %v1056 = vadd.f32 0.0, %v1055
  %1057 = vdwg.mxu0
  %v1059 = vsel %vm91, %v968, 0
  %1061 = vmatprep.subr.mxu0 %v967
  %1062 = vmatpush1.msra.mxu0 %v966
  %1063 = vmatprep.subr.mxu0 0.0
  %1064 = vmatpush1.msra.mxu0 0.0
  %1065 = vmatprep.subr.mxu0 0.0
  %1066 = vmatpush1.msra.mxu0 0.0
  %1067 = vmatprep.subr.mxu0 0.0
  %1068 = vmatpush1.msra.mxu0 0.0
  %1069 = vmatprep.subr.mxu0 0.0
  %1070 = vmatpush1.msra.mxu0 0.0
  %1071 = vmatprep.subr.mxu0 0.0
  %1072 = vmatpush1.msra.mxu0 0.0
  %1073 = vmatprep.subr.mxu0 0.0
  %1074 = vmatpush1.msra.mxu0 0.0
  %1075 = vmatprep.subr.mxu0 0.0
  %1076 = vmatpush1.msra.mxu0 0.0
  %1077 = vmatprep.subr.mxu0 0.0
  %1078 = vmatpush1.msra.mxu0 0.0
  %1079 = vmatprep.subr.mxu0 0.0
  %1080 = vmatpush1.msra.mxu0 0.0
  %1081 = vmatprep.subr.mxu0 0.0
  %1082 = vmatpush1.msra.mxu0 0.0
  %1083 = vmatprep.subr.mxu0 0.0
  %1084 = vmatpush1.msra.mxu0 0.0
  %1085 = vmatprep.subr.mxu0 0.0
  %1086 = vmatpush1.msra.mxu0 0.0
  %1087 = vmatprep.subr.mxu0 0.0
  %1088 = vmatpush1.msra.mxu0 0.0
  %1089 = vmatprep.subr.mxu0 0.0
  %1090 = vmatpush1.msra.mxu0 0.0
  %1091 = vmatprep.subr.mxu0 0.0
  %1092 = vmatpush1.msra.mxu0 0.0
  %1093 = vmatprep.subr.mxu0 0.0
  %1094 = vmatpush1.msra.mxu0 0.0
  %1095 = vmatprep.subr.mxu0 0.0
  %1096 = vmatpush1.msra.mxu0 0.0
  %1097 = vmatprep.subr.mxu0 0.0
  %1098 = vmatpush1.msra.mxu0 0.0
  %1099 = vmatprep.subr.mxu0 0.0
  %1100 = vmatpush1.msra.mxu0 0.0
  %1101 = vmatprep.subr.mxu0 0.0
  %1102 = vmatpush1.msra.mxu0 0.0
  %1103 = vmatprep.subr.mxu0 0.0
  %1104 = vmatpush1.msra.mxu0 0.0
  %1105 = vmatprep.subr.mxu0 0.0
  %1106 = vmatpush1.msra.mxu0 0.0
  %1107 = vmatprep.subr.mxu0 0.0
  %1108 = vmatpush1.msra.mxu0 0.0
  %1109 = vmatprep.subr.mxu0 0.0
  %1110 = vmatpush1.msra.mxu0 0.0
  %1111 = vmatprep.subr.mxu0 0.0
  %1112 = vmatpush1.msra.mxu0 0.0
  %1113 = vmatprep.subr.mxu0 0.0
  %1114 = vmatpush1.msra.mxu0 0.0
  %1115 = vmatprep.subr.mxu0 0.0
  %1116 = vmatpush1.msra.mxu0 0.0
  %1117 = vmatprep.subr.mxu0 0.0
  %1118 = vmatpush1.msra.mxu0 0.0
  %1119 = vmatprep.subr.mxu0 0.0
  %1120 = vmatpush1.msra.mxu0 0.0
  %1121 = vmatprep.subr.mxu0 0.0
  %1122 = vmatpush1.msra.mxu0 0.0
  %1123 = vmatprep.subr.mxu0 0.0
  %1124 = vmatpush1.msra.mxu0 0.0
  %1125 = vmatprep.mubr.f32.mxu0 0.0
  %1126 = vmatmul.mubr.f32.gmra.mrb[0].mxu0 %v1059
  %v1127 = vpop.f32.mrb[0].mxu0
  %v1128 = vadd.f32 %v1054, %v1127
  %v1129 = vpop.f32.mrb[0].mxu0
  %v1130 = vadd.f32 %v1056, %v1129
  %1131 = vdwg.mxu0
  %v1132 = vmul.f32 %v964, %v250
  %v1133 = vmul.f32 %v965, %v254
  %v1134 = vmul.f32 %v969, %v252
  %v1135 = vld [vmem:[%s261] sm:$0xff]
  %1139 = vrot.lane.b32.xlu0 %v1132, 126
  %v1140 = vpop.permute.xlu0 %1139
  %1141 = vrot.lane.b32.xlu0 %v1133, 126
  %v1142 = vpop.permute.xlu0 %1141
  %1143 = vrot.lane.b32.xlu0 %v1134, 126
  %v1144 = vpop.permute.xlu0 %1143
  %v1145 = vsel %vm272, %v1140, %v1142
  %v1146 = vsel %vm272, %v1142, %v1144
  %v1150 = vsel %vm91, %v1135, 0
  %1152 = vmatprep.subr.mxu0 %v1146
  %1153 = vmatpush1.msra.mxu0 %v1145
  %1154 = vmatprep.subr.mxu0 0.0
  %1155 = vmatpush1.msra.mxu0 0.0
  %1156 = vmatprep.subr.mxu0 0.0
  %1157 = vmatpush1.msra.mxu0 0.0
  %1158 = vmatprep.subr.mxu0 0.0
  %1159 = vmatpush1.msra.mxu0 0.0
  %1160 = vmatprep.subr.mxu0 0.0
  %1161 = vmatpush1.msra.mxu0 0.0
  %1162 = vmatprep.subr.mxu0 0.0
  %1163 = vmatpush1.msra.mxu0 0.0
  %1164 = vmatprep.subr.mxu0 0.0
  %1165 = vmatpush1.msra.mxu0 0.0
  %1166 = vmatprep.subr.mxu0 0.0
  %1167 = vmatpush1.msra.mxu0 0.0
  %1168 = vmatprep.subr.mxu0 0.0
  %1169 = vmatpush1.msra.mxu0 0.0
  %1170 = vmatprep.subr.mxu0 0.0
  %1171 = vmatpush1.msra.mxu0 0.0
  %1172 = vmatprep.subr.mxu0 0.0
  %1173 = vmatpush1.msra.mxu0 0.0
  %1174 = vmatprep.subr.mxu0 0.0
  %1175 = vmatpush1.msra.mxu0 0.0
  %1176 = vmatprep.subr.mxu0 0.0
  %1177 = vmatpush1.msra.mxu0 0.0
  %1178 = vmatprep.subr.mxu0 0.0
  %1179 = vmatpush1.msra.mxu0 0.0
  %1180 = vmatprep.subr.mxu0 0.0
  %1181 = vmatpush1.msra.mxu0 0.0
  %1182 = vmatprep.subr.mxu0 0.0
  %1183 = vmatpush1.msra.mxu0 0.0
  %1184 = vmatprep.subr.mxu0 0.0
  %1185 = vmatpush1.msra.mxu0 0.0
  %1186 = vmatprep.subr.mxu0 0.0
  %1187 = vmatpush1.msra.mxu0 0.0
  %1188 = vmatprep.subr.mxu0 0.0
  %1189 = vmatpush1.msra.mxu0 0.0
  %1190 = vmatprep.subr.mxu0 0.0
  %1191 = vmatpush1.msra.mxu0 0.0
  %1192 = vmatprep.subr.mxu0 0.0
  %1193 = vmatpush1.msra.mxu0 0.0
  %1194 = vmatprep.subr.mxu0 0.0
  %1195 = vmatpush1.msra.mxu0 0.0
  %1196 = vmatprep.subr.mxu0 0.0
  %1197 = vmatpush1.msra.mxu0 0.0
  %1198 = vmatprep.subr.mxu0 0.0
  %1199 = vmatpush1.msra.mxu0 0.0
  %1200 = vmatprep.subr.mxu0 0.0
  %1201 = vmatpush1.msra.mxu0 0.0
  %1202 = vmatprep.subr.mxu0 0.0
  %1203 = vmatpush1.msra.mxu0 0.0
  %1204 = vmatprep.subr.mxu0 0.0
  %1205 = vmatpush1.msra.mxu0 0.0
  %1206 = vmatprep.subr.mxu0 0.0
  %1207 = vmatpush1.msra.mxu0 0.0
  %1208 = vmatprep.subr.mxu0 0.0
  %1209 = vmatpush1.msra.mxu0 0.0
  %1210 = vmatprep.subr.mxu0 0.0
  %1211 = vmatpush1.msra.mxu0 0.0
  %1212 = vmatprep.subr.mxu0 0.0
  %1213 = vmatpush1.msra.mxu0 0.0
  %1214 = vmatprep.subr.mxu0 0.0
  %1215 = vmatpush1.msra.mxu0 0.0
  %1216 = vmatprep.mubr.f32.mxu0 0.0
  %1217 = vmatmul.mubr.f32.gmra.mrb[0].mxu0 %v1150
  %v1218 = vpop.f32.mrb[0].mxu0
  %v1219 = vadd.f32 0.0, %v1218
  %v1220 = vpop.f32.mrb[0].mxu0
  %v1221 = vadd.f32 0.0, %v1220
  %1222 = vdwg.mxu0
  %v1223 = vadd.f32 %v1128, %v1219
  %v1224 = vadd.f32 %v1130, %v1221
  %v1225 = vmul.f32 %v964, %v354
  %v1226 = vmul.f32 %v965, %v358
  %v1227 = vmul.f32 %v969, %v356
  %v1228 = vld [vmem:[%s365] sm:$0xff]
  %1232 = vrot.lane.b32.xlu0 %v1225, 112
  %v1233 = vpop.permute.xlu0 %1232
  %1234 = vrot.lane.b32.xlu0 %v1226, 112
  %v1235 = vpop.permute.xlu0 %1234
  %1236 = vrot.lane.b32.xlu0 %v1227, 112
  %v1237 = vpop.permute.xlu0 %1236
  %v1238 = vsel %vm376, %v1233, %v1235
  %v1239 = vsel %vm376, %v1235, %v1237
  %v1243 = vsel %vm91, %v1228, 0
  %1245 = vmatprep.subr.mxu0 %v1239
  %1246 = vmatpush1.msra.mxu0 %v1238
  %1247 = vmatprep.subr.mxu0 0.0
  %1248 = vmatpush1.msra.mxu0 0.0
  %1249 = vmatprep.subr.mxu0 0.0
  %1250 = vmatpush1.msra.mxu0 0.0
  %1251 = vmatprep.subr.mxu0 0.0
  %1252 = vmatpush1.msra.mxu0 0.0
  %1253 = vmatprep.subr.mxu0 0.0
  %1254 = vmatpush1.msra.mxu0 0.0
  %1255 = vmatprep.subr.mxu0 0.0
  %1256 = vmatpush1.msra.mxu0 0.0
  %1257 = vmatprep.subr.mxu0 0.0
  %1258 = vmatpush1.msra.mxu0 0.0
  %1259 = vmatprep.subr.mxu0 0.0
  %1260 = vmatpush1.msra.mxu0 0.0
  %1261 = vmatprep.subr.mxu0 0.0
  %1262 = vmatpush1.msra.mxu0 0.0
  %1263 = vmatprep.subr.mxu0 0.0
  %1264 = vmatpush1.msra.mxu0 0.0
  %1265 = vmatprep.subr.mxu0 0.0
  %1266 = vmatpush1.msra.mxu0 0.0
  %1267 = vmatprep.subr.mxu0 0.0
  %1268 = vmatpush1.msra.mxu0 0.0
  %1269 = vmatprep.subr.mxu0 0.0
  %1270 = vmatpush1.msra.mxu0 0.0
  %1271 = vmatprep.subr.mxu0 0.0
  %1272 = vmatpush1.msra.mxu0 0.0
  %1273 = vmatprep.subr.mxu0 0.0
  %1274 = vmatpush1.msra.mxu0 0.0
  %1275 = vmatprep.subr.mxu0 0.0
  %1276 = vmatpush1.msra.mxu0 0.0
  %1277 = vmatprep.subr.mxu0 0.0
  %1278 = vmatpush1.msra.mxu0 0.0
  %1279 = vmatprep.subr.mxu0 0.0
  %1280 = vmatpush1.msra.mxu0 0.0
  %1281 = vmatprep.subr.mxu0 0.0
  %1282 = vmatpush1.msra.mxu0 0.0
  %1283 = vmatprep.subr.mxu0 0.0
  %1284 = vmatpush1.msra.mxu0 0.0
  %1285 = vmatprep.subr.mxu0 0.0
  %1286 = vmatpush1.msra.mxu0 0.0
  %1287 = vmatprep.subr.mxu0 0.0
  %1288 = vmatpush1.msra.mxu0 0.0
  %1289 = vmatprep.subr.mxu0 0.0
  %1290 = vmatpush1.msra.mxu0 0.0
  %1291 = vmatprep.subr.mxu0 0.0
  %1292 = vmatpush1.msra.mxu0 0.0
  %1293 = vmatprep.subr.mxu0 0.0
  %1294 = vmatpush1.msra.mxu0 0.0
  %1295 = vmatprep.subr.mxu0 0.0
  %1296 = vmatpush1.msra.mxu0 0.0
  %1297 = vmatprep.subr.mxu0 0.0
  %1298 = vmatpush1.msra.mxu0 0.0
  %1299 = vmatprep.subr.mxu0 0.0
  %1300 = vmatpush1.msra.mxu0 0.0
  %1301 = vmatprep.subr.mxu0 0.0
  %1302 = vmatpush1.msra.mxu0 0.0
  %1303 = vmatprep.subr.mxu0 0.0
  %1304 = vmatpush1.msra.mxu0 0.0
  %1305 = vmatprep.subr.mxu0 0.0
  %1306 = vmatpush1.msra.mxu0 0.0
  %1307 = vmatprep.subr.mxu0 0.0
  %1308 = vmatpush1.msra.mxu0 0.0
  %1309 = vmatprep.mubr.f32.mxu0 0.0
  %1310 = vmatmul.mubr.f32.gmra.mrb[0].mxu0 %v1243
  %v1311 = vpop.f32.mrb[0].mxu0
  %v1312 = vadd.f32 0.0, %v1311
  %v1313 = vpop.f32.mrb[0].mxu0
  %v1314 = vadd.f32 0.0, %v1313
  %1315 = vdwg.mxu0
  %v1316 = vadd.f32 %v1223, %v1312
  %v1317 = vadd.f32 %v1224, %v1314
  %v1318 = vld [vmem:[%s457] sm:$0xff]
  %1319 = vrot.lane.b32.xlu0 %v964, 111
  %v1320 = vpop.permute.xlu0 %1319
  %1321 = vrot.lane.b32.xlu0 %v965, 111
  %v1322 = vpop.permute.xlu0 %1321
  %1323 = vrot.lane.b32.xlu0 %v969, 111
  %v1324 = vpop.permute.xlu0 %1323
  %v1325 = vsel %vm465, %v1320, %v1322
  %v1326 = vsel %vm465, %v1322, %v1324
  %v1330 = vsel %vm91, %v1318, 0
  %1332 = vmatprep.subr.mxu0 %v1326
  %1333 = vmatpush1.msra.mxu0 %v1325
  %1334 = vmatprep.subr.mxu0 0.0
  %1335 = vmatpush1.msra.mxu0 0.0
  %1336 = vmatprep.subr.mxu0 0.0
  %1337 = vmatpush1.msra.mxu0 0.0
  %1338 = vmatprep.subr.mxu0 0.0
  %1339 = vmatpush1.msra.mxu0 0.0
  %1340 = vmatprep.subr.mxu0 0.0
  %1341 = vmatpush1.msra.mxu0 0.0
  %1342 = vmatprep.subr.mxu0 0.0
  %1343 = vmatpush1.msra.mxu0 0.0
  %1344 = vmatprep.subr.mxu0 0.0
  %1345 = vmatpush1.msra.mxu0 0.0
  %1346 = vmatprep.subr.mxu0 0.0
  %1347 = vmatpush1.msra.mxu0 0.0
  %1348 = vmatprep.subr.mxu0 0.0
  %1349 = vmatpush1.msra.mxu0 0.0
  %1350 = vmatprep.subr.mxu0 0.0
  %1351 = vmatpush1.msra.mxu0 0.0
  %1352 = vmatprep.subr.mxu0 0.0
  %1353 = vmatpush1.msra.mxu0 0.0
  %1354 = vmatprep.subr.mxu0 0.0
  %1355 = vmatpush1.msra.mxu0 0.0
  %1356 = vmatprep.subr.mxu0 0.0
  %1357 = vmatpush1.msra.mxu0 0.0
  %1358 = vmatprep.subr.mxu0 0.0
  %1359 = vmatpush1.msra.mxu0 0.0
  %1360 = vmatprep.subr.mxu0 0.0
  %1361 = vmatpush1.msra.mxu0 0.0
  %1362 = vmatprep.subr.mxu0 0.0
  %1363 = vmatpush1.msra.mxu0 0.0
  %1364 = vmatprep.subr.mxu0 0.0
  %1365 = vmatpush1.msra.mxu0 0.0
  %1366 = vmatprep.subr.mxu0 0.0
  %1367 = vmatpush1.msra.mxu0 0.0
  %1368 = vmatprep.subr.mxu0 0.0
  %1369 = vmatpush1.msra.mxu0 0.0
  %1370 = vmatprep.subr.mxu0 0.0
  %1371 = vmatpush1.msra.mxu0 0.0
  %1372 = vmatprep.subr.mxu0 0.0
  %1373 = vmatpush1.msra.mxu0 0.0
  %1374 = vmatprep.subr.mxu0 0.0
  %1375 = vmatpush1.msra.mxu0 0.0
  %1376 = vmatprep.subr.mxu0 0.0
  %1377 = vmatpush1.msra.mxu0 0.0
  %1378 = vmatprep.subr.mxu0 0.0
  %1379 = vmatpush1.msra.mxu0 0.0
  %1380 = vmatprep.subr.mxu0 0.0
  %1381 = vmatpush1.msra.mxu0 0.0
  %1382 = vmatprep.subr.mxu0 0.0
  %1383 = vmatpush1.msra.mxu0 0.0
  %1384 = vmatprep.subr.mxu0 0.0
  %1385 = vmatpush1.msra.mxu0 0.0
  %1386 = vmatprep.subr.mxu0 0.0
  %1387 = vmatpush1.msra.mxu0 0.0
  %1388 = vmatprep.subr.mxu0 0.0
  %1389 = vmatpush1.msra.mxu0 0.0
  %1390 = vmatprep.subr.mxu0 0.0
  %1391 = vmatpush1.msra.mxu0 0.0
  %1392 = vmatprep.subr.mxu0 0.0
  %1393 = vmatpush1.msra.mxu0 0.0
  %1394 = vmatprep.subr.mxu0 0.0
  %1395 = vmatpush1.msra.mxu0 0.0
  %1396 = vmatprep.mubr.f32.mxu0 0.0
  %1397 = vmatmul.mubr.f32.gmra.mrb[0].mxu0 %v1330
  %v1398 = vpop.f32.mrb[0].mxu0
  %v1399 = vadd.f32 0.0, %v1398
  %v1400 = vpop.f32.mrb[0].mxu0
  %v1401 = vadd.f32 0.0, %v1400
  %1402 = vdwg.mxu0
  %v1403 = vadd.f32 %v1316, %v1399
  %v1404 = vadd.f32 %v1317, %v1401
  %v1405 = vmul.f32 %v964, %v547
  %v1406 = vmul.f32 %v965, %v551
  %v1407 = vmul.f32 %v969, %v549
  %v1408 = vld [vmem:[%s558] sm:$0xff]
  %1412 = vrot.lane.b32.xlu0 %v1405, 110
  %v1413 = vpop.permute.xlu0 %1412
  %1414 = vrot.lane.b32.xlu0 %v1406, 110
  %v1415 = vpop.permute.xlu0 %1414
  %1416 = vrot.lane.b32.xlu0 %v1407, 110
  %v1417 = vpop.permute.xlu0 %1416
  %v1418 = vsel %vm569, %v1413, %v1415
  %v1419 = vsel %vm569, %v1415, %v1417
  %v1423 = vsel %vm91, %v1408, 0
  %1425 = vmatprep.subr.mxu0 %v1419
  %1426 = vmatpush1.msra.mxu0 %v1418
  %1427 = vmatprep.subr.mxu0 0.0
  %1428 = vmatpush1.msra.mxu0 0.0
  %1429 = vmatprep.subr.mxu0 0.0
  %1430 = vmatpush1.msra.mxu0 0.0
  %1431 = vmatprep.subr.mxu0 0.0
  %1432 = vmatpush1.msra.mxu0 0.0
  %1433 = vmatprep.subr.mxu0 0.0
  %1434 = vmatpush1.msra.mxu0 0.0
  %1435 = vmatprep.subr.mxu0 0.0
  %1436 = vmatpush1.msra.mxu0 0.0
  %1437 = vmatprep.subr.mxu0 0.0
  %1438 = vmatpush1.msra.mxu0 0.0
  %1439 = vmatprep.subr.mxu0 0.0
  %1440 = vmatpush1.msra.mxu0 0.0
  %1441 = vmatprep.subr.mxu0 0.0
  %1442 = vmatpush1.msra.mxu0 0.0
  %1443 = vmatprep.subr.mxu0 0.0
  %1444 = vmatpush1.msra.mxu0 0.0
  %1445 = vmatprep.subr.mxu0 0.0
  %1446 = vmatpush1.msra.mxu0 0.0
  %1447 = vmatprep.subr.mxu0 0.0
  %1448 = vmatpush1.msra.mxu0 0.0
  %1449 = vmatprep.subr.mxu0 0.0
  %1450 = vmatpush1.msra.mxu0 0.0
  %1451 = vmatprep.subr.mxu0 0.0
  %1452 = vmatpush1.msra.mxu0 0.0
  %1453 = vmatprep.subr.mxu0 0.0
  %1454 = vmatpush1.msra.mxu0 0.0
  %1455 = vmatprep.subr.mxu0 0.0
  %1456 = vmatpush1.msra.mxu0 0.0
  %1457 = vmatprep.subr.mxu0 0.0
  %1458 = vmatpush1.msra.mxu0 0.0
  %1459 = vmatprep.subr.mxu0 0.0
  %1460 = vmatpush1.msra.mxu0 0.0
  %1461 = vmatprep.subr.mxu0 0.0
  %1462 = vmatpush1.msra.mxu0 0.0
  %1463 = vmatprep.subr.mxu0 0.0
  %1464 = vmatpush1.msra.mxu0 0.0
  %1465 = vmatprep.subr.mxu0 0.0
  %1466 = vmatpush1.msra.mxu0 0.0
  %1467 = vmatprep.subr.mxu0 0.0
  %1468 = vmatpush1.msra.mxu0 0.0
  %1469 = vmatprep.subr.mxu0 0.0
  %1470 = vmatpush1.msra.mxu0 0.0
  %1471 = vmatprep.subr.mxu0 0.0
  %1472 = vmatpush1.msra.mxu0 0.0
  %1473 = vmatprep.subr.mxu0 0.0
  %1474 = vmatpush1.msra.mxu0 0.0
  %1475 = vmatprep.subr.mxu0 0.0
  %1476 = vmatpush1.msra.mxu0 0.0
  %1477 = vmatprep.subr.mxu0 0.0
  %1478 = vmatpush1.msra.mxu0 0.0
  %1479 = vmatprep.subr.mxu0 0.0
  %1480 = vmatpush1.msra.mxu0 0.0
  %1481 = vmatprep.subr.mxu0 0.0
  %1482 = vmatpush1.msra.mxu0 0.0
  %1483 = vmatprep.subr.mxu0 0.0
  %1484 = vmatpush1.msra.mxu0 0.0
  %1485 = vmatprep.subr.mxu0 0.0
  %1486 = vmatpush1.msra.mxu0 0.0
  %1487 = vmatprep.subr.mxu0 0.0
  %1488 = vmatpush1.msra.mxu0 0.0
  %1489 = vmatprep.mubr.f32.mxu0 0.0
  %1490 = vmatmul.mubr.f32.gmra.mrb[0].mxu0 %v1423
  %v1491 = vpop.f32.mrb[0].mxu0
  %v1492 = vadd.f32 0.0, %v1491
  %v1493 = vpop.f32.mrb[0].mxu0
  %v1494 = vadd.f32 0.0, %v1493
  %1495 = vdwg.mxu0
  %v1496 = vadd.f32 %v1403, %v1492
  %v1497 = vadd.f32 %v1404, %v1494
  %v1498 = vmul.f32 %v964, %v651
  %v1499 = vmul.f32 %v965, %v655
  %v1500 = vmul.f32 %v969, %v653
  %v1501 = vld [vmem:[%s662] sm:$0xff]
  %1505 = vrot.lane.b32.xlu0 %v1498, 96
  %v1506 = vpop.permute.xlu0 %1505
  %1507 = vrot.lane.b32.xlu0 %v1499, 96
  %v1508 = vpop.permute.xlu0 %1507
  %1509 = vrot.lane.b32.xlu0 %v1500, 96
  %v1510 = vpop.permute.xlu0 %1509
  %v1511 = vsel %vm673, %v1506, %v1508
  %v1512 = vsel %vm673, %v1508, %v1510
  %v1516 = vsel %vm91, %v1501, 0
  %1518 = vmatprep.subr.mxu0 %v1512
  %1519 = vmatpush1.msra.mxu0 %v1511
  %1520 = vmatprep.subr.mxu0 0.0
  %1521 = vmatpush1.msra.mxu0 0.0
  %1522 = vmatprep.subr.mxu0 0.0
  %1523 = vmatpush1.msra.mxu0 0.0
  %1524 = vmatprep.subr.mxu0 0.0
  %1525 = vmatpush1.msra.mxu0 0.0
  %1526 = vmatprep.subr.mxu0 0.0
  %1527 = vmatpush1.msra.mxu0 0.0
  %1528 = vmatprep.subr.mxu0 0.0
  %1529 = vmatpush1.msra.mxu0 0.0
  %1530 = vmatprep.subr.mxu0 0.0
  %1531 = vmatpush1.msra.mxu0 0.0
  %1532 = vmatprep.subr.mxu0 0.0
  %1533 = vmatpush1.msra.mxu0 0.0
  %1534 = vmatprep.subr.mxu0 0.0
  %1535 = vmatpush1.msra.mxu0 0.0
  %1536 = vmatprep.subr.mxu0 0.0
  %1537 = vmatpush1.msra.mxu0 0.0
  %1538 = vmatprep.subr.mxu0 0.0
  %1539 = vmatpush1.msra.mxu0 0.0
  %1540 = vmatprep.subr.mxu0 0.0
  %1541 = vmatpush1.msra.mxu0 0.0
  %1542 = vmatprep.subr.mxu0 0.0
  %1543 = vmatpush1.msra.mxu0 0.0
  %1544 = vmatprep.subr.mxu0 0.0
  %1545 = vmatpush1.msra.mxu0 0.0
  %1546 = vmatprep.subr.mxu0 0.0
  %1547 = vmatpush1.msra.mxu0 0.0
  %1548 = vmatprep.subr.mxu0 0.0
  %1549 = vmatpush1.msra.mxu0 0.0
  %1550 = vmatprep.subr.mxu0 0.0
  %1551 = vmatpush1.msra.mxu0 0.0
  %1552 = vmatprep.subr.mxu0 0.0
  %1553 = vmatpush1.msra.mxu0 0.0
  %1554 = vmatprep.subr.mxu0 0.0
  %1555 = vmatpush1.msra.mxu0 0.0
  %1556 = vmatprep.subr.mxu0 0.0
  %1557 = vmatpush1.msra.mxu0 0.0
  %1558 = vmatprep.subr.mxu0 0.0
  %1559 = vmatpush1.msra.mxu0 0.0
  %1560 = vmatprep.subr.mxu0 0.0
  %1561 = vmatpush1.msra.mxu0 0.0
  %1562 = vmatprep.subr.mxu0 0.0
  %1563 = vmatpush1.msra.mxu0 0.0
  %1564 = vmatprep.subr.mxu0 0.0
  %1565 = vmatpush1.msra.mxu0 0.0
  %1566 = vmatprep.subr.mxu0 0.0
  %1567 = vmatpush1.msra.mxu0 0.0
  %1568 = vmatprep.subr.mxu0 0.0
  %1569 = vmatpush1.msra.mxu0 0.0
  %1570 = vmatprep.subr.mxu0 0.0
  %1571 = vmatpush1.msra.mxu0 0.0
  %1572 = vmatprep.subr.mxu0 0.0
  %1573 = vmatpush1.msra.mxu0 0.0
  %1574 = vmatprep.subr.mxu0 0.0
  %1575 = vmatpush1.msra.mxu0 0.0
  %1576 = vmatprep.subr.mxu0 0.0
  %1577 = vmatpush1.msra.mxu0 0.0
  %1578 = vmatprep.subr.mxu0 0.0
  %1579 = vmatpush1.msra.mxu0 0.0
  %1580 = vmatprep.subr.mxu0 0.0
  %1581 = vmatpush1.msra.mxu0 0.0
  %1582 = vmatprep.mubr.f32.mxu0 0.0
  %1583 = vmatmul.mubr.f32.gmra.mrb[0].mxu0 %v1516
  %v1584 = vpop.f32.mrb[0].mxu0
  %v1585 = vadd.f32 0.0, %v1584
  %v1586 = vpop.f32.mrb[0].mxu0
  %v1587 = vadd.f32 0.0, %v1586
  %1588 = vdwg.mxu0
  %v1589 = vadd.f32 %v1496, %v1585
  %v1590 = vadd.f32 %v1497, %v1587
  %v1591 = vld [vmem:[%s754] sm:$0xff]
  %1592 = vrot.lane.b32.xlu0 %v964, 95
  %v1593 = vpop.permute.xlu0 %1592
  %1594 = vrot.lane.b32.xlu0 %v965, 95
  %v1595 = vpop.permute.xlu0 %1594
  %1596 = vrot.lane.b32.xlu0 %v969, 95
  %v1597 = vpop.permute.xlu0 %1596
  %v1598 = vsel %vm762, %v1593, %v1595
  %v1599 = vsel %vm762, %v1595, %v1597
  %v1603 = vsel %vm91, %v1591, 0
  %1605 = vmatprep.subr.mxu0 %v1599
  %1606 = vmatpush1.msra.mxu0 %v1598
  %1607 = vmatprep.subr.mxu0 0.0
  %1608 = vmatpush1.msra.mxu0 0.0
  %1609 = vmatprep.subr.mxu0 0.0
  %1610 = vmatpush1.msra.mxu0 0.0
  %1611 = vmatprep.subr.mxu0 0.0
  %1612 = vmatpush1.msra.mxu0 0.0
  %1613 = vmatprep.subr.mxu0 0.0
  %1614 = vmatpush1.msra.mxu0 0.0
  %1615 = vmatprep.subr.mxu0 0.0
  %1616 = vmatpush1.msra.mxu0 0.0
  %1617 = vmatprep.subr.mxu0 0.0
  %1618 = vmatpush1.msra.mxu0 0.0
  %1619 = vmatprep.subr.mxu0 0.0
  %1620 = vmatpush1.msra.mxu0 0.0
  %1621 = vmatprep.subr.mxu0 0.0
  %1622 = vmatpush1.msra.mxu0 0.0
  %1623 = vmatprep.subr.mxu0 0.0
  %1624 = vmatpush1.msra.mxu0 0.0
  %1625 = vmatprep.subr.mxu0 0.0
  %1626 = vmatpush1.msra.mxu0 0.0
  %1627 = vmatprep.subr.mxu0 0.0
  %1628 = vmatpush1.msra.mxu0 0.0
  %1629 = vmatprep.subr.mxu0 0.0
  %1630 = vmatpush1.msra.mxu0 0.0
  %1631 = vmatprep.subr.mxu0 0.0
  %1632 = vmatpush1.msra.mxu0 0.0
  %1633 = vmatprep.subr.mxu0 0.0
  %1634 = vmatpush1.msra.mxu0 0.0
  %1635 = vmatprep.subr.mxu0 0.0
  %1636 = vmatpush1.msra.mxu0 0.0
  %1637 = vmatprep.subr.mxu0 0.0
  %1638 = vmatpush1.msra.mxu0 0.0
  %1639 = vmatprep.subr.mxu0 0.0
  %1640 = vmatpush1.msra.mxu0 0.0
  %1641 = vmatprep.subr.mxu0 0.0
  %1642 = vmatpush1.msra.mxu0 0.0
  %1643 = vmatprep.subr.mxu0 0.0
  %1644 = vmatpush1.msra.mxu0 0.0
  %1645 = vmatprep.subr.mxu0 0.0
  %1646 = vmatpush1.msra.mxu0 0.0
  %1647 = vmatprep.subr.mxu0 0.0
  %1648 = vmatpush1.msra.mxu0 0.0
  %1649 = vmatprep.subr.mxu0 0.0
  %1650 = vmatpush1.msra.mxu0 0.0
  %1651 = vmatprep.subr.mxu0 0.0
  %1652 = vmatpush1.msra.mxu0 0.0
  %1653 = vmatprep.subr.mxu0 0.0
  %1654 = vmatpush1.msra.mxu0 0.0
  %1655 = vmatprep.subr.mxu0 0.0
  %1656 = vmatpush1.msra.mxu0 0.0
  %1657 = vmatprep.subr.mxu0 0.0
  %1658 = vmatpush1.msra.mxu0 0.0
  %1659 = vmatprep.subr.mxu0 0.0
  %1660 = vmatpush1.msra.mxu0 0.0
  %1661 = vmatprep.subr.mxu0 0.0
  %1662 = vmatpush1.msra.mxu0 0.0
  %1663 = vmatprep.subr.mxu0 0.0
  %1664 = vmatpush1.msra.mxu0 0.0
  %1665 = vmatprep.subr.mxu0 0.0
  %1666 = vmatpush1.msra.mxu0 0.0
  %1667 = vmatprep.subr.mxu0 0.0
  %1668 = vmatpush1.msra.mxu0 0.0
  %1669 = vmatprep.mubr.f32.mxu0 0.0
  %1670 = vmatmul.mubr.f32.gmra.mrb[0].mxu0 %v1603
  %v1671 = vpop.f32.mrb[0].mxu0
  %v1672 = vadd.f32 0.0, %v1671
  %v1673 = vpop.f32.mrb[0].mxu0
  %v1674 = vadd.f32 0.0, %v1673
  %1675 = vdwg.mxu0
  %v1676 = vadd.f32 %v1589, %v1672
  %v1677 = vadd.f32 %v1590, %v1674
  %v1678 = vmul.f32 %v964, %v844
  %v1679 = vmul.f32 %v965, %v848
  %v1680 = vmul.f32 %v969, %v846
  %v1681 = vld [vmem:[%s855] sm:$0xff]
  %1685 = vrot.lane.b32.xlu0 %v1678, 94
  %v1686 = vpop.permute.xlu0 %1685
  %1687 = vrot.lane.b32.xlu0 %v1679, 94
  %v1688 = vpop.permute.xlu0 %1687
  %1689 = vrot.lane.b32.xlu0 %v1680, 94
  %v1690 = vpop.permute.xlu0 %1689
  %v1691 = vsel %vm866, %v1686, %v1688
  %v1692 = vsel %vm866, %v1688, %v1690
  %v1696 = vsel %vm91, %v1681, 0
  %1698 = vmatprep.subr.mxu0 %v1692
  %1699 = vmatpush1.msra.mxu0 %v1691
  %1700 = vmatprep.subr.mxu0 0.0
  %1701 = vmatpush1.msra.mxu0 0.0
  %1702 = vmatprep.subr.mxu0 0.0
  %1703 = vmatpush1.msra.mxu0 0.0
  %1704 = vmatprep.subr.mxu0 0.0
  %1705 = vmatpush1.msra.mxu0 0.0
  %1706 = vmatprep.subr.mxu0 0.0
  %1707 = vmatpush1.msra.mxu0 0.0
  %1708 = vmatprep.subr.mxu0 0.0
  %1709 = vmatpush1.msra.mxu0 0.0
  %1710 = vmatprep.subr.mxu0 0.0
  %1711 = vmatpush1.msra.mxu0 0.0
  %1712 = vmatprep.subr.mxu0 0.0
  %1713 = vmatpush1.msra.mxu0 0.0
  %1714 = vmatprep.subr.mxu0 0.0
  %1715 = vmatpush1.msra.mxu0 0.0
  %1716 = vmatprep.subr.mxu0 0.0
  %1717 = vmatpush1.msra.mxu0 0.0
  %1718 = vmatprep.subr.mxu0 0.0
  %1719 = vmatpush1.msra.mxu0 0.0
  %1720 = vmatprep.subr.mxu0 0.0
  %1721 = vmatpush1.msra.mxu0 0.0
  %1722 = vmatprep.subr.mxu0 0.0
  %1723 = vmatpush1.msra.mxu0 0.0
  %1724 = vmatprep.subr.mxu0 0.0
  %1725 = vmatpush1.msra.mxu0 0.0
  %1726 = vmatprep.subr.mxu0 0.0
  %1727 = vmatpush1.msra.mxu0 0.0
  %1728 = vmatprep.subr.mxu0 0.0
  %1729 = vmatpush1.msra.mxu0 0.0
  %1730 = vmatprep.subr.mxu0 0.0
  %1731 = vmatpush1.msra.mxu0 0.0
  %1732 = vmatprep.subr.mxu0 0.0
  %1733 = vmatpush1.msra.mxu0 0.0
  %1734 = vmatprep.subr.mxu0 0.0
  %1735 = vmatpush1.msra.mxu0 0.0
  %1736 = vmatprep.subr.mxu0 0.0
  %1737 = vmatpush1.msra.mxu0 0.0
  %1738 = vmatprep.subr.mxu0 0.0
  %1739 = vmatpush1.msra.mxu0 0.0
  %1740 = vmatprep.subr.mxu0 0.0
  %1741 = vmatpush1.msra.mxu0 0.0
  %1742 = vmatprep.subr.mxu0 0.0
  %1743 = vmatpush1.msra.mxu0 0.0
  %1744 = vmatprep.subr.mxu0 0.0
  %1745 = vmatpush1.msra.mxu0 0.0
  %1746 = vmatprep.subr.mxu0 0.0
  %1747 = vmatpush1.msra.mxu0 0.0
  %1748 = vmatprep.subr.mxu0 0.0
  %1749 = vmatpush1.msra.mxu0 0.0
  %1750 = vmatprep.subr.mxu0 0.0
  %1751 = vmatpush1.msra.mxu0 0.0
  %1752 = vmatprep.subr.mxu0 0.0
  %1753 = vmatpush1.msra.mxu0 0.0
  %1754 = vmatprep.subr.mxu0 0.0
  %1755 = vmatpush1.msra.mxu0 0.0
  %1756 = vmatprep.subr.mxu0 0.0
  %1757 = vmatpush1.msra.mxu0 0.0
  %1758 = vmatprep.subr.mxu0 0.0
  %1759 = vmatpush1.msra.mxu0 0.0
  %1760 = vmatprep.subr.mxu0 0.0
  %1761 = vmatpush1.msra.mxu0 0.0
  %1762 = vmatprep.mubr.f32.mxu0 0.0
  %1763 = vmatmul.mubr.f32.gmra.mrb[0].mxu0 %v1696
  %v1764 = vpop.f32.mrb[0].mxu0
  %v1765 = vadd.f32 0.0, %v1764
  %v1766 = vpop.f32.mrb[0].mxu0
  %v1767 = vadd.f32 0.0, %v1766
  %1768 = vdwg.mxu0
  %v1769 = vadd.f32 %v1676, %v1765
  %v1770 = vadd.f32 %v1677, %v1767
  %v1771 = vld [vmem:[%s3] sm:$0xff]
  %v1772 = vld [vmem:[%s4] sm:$0xff]
  %v1773 = vadd.f32 %v945, %v946
  %1774 = vadd.xlane.f32.xlu0 %v1773
  %v1775 = vpop.xlane.xlu0 %1774
  %v1776 = vadd.f32 %v1775, 0.0
  %v1777 = vadd.f32 %v1769, %v1770
  %1778 = vadd.xlane.f32.xlu0 %v1777
  %v1779 = vpop.xlane.xlu0 %1778
  %v1780 = vadd.f32 %v1776, %v1779
  %v1781 = vmul.f32 %v1780, 0.001953125
  %v1782 = vsub.f32 %v945, %v1781
  %v1783 = vsub.f32 %v946, %v1781
  %v1784 = vmul.f32 %v1782, %v1782
  %v1785 = vmul.f32 %v1783, %v1783
  %v1786 = vadd.f32 %v1784, %v1785
  %1787 = vadd.xlane.f32.xlu0 %v1786
  %v1788 = vpop.xlane.xlu0 %1787
  %v1789 = vadd.f32 %v1788, 0.0
  %v1790 = vsub.f32 %v1769, %v1781
  %v1791 = vsub.f32 %v1770, %v1781
  %v1792 = vmul.f32 %v1790, %v1790
  %v1793 = vmul.f32 %v1791, %v1791
  %v1794 = vadd.f32 %v1792, %v1793
  %1795 = vadd.xlane.f32.xlu0 %v1794
  %v1796 = vpop.xlane.xlu0 %1795
  %v1797 = vadd.f32 %v1789, %v1796
  %v1798 = vmul.f32 %v1797, 0.001953125
  %v1799 = vadd.f32 %v1798, 1e-05
  %v1800 = vrsqrt.pop %v1799
  %v1801 = vmul.f32 %v1771, %v1800
  %v1802 = vmul.f32 %v1781, %v1801
  %v1803 = vsub.f32 %v1772, %v1802
  %1805 = vset.pattern.permute.xlu0 0
  %1806 = vperm.xlu0 %1805, %v1801
  %v1807 = vpop.permute.xlu0 %1806
  %v1809 = vmul.f32 %v945, %v1807
  %v1810 = vmul.f32 %v946, %v1807
  %1812 = vset.pattern.permute.xlu0 0
  %1813 = vperm.xlu0 %1812, %v1803
  %v1814 = vpop.permute.xlu0 %1813
  %v1816 = vadd.f32 %v1809, %v1814
  %v1817 = vadd.f32 %v1810, %v1814
  %v1818 = vmax.f32 %v1816, 0.0
  %v1819 = vmax.f32 %v1817, 0.0
  %v1820 = vmul.f32 %v1769, %v1807
  %v1821 = vmul.f32 %v1770, %v1807
  %v1822 = vadd.f32 %v1820, %v1814
  %v1823 = vadd.f32 %v1821, %v1814
  %v1824 = vmax.f32 %v1822, 0.0
  %v1825 = vmax.f32 %v1823, 0.0
  %1828 = vrot.lane.b32.xlu0 %v1818, 17
  %v1829 = vpop.permute.xlu0 %1828
  %1830 = vrot.lane.b32.xlu0 %v1819, 17
  %v1831 = vpop.permute.xlu0 %1830
  %v1832 = vsel %vm32, %v1829, %v1831
  %vm1836 = vcmask 1047688
  %1837 = vst.msk [vmem:[#allocation2] sm:$0xff] %vm1836, %v1829
  %1838 = vst [vmem:[#allocation2 + $0x8] sm:$0xff] %v1832
  %1839 = vst.msk [vmem:[#allocation2 + $0x10] sm:$0xff] %vm32, %v1831
  %v1840 = vld [vmem:[#allocation2] sm:$0xff]
  %v1841 = vld [vmem:[#allocation2 + $0x8] sm:$0xff]
  %v1842 = vmul.f32 %v1840, %v64
  %v1843 = vmul.f32 %v1841, %v68
  %v1844 = vld [vmem:[%s2] sm:$0xff]
  %v1845 = vld [vmem:[#allocation2 + $0x10] sm:$0xff]
  %s1846 = scalar_lea.vmem %s2, 8
  %v1847 = vld [vmem:[%s1846] sm:$0xff]
  %1851 = vrot.lane.b32.xlu0 %v1840, 127
  %v1852 = vpop.permute.xlu0 %1851
  %1853 = vrot.lane.b32.xlu0 %v1841, 127
  %v1854 = vpop.permute.xlu0 %1853
  %1855 = vrot.lane.b32.xlu0 %v1845, 127
  %v1856 = vpop.permute.xlu0 %1855
  %v1857 = vsel %vm86, %v1852, %v1854
  %v1858 = vsel %vm86, %v1854, %v1856
  %v1862 = vsel %vm91, %v1847, 0
  %1864 = vmatprep.subr.mxu0 %v1858
  %1865 = vmatpush1.msra.mxu0 %v1857
  %1866 = vmatprep.subr.mxu0 0.0
  %1867 = vmatpush1.msra.mxu0 0.0
  %1868 = vmatprep.subr.mxu0 0.0
  %1869 = vmatpush1.msra.mxu0 0.0
  %1870 = vmatprep.subr.mxu0 0.0
  %1871 = vmatpush1.msra.mxu0 0.0
  %1872 = vmatprep.subr.mxu0 0.0
  %1873 = vmatpush1.msra.mxu0 0.0
  %1874 = vmatprep.subr.mxu0 0.0
  %1875 = vmatpush1.msra.mxu0 0.0
  %1876 = vmatprep.subr.mxu0 0.0
  %1877 = vmatpush1.msra.mxu0 0.0
  %1878 = vmatprep.subr.mxu0 0.0
  %1879 = vmatpush1.msra.mxu0 0.0
  %1880 = vmatprep.subr.mxu0 0.0
  %1881 = vmatpush1.msra.mxu0 0.0
  %1882 = vmatprep.subr.mxu0 0.0
  %1883 = vmatpush1.msra.mxu0 0.0
  %1884 = vmatprep.subr.mxu0 0.0
  %1885 = vmatpush1.msra.mxu0 0.0
  %1886 = vmatprep.subr.mxu0 0.0
  %1887 = vmatpush1.msra.mxu0 0.0
  %1888 = vmatprep.subr.mxu0 0.0
  %1889 = vmatpush1.msra.mxu0 0.0
  %1890 = vmatprep.subr.mxu0 0.0
  %1891 = vmatpush1.msra.mxu0 0.0
  %1892 = vmatprep.subr.mxu0 0.0
  %1893 = vmatpush1.msra.mxu0 0.0
  %1894 = vmatprep.subr.mxu0 0.0
  %1895 = vmatpush1.msra.mxu0 0.0
  %1896 = vmatprep.subr.mxu0 0.0
  %1897 = vmatpush1.msra.mxu0 0.0
  %1898 = vmatprep.subr.mxu0 0.0
  %1899 = vmatpush1.msra.mxu0 0.0
  %1900 = vmatprep.subr.mxu0 0.0
  %1901 = vmatpush1.msra.mxu0 0.0
  %1902 = vmatprep.subr.mxu0 0.0
  %1903 = vmatpush1.msra.mxu0 0.0
  %1904 = vmatprep.subr.mxu0 0.0
  %1905 = vmatpush1.msra.mxu0 0.0
  %1906 = vmatprep.subr.mxu0 0.0
  %1907 = vmatpush1.msra.mxu0 0.0
  %1908 = vmatprep.subr.mxu0 0.0
  %1909 = vmatpush1.msra.mxu0 0.0
  %1910 = vmatprep.subr.mxu0 0.0
  %1911 = vmatpush1.msra.mxu0 0.0
  %1912 = vmatprep.subr.mxu0 0.0
  %1913 = vmatpush1.msra.mxu0 0.0
  %1914 = vmatprep.subr.mxu0 0.0
  %1915 = vmatpush1.msra.mxu0 0.0
  %1916 = vmatprep.subr.mxu0 0.0
  %1917 = vmatpush1.msra.mxu0 0.0
  %1918 = vmatprep.subr.mxu0 0.0
  %1919 = vmatpush1.msra.mxu0 0.0
  %1920 = vmatprep.subr.mxu0 0.0
  %1921 = vmatpush1.msra.mxu0 0.0
  %1922 = vmatprep.subr.mxu0 0.0
  %1923 = vmatpush1.msra.mxu0 0.0
  %1924 = vmatprep.subr.mxu0 0.0
  %1925 = vmatpush1.msra.mxu0 0.0
  %1926 = vmatprep.subr.mxu0 0.0
  %1927 = vmatpush1.msra.mxu0 0.0
  %1928 = vmatprep.mubr.f32.mxu0 0.0
  %1929 = vmatmul.mubr.f32.gmra.mrb[0].mxu0 %v1862
  %v1930 = vpop.f32.mrb[0].mxu0
  %v1931 = vadd.f32 0.0, %v1930
  %v1932 = vpop.f32.mrb[0].mxu0
  %v1933 = vadd.f32 0.0, %v1932
  %1934 = vdwg.mxu0
  %v1936 = vsel %vm91, %v1844, 0
  %1938 = vmatprep.subr.mxu0 %v1843
  %1939 = vmatpush1.msra.mxu0 %v1842
  %1940 = vmatprep.subr.mxu0 0.0
  %1941 = vmatpush1.msra.mxu0 0.0
  %1942 = vmatprep.subr.mxu0 0.0
  %1943 = vmatpush1.msra.mxu0 0.0
  %1944 = vmatprep.subr.mxu0 0.0
  %1945 = vmatpush1.msra.mxu0 0.0
  %1946 = vmatprep.subr.mxu0 0.0
  %1947 = vmatpush1.msra.mxu0 0.0
  %1948 = vmatprep.subr.mxu0 0.0
  %1949 = vmatpush1.msra.mxu0 0.0
  %1950 = vmatprep.subr.mxu0 0.0
  %1951 = vmatpush1.msra.mxu0 0.0
  %1952 = vmatprep.subr.mxu0 0.0
  %1953 = vmatpush1.msra.mxu0 0.0
  %1954 = vmatprep.subr.mxu0 0.0
  %1955 = vmatpush1.msra.mxu0 0.0
  %1956 = vmatprep.subr.mxu0 0.0
  %1957 = vmatpush1.msra.mxu0 0.0
  %1958 = vmatprep.subr.mxu0 0.0
  %1959 = vmatpush1.msra.mxu0 0.0
  %1960 = vmatprep.subr.mxu0 0.0
  %1961 = vmatpush1.msra.mxu0 0.0
  %1962 = vmatprep.subr.mxu0 0.0
  %1963 = vmatpush1.msra.mxu0 0.0
  %1964 = vmatprep.subr.mxu0 0.0
  %1965 = vmatpush1.msra.mxu0 0.0
  %1966 = vmatprep.subr.mxu0 0.0
  %1967 = vmatpush1.msra.mxu0 0.0
  %1968 = vmatprep.subr.mxu0 0.0
  %1969 = vmatpush1.msra.mxu0 0.0
  %1970 = vmatprep.subr.mxu0 0.0
  %1971 = vmatpush1.msra.mxu0 0.0
  %1972 = vmatprep.subr.mxu0 0.0
  %1973 = vmatpush1.msra.mxu0 0.0
  %1974 = vmatprep.subr.mxu0 0.0
  %1975 = vmatpush1.msra.mxu0 0.0
  %1976 = vmatprep.subr.mxu0 0.0
  %1977 = vmatpush1.msra.mxu0 0.0
  %1978 = vmatprep.subr.mxu0 0.0
  %1979 = vmatpush1.msra.mxu0 0.0
  %1980 = vmatprep.subr.mxu0 0.0
  %1981 = vmatpush1.msra.mxu0 0.0
  %1982 = vmatprep.subr.mxu0 0.0
  %1983 = vmatpush1.msra.mxu0 0.0
  %1984 = vmatprep.subr.mxu0 0.0
  %1985 = vmatpush1.msra.mxu0 0.0
  %1986 = vmatprep.subr.mxu0 0.0
  %1987 = vmatpush1.msra.mxu0 0.0
  %1988 = vmatprep.subr.mxu0 0.0
  %1989 = vmatpush1.msra.mxu0 0.0
  %1990 = vmatprep.subr.mxu0 0.0
  %1991 = vmatpush1.msra.mxu0 0.0
  %1992 = vmatprep.subr.mxu0 0.0
  %1993 = vmatpush1.msra.mxu0 0.0
  %1994 = vmatprep.subr.mxu0 0.0
  %1995 = vmatpush1.msra.mxu0 0.0
  %1996 = vmatprep.subr.mxu0 0.0
  %1997 = vmatpush1.msra.mxu0 0.0
  %1998 = vmatprep.subr.mxu0 0.0
  %1999 = vmatpush1.msra.mxu0 0.0
  %2000 = vmatprep.subr.mxu0 0.0
  %2001 = vmatpush1.msra.mxu0 0.0
  %2002 = vmatprep.mubr.f32.mxu0 0.0
  %2003 = vmatmul.mubr.f32.gmra.mrb[0].mxu0 %v1936
  %v2004 = vpop.f32.mrb[0].mxu0
  %v2005 = vadd.f32 %v1931, %v2004
  %v2006 = vpop.f32.mrb[0].mxu0
  %v2007 = vadd.f32 %v1933, %v2006
  %2008 = vdwg.mxu0
  %v2009 = vmul.f32 %v1840, %v250
  %v2010 = vmul.f32 %v1841, %v254
  %v2011 = vmul.f32 %v1845, %v252
  %s2012 = scalar_lea.vmem %s2, 16
  %v2013 = vld [vmem:[%s2012] sm:$0xff]
  %2017 = vrot.lane.b32.xlu0 %v2009, 126
  %v2018 = vpop.permute.xlu0 %2017
  %2019 = vrot.lane.b32.xlu0 %v2010, 126
  %v2020 = vpop.permute.xlu0 %2019
  %2021 = vrot.lane.b32.xlu0 %v2011, 126
  %v2022 = vpop.permute.xlu0 %2021
  %v2023 = vsel %vm272, %v2018, %v2020
  %v2024 = vsel %vm272, %v2020, %v2022
  %v2028 = vsel %vm91, %v2013, 0
  %2030 = vmatprep.subr.mxu0 %v2024
  %2031 = vmatpush1.msra.mxu0 %v2023
  %2032 = vmatprep.subr.mxu0 0.0
  %2033 = vmatpush1.msra.mxu0 0.0
  %2034 = vmatprep.subr.mxu0 0.0
  %2035 = vmatpush1.msra.mxu0 0.0
  %2036 = vmatprep.subr.mxu0 0.0
  %2037 = vmatpush1.msra.mxu0 0.0
  %2038 = vmatprep.subr.mxu0 0.0
  %2039 = vmatpush1.msra.mxu0 0.0
  %2040 = vmatprep.subr.mxu0 0.0
  %2041 = vmatpush1.msra.mxu0 0.0
  %2042 = vmatprep.subr.mxu0 0.0
  %2043 = vmatpush1.msra.mxu0 0.0
  %2044 = vmatprep.subr.mxu0 0.0
  %2045 = vmatpush1.msra.mxu0 0.0
  %2046 = vmatprep.subr.mxu0 0.0
  %2047 = vmatpush1.msra.mxu0 0.0
  %2048 = vmatprep.subr.mxu0 0.0
  %2049 = vmatpush1.msra.mxu0 0.0
  %2050 = vmatprep.subr.mxu0 0.0
  %2051 = vmatpush1.msra.mxu0 0.0
  %2052 = vmatprep.subr.mxu0 0.0
  %2053 = vmatpush1.msra.mxu0 0.0
  %2054 = vmatprep.subr.mxu0 0.0
  %2055 = vmatpush1.msra.mxu0 0.0
  %2056 = vmatprep.subr.mxu0 0.0
  %2057 = vmatpush1.msra.mxu0 0.0
  %2058 = vmatprep.subr.mxu0 0.0
  %2059 = vmatpush1.msra.mxu0 0.0
  %2060 = vmatprep.subr.mxu0 0.0
  %2061 = vmatpush1.msra.mxu0 0.0
  %2062 = vmatprep.subr.mxu0 0.0
  %2063 = vmatpush1.msra.mxu0 0.0
  %2064 = vmatprep.subr.mxu0 0.0
  %2065 = vmatpush1.msra.mxu0 0.0
  %2066 = vmatprep.subr.mxu0 0.0
  %2067 = vmatpush1.msra.mxu0 0.0
  %2068 = vmatprep.subr.mxu0 0.0
  %2069 = vmatpush1.msra.mxu0 0.0
  %2070 = vmatprep.subr.mxu0 0.0
  %2071 = vmatpush1.msra.mxu0 0.0
  %2072 = vmatprep.subr.mxu0 0.0
  %2073 = vmatpush1.msra.mxu0 0.0
  %2074 = vmatprep.subr.mxu0 0.0
  %2075 = vmatpush1.msra.mxu0 0.0
  %2076 = vmatprep.subr.mxu0 0.0
  %2077 = vmatpush1.msra.mxu0 0.0
  %2078 = vmatprep.subr.mxu0 0.0
  %2079 = vmatpush1.msra.mxu0 0.0
  %2080 = vmatprep.subr.mxu0 0.0
  %2081 = vmatpush1.msra.mxu0 0.0
  %2082 = vmatprep.subr.mxu0 0.0
  %2083 = vmatpush1.msra.mxu0 0.0
  %2084 = vmatprep.subr.mxu0 0.0
  %2085 = vmatpush1.msra.mxu0 0.0
  %2086 = vmatprep.subr.mxu0 0.0
  %2087 = vmatpush1.msra.mxu0 0.0
  %2088 = vmatprep.subr.mxu0 0.0
  %2089 = vmatpush1.msra.mxu0 0.0
  %2090 = vmatprep.subr.mxu0 0.0
  %2091 = vmatpush1.msra.mxu0 0.0
  %2092 = vmatprep.subr.mxu0 0.0
  %2093 = vmatpush1.msra.mxu0 0.0
  %2094 = vmatprep.mubr.f32.mxu0 0.0
  %2095 = vmatmul.mubr.f32.gmra.mrb[0].mxu0 %v2028
  %v2096 = vpop.f32.mrb[0].mxu0
  %v2097 = vadd.f32 0.0, %v2096
  %v2098 = vpop.f32.mrb[0].mxu0
  %v2099 = vadd.f32 0.0, %v2098
  %2100 = vdwg.mxu0
  %v2101 = vadd.f32 %v2005, %v2097
  %v2102 = vadd.f32 %v2007, %v2099
  %v2103 = vmul.f32 %v1840, %v354
  %v2104 = vmul.f32 %v1841, %v358
  %v2105 = vmul.f32 %v1845, %v356
  %s2106 = scalar_lea.vmem %s2, 24
  %v2107 = vld [vmem:[%s2106] sm:$0xff]
  %2111 = vrot.lane.b32.xlu0 %v2103, 112
  %v2112 = vpop.permute.xlu0 %2111
  %2113 = vrot.lane.b32.xlu0 %v2104, 112
  %v2114 = vpop.permute.xlu0 %2113
  %2115 = vrot.lane.b32.xlu0 %v2105, 112
  %v2116 = vpop.permute.xlu0 %2115
  %v2117 = vsel %vm376, %v2112, %v2114
  %v2118 = vsel %vm376, %v2114, %v2116
  %v2122 = vsel %vm91, %v2107, 0
  %2124 = vmatprep.subr.mxu0 %v2118
  %2125 = vmatpush1.msra.mxu0 %v2117
  %2126 = vmatprep.subr.mxu0 0.0
  %2127 = vmatpush1.msra.mxu0 0.0
  %2128 = vmatprep.subr.mxu0 0.0
  %2129 = vmatpush1.msra.mxu0 0.0
  %2130 = vmatprep.subr.mxu0 0.0
  %2131 = vmatpush1.msra.mxu0 0.0
  %2132 = vmatprep.subr.mxu0 0.0
  %2133 = vmatpush1.msra.mxu0 0.0
  %2134 = vmatprep.subr.mxu0 0.0
  %2135 = vmatpush1.msra.mxu0 0.0
  %2136 = vmatprep.subr.mxu0 0.0
  %2137 = vmatpush1.msra.mxu0 0.0
  %2138 = vmatprep.subr.mxu0 0.0
  %2139 = vmatpush1.msra.mxu0 0.0
  %2140 = vmatprep.subr.mxu0 0.0
  %2141 = vmatpush1.msra.mxu0 0.0
  %2142 = vmatprep.subr.mxu0 0.0
  %2143 = vmatpush1.msra.mxu0 0.0
  %2144 = vmatprep.subr.mxu0 0.0
  %2145 = vmatpush1.msra.mxu0 0.0
  %2146 = vmatprep.subr.mxu0 0.0
  %2147 = vmatpush1.msra.mxu0 0.0
  %2148 = vmatprep.subr.mxu0 0.0
  %2149 = vmatpush1.msra.mxu0 0.0
  %2150 = vmatprep.subr.mxu0 0.0
  %2151 = vmatpush1.msra.mxu0 0.0
  %2152 = vmatprep.subr.mxu0 0.0
  %2153 = vmatpush1.msra.mxu0 0.0
  %2154 = vmatprep.subr.mxu0 0.0
  %2155 = vmatpush1.msra.mxu0 0.0
  %2156 = vmatprep.subr.mxu0 0.0
  %2157 = vmatpush1.msra.mxu0 0.0
  %2158 = vmatprep.subr.mxu0 0.0
  %2159 = vmatpush1.msra.mxu0 0.0
  %2160 = vmatprep.subr.mxu0 0.0
  %2161 = vmatpush1.msra.mxu0 0.0
  %2162 = vmatprep.subr.mxu0 0.0
  %2163 = vmatpush1.msra.mxu0 0.0
  %2164 = vmatprep.subr.mxu0 0.0
  %2165 = vmatpush1.msra.mxu0 0.0
  %2166 = vmatprep.subr.mxu0 0.0
  %2167 = vmatpush1.msra.mxu0 0.0
  %2168 = vmatprep.subr.mxu0 0.0
  %2169 = vmatpush1.msra.mxu0 0.0
  %2170 = vmatprep.subr.mxu0 0.0
  %2171 = vmatpush1.msra.mxu0 0.0
  %2172 = vmatprep.subr.mxu0 0.0
  %2173 = vmatpush1.msra.mxu0 0.0
  %2174 = vmatprep.subr.mxu0 0.0
  %2175 = vmatpush1.msra.mxu0 0.0
  %2176 = vmatprep.subr.mxu0 0.0
  %2177 = vmatpush1.msra.mxu0 0.0
  %2178 = vmatprep.subr.mxu0 0.0
  %2179 = vmatpush1.msra.mxu0 0.0
  %2180 = vmatprep.subr.mxu0 0.0
  %2181 = vmatpush1.msra.mxu0 0.0
  %2182 = vmatprep.subr.mxu0 0.0
  %2183 = vmatpush1.msra.mxu0 0.0
  %2184 = vmatprep.subr.mxu0 0.0
  %2185 = vmatpush1.msra.mxu0 0.0
  %2186 = vmatprep.subr.mxu0 0.0
  %2187 = vmatpush1.msra.mxu0 0.0
  %2188 = vmatprep.mubr.f32.mxu0 0.0
  %2189 = vmatmul.mubr.f32.gmra.mrb[0].mxu0 %v2122
  %v2190 = vpop.f32.mrb[0].mxu0
  %v2191 = vadd.f32 0.0, %v2190
  %v2192 = vpop.f32.mrb[0].mxu0
  %v2193 = vadd.f32 0.0, %v2192
  %2194 = vdwg.mxu0
  %v2195 = vadd.f32 %v2101, %v2191
  %v2196 = vadd.f32 %v2102, %v2193
  %s2197 = scalar_lea.vmem %s2, 32
  %v2198 = vld [vmem:[%s2197] sm:$0xff]
  %2199 = vrot.lane.b32.xlu0 %v1840, 111
  %v2200 = vpop.permute.xlu0 %2199
  %2201 = vrot.lane.b32.xlu0 %v1841, 111
  %v2202 = vpop.permute.xlu0 %2201
  %2203 = vrot.lane.b32.xlu0 %v1845, 111
  %v2204 = vpop.permute.xlu0 %2203
  %v2205 = vsel %vm465, %v2200, %v2202
  %v2206 = vsel %vm465, %v2202, %v2204
  %v2210 = vsel %vm91, %v2198, 0
  %2212 = vmatprep.subr.mxu0 %v2206
  %2213 = vmatpush1.msra.mxu0 %v2205
  %2214 = vmatprep.subr.mxu0 0.0
  %2215 = vmatpush1.msra.mxu0 0.0
  %2216 = vmatprep.subr.mxu0 0.0
  %2217 = vmatpush1.msra.mxu0 0.0
  %2218 = vmatprep.subr.mxu0 0.0
  %2219 = vmatpush1.msra.mxu0 0.0
  %2220 = vmatprep.subr.mxu0 0.0
  %2221 = vmatpush1.msra.mxu0 0.0
  %2222 = vmatprep.subr.mxu0 0.0
  %2223 = vmatpush1.msra.mxu0 0.0
  %2224 = vmatprep.subr.mxu0 0.0
  %2225 = vmatpush1.msra.mxu0 0.0
  %2226 = vmatprep.subr.mxu0 0.0
  %2227 = vmatpush1.msra.mxu0 0.0
  %2228 = vmatprep.subr.mxu0 0.0
  %2229 = vmatpush1.msra.mxu0 0.0
  %2230 = vmatprep.subr.mxu0 0.0
  %2231 = vmatpush1.msra.mxu0 0.0
  %2232 = vmatprep.subr.mxu0 0.0
  %2233 = vmatpush1.msra.mxu0 0.0
  %2234 = vmatprep.subr.mxu0 0.0
  %2235 = vmatpush1.msra.mxu0 0.0
  %2236 = vmatprep.subr.mxu0 0.0
  %2237 = vmatpush1.msra.mxu0 0.0
  %2238 = vmatprep.subr.mxu0 0.0
  %2239 = vmatpush1.msra.mxu0 0.0
  %2240 = vmatprep.subr.mxu0 0.0
  %2241 = vmatpush1.msra.mxu0 0.0
  %2242 = vmatprep.subr.mxu0 0.0
  %2243 = vmatpush1.msra.mxu0 0.0
  %2244 = vmatprep.subr.mxu0 0.0
  %2245 = vmatpush1.msra.mxu0 0.0
  %2246 = vmatprep.subr.mxu0 0.0
  %2247 = vmatpush1.msra.mxu0 0.0
  %2248 = vmatprep.subr.mxu0 0.0
  %2249 = vmatpush1.msra.mxu0 0.0
  %2250 = vmatprep.subr.mxu0 0.0
  %2251 = vmatpush1.msra.mxu0 0.0
  %2252 = vmatprep.subr.mxu0 0.0
  %2253 = vmatpush1.msra.mxu0 0.0
  %2254 = vmatprep.subr.mxu0 0.0
  %2255 = vmatpush1.msra.mxu0 0.0
  %2256 = vmatprep.subr.mxu0 0.0
  %2257 = vmatpush1.msra.mxu0 0.0
  %2258 = vmatprep.subr.mxu0 0.0
  %2259 = vmatpush1.msra.mxu0 0.0
  %2260 = vmatprep.subr.mxu0 0.0
  %2261 = vmatpush1.msra.mxu0 0.0
  %2262 = vmatprep.subr.mxu0 0.0
  %2263 = vmatpush1.msra.mxu0 0.0
  %2264 = vmatprep.subr.mxu0 0.0
  %2265 = vmatpush1.msra.mxu0 0.0
  %2266 = vmatprep.subr.mxu0 0.0
  %2267 = vmatpush1.msra.mxu0 0.0
  %2268 = vmatprep.subr.mxu0 0.0
  %2269 = vmatpush1.msra.mxu0 0.0
  %2270 = vmatprep.subr.mxu0 0.0
  %2271 = vmatpush1.msra.mxu0 0.0
  %2272 = vmatprep.subr.mxu0 0.0
  %2273 = vmatpush1.msra.mxu0 0.0
  %2274 = vmatprep.subr.mxu0 0.0
  %2275 = vmatpush1.msra.mxu0 0.0
  %2276 = vmatprep.mubr.f32.mxu0 0.0
  %2277 = vmatmul.mubr.f32.gmra.mrb[0].mxu0 %v2210
  %v2278 = vpop.f32.mrb[0].mxu0
  %v2279 = vadd.f32 0.0, %v2278
  %v2280 = vpop.f32.mrb[0].mxu0
  %v2281 = vadd.f32 0.0, %v2280
  %2282 = vdwg.mxu0
  %v2283 = vadd.f32 %v2195, %v2279
  %v2284 = vadd.f32 %v2196, %v2281
  %v2285 = vmul.f32 %v1840, %v547
  %v2286 = vmul.f32 %v1841, %v551
  %v2287 = vmul.f32 %v1845, %v549
  %s2288 = scalar_lea.vmem %s2, 40
  %v2289 = vld [vmem:[%s2288] sm:$0xff]
  %2293 = vrot.lane.b32.xlu0 %v2285, 110
  %v2294 = vpop.permute.xlu0 %2293
  %2295 = vrot.lane.b32.xlu0 %v2286, 110
  %v2296 = vpop.permute.xlu0 %2295
  %2297 = vrot.lane.b32.xlu0 %v2287, 110
  %v2298 = vpop.permute.xlu0 %2297
  %v2299 = vsel %vm569, %v2294, %v2296
  %v2300 = vsel %vm569, %v2296, %v2298
  %v2304 = vsel %vm91, %v2289, 0
  %2306 = vmatprep.subr.mxu0 %v2300
  %2307 = vmatpush1.msra.mxu0 %v2299
  %2308 = vmatprep.subr.mxu0 0.0
  %2309 = vmatpush1.msra.mxu0 0.0
  %2310 = vmatprep.subr.mxu0 0.0
  %2311 = vmatpush1.msra.mxu0 0.0
  %2312 = vmatprep.subr.mxu0 0.0
  %2313 = vmatpush1.msra.mxu0 0.0
  %2314 = vmatprep.subr.mxu0 0.0
  %2315 = vmatpush1.msra.mxu0 0.0
  %2316 = vmatprep.subr.mxu0 0.0
  %2317 = vmatpush1.msra.mxu0 0.0
  %2318 = vmatprep.subr.mxu0 0.0
  %2319 = vmatpush1.msra.mxu0 0.0
  %2320 = vmatprep.subr.mxu0 0.0
  %2321 = vmatpush1.msra.mxu0 0.0
  %2322 = vmatprep.subr.mxu0 0.0
  %2323 = vmatpush1.msra.mxu0 0.0
  %2324 = vmatprep.subr.mxu0 0.0
  %2325 = vmatpush1.msra.mxu0 0.0
  %2326 = vmatprep.subr.mxu0 0.0
  %2327 = vmatpush1.msra.mxu0 0.0
  %2328 = vmatprep.subr.mxu0 0.0
  %2329 = vmatpush1.msra.mxu0 0.0
  %2330 = vmatprep.subr.mxu0 0.0
  %2331 = vmatpush1.msra.mxu0 0.0
  %2332 = vmatprep.subr.mxu0 0.0
  %2333 = vmatpush1.msra.mxu0 0.0
  %2334 = vmatprep.subr.mxu0 0.0
  %2335 = vmatpush1.msra.mxu0 0.0
  %2336 = vmatprep.subr.mxu0 0.0
  %2337 = vmatpush1.msra.mxu0 0.0
  %2338 = vmatprep.subr.mxu0 0.0
  %2339 = vmatpush1.msra.mxu0 0.0
  %2340 = vmatprep.subr.mxu0 0.0
  %2341 = vmatpush1.msra.mxu0 0.0
  %2342 = vmatprep.subr.mxu0 0.0
  %2343 = vmatpush1.msra.mxu0 0.0
  %2344 = vmatprep.subr.mxu0 0.0
  %2345 = vmatpush1.msra.mxu0 0.0
  %2346 = vmatprep.subr.mxu0 0.0
  %2347 = vmatpush1.msra.mxu0 0.0
  %2348 = vmatprep.subr.mxu0 0.0
  %2349 = vmatpush1.msra.mxu0 0.0
  %2350 = vmatprep.subr.mxu0 0.0
  %2351 = vmatpush1.msra.mxu0 0.0
  %2352 = vmatprep.subr.mxu0 0.0
  %2353 = vmatpush1.msra.mxu0 0.0
  %2354 = vmatprep.subr.mxu0 0.0
  %2355 = vmatpush1.msra.mxu0 0.0
  %2356 = vmatprep.subr.mxu0 0.0
  %2357 = vmatpush1.msra.mxu0 0.0
  %2358 = vmatprep.subr.mxu0 0.0
  %2359 = vmatpush1.msra.mxu0 0.0
  %2360 = vmatprep.subr.mxu0 0.0
  %2361 = vmatpush1.msra.mxu0 0.0
  %2362 = vmatprep.subr.mxu0 0.0
  %2363 = vmatpush1.msra.mxu0 0.0
  %2364 = vmatprep.subr.mxu0 0.0
  %2365 = vmatpush1.msra.mxu0 0.0
  %2366 = vmatprep.subr.mxu0 0.0
  %2367 = vmatpush1.msra.mxu0 0.0
  %2368 = vmatprep.subr.mxu0 0.0
  %2369 = vmatpush1.msra.mxu0 0.0
  %2370 = vmatprep.mubr.f32.mxu0 0.0
  %2371 = vmatmul.mubr.f32.gmra.mrb[0].mxu0 %v2304
  %v2372 = vpop.f32.mrb[0].mxu0
  %v2373 = vadd.f32 0.0, %v2372
  %v2374 = vpop.f32.mrb[0].mxu0
  %v2375 = vadd.f32 0.0, %v2374
  %2376 = vdwg.mxu0
  %v2377 = vadd.f32 %v2283, %v2373
  %v2378 = vadd.f32 %v2284, %v2375
  %v2379 = vmul.f32 %v1840, %v651
  %v2380 = vmul.f32 %v1841, %v655
  %v2381 = vmul.f32 %v1845, %v653
  %s2382 = scalar_lea.vmem %s2, 48
  %v2383 = vld [vmem:[%s2382] sm:$0xff]
  %2387 = vrot.lane.b32.xlu0 %v2379, 96
  %v2388 = vpop.permute.xlu0 %2387
  %2389 = vrot.lane.b32.xlu0 %v2380, 96
  %v2390 = vpop.permute.xlu0 %2389
  %2391 = vrot.lane.b32.xlu0 %v2381, 96
  %v2392 = vpop.permute.xlu0 %2391
  %v2393 = vsel %vm673, %v2388, %v2390
  %v2394 = vsel %vm673, %v2390, %v2392
  %v2398 = vsel %vm91, %v2383, 0
  %2400 = vmatprep.subr.mxu0 %v2394
  %2401 = vmatpush1.msra.mxu0 %v2393
  %2402 = vmatprep.subr.mxu0 0.0
  %2403 = vmatpush1.msra.mxu0 0.0
  %2404 = vmatprep.subr.mxu0 0.0
  %2405 = vmatpush1.msra.mxu0 0.0
  %2406 = vmatprep.subr.mxu0 0.0
  %2407 = vmatpush1.msra.mxu0 0.0
  %2408 = vmatprep.subr.mxu0 0.0
  %2409 = vmatpush1.msra.mxu0 0.0
  %2410 = vmatprep.subr.mxu0 0.0
  %2411 = vmatpush1.msra.mxu0 0.0
  %2412 = vmatprep.subr.mxu0 0.0
  %2413 = vmatpush1.msra.mxu0 0.0
  %2414 = vmatprep.subr.mxu0 0.0
  %2415 = vmatpush1.msra.mxu0 0.0
  %2416 = vmatprep.subr.mxu0 0.0
  %2417 = vmatpush1.msra.mxu0 0.0
  %2418 = vmatprep.subr.mxu0 0.0
  %2419 = vmatpush1.msra.mxu0 0.0
  %2420 = vmatprep.subr.mxu0 0.0
  %2421 = vmatpush1.msra.mxu0 0.0
  %2422 = vmatprep.subr.mxu0 0.0
  %2423 = vmatpush1.msra.mxu0 0.0
  %2424 = vmatprep.subr.mxu0 0.0
  %2425 = vmatpush1.msra.mxu0 0.0
  %2426 = vmatprep.subr.mxu0 0.0
  %2427 = vmatpush1.msra.mxu0 0.0
  %2428 = vmatprep.subr.mxu0 0.0
  %2429 = vmatpush1.msra.mxu0 0.0
  %2430 = vmatprep.subr.mxu0 0.0
  %2431 = vmatpush1.msra.mxu0 0.0
  %2432 = vmatprep.subr.mxu0 0.0
  %2433 = vmatpush1.msra.mxu0 0.0
  %2434 = vmatprep.subr.mxu0 0.0
  %2435 = vmatpush1.msra.mxu0 0.0
  %2436 = vmatprep.subr.mxu0 0.0
  %2437 = vmatpush1.msra.mxu0 0.0
  %2438 = vmatprep.subr.mxu0 0.0
  %2439 = vmatpush1.msra.mxu0 0.0
  %2440 = vmatprep.subr.mxu0 0.0
  %2441 = vmatpush1.msra.mxu0 0.0
  %2442 = vmatprep.subr.mxu0 0.0
  %2443 = vmatpush1.msra.mxu0 0.0
  %2444 = vmatprep.subr.mxu0 0.0
  %2445 = vmatpush1.msra.mxu0 0.0
  %2446 = vmatprep.subr.mxu0 0.0
  %2447 = vmatpush1.msra.mxu0 0.0
  %2448 = vmatprep.subr.mxu0 0.0
  %2449 = vmatpush1.msra.mxu0 0.0
  %2450 = vmatprep.subr.mxu0 0.0
  %2451 = vmatpush1.msra.mxu0 0.0
  %2452 = vmatprep.subr.mxu0 0.0
  %2453 = vmatpush1.msra.mxu0 0.0
  %2454 = vmatprep.subr.mxu0 0.0
  %2455 = vmatpush1.msra.mxu0 0.0
  %2456 = vmatprep.subr.mxu0 0.0
  %2457 = vmatpush1.msra.mxu0 0.0
  %2458 = vmatprep.subr.mxu0 0.0
  %2459 = vmatpush1.msra.mxu0 0.0
  %2460 = vmatprep.subr.mxu0 0.0
  %2461 = vmatpush1.msra.mxu0 0.0
  %2462 = vmatprep.subr.mxu0 0.0
  %2463 = vmatpush1.msra.mxu0 0.0
  %2464 = vmatprep.mubr.f32.mxu0 0.0
  %2465 = vmatmul.mubr.f32.gmra.mrb[0].mxu0 %v2398
  %v2466 = vpop.f32.mrb[0].mxu0
  %v2467 = vadd.f32 0.0, %v2466
  %v2468 = vpop.f32.mrb[0].mxu0
  %v2469 = vadd.f32 0.0, %v2468
  %2470 = vdwg.mxu0
  %v2471 = vadd.f32 %v2377, %v2467
  %v2472 = vadd.f32 %v2378, %v2469
  %s2473 = scalar_lea.vmem %s2, 56
  %v2474 = vld [vmem:[%s2473] sm:$0xff]
  %2475 = vrot.lane.b32.xlu0 %v1840, 95
  %v2476 = vpop.permute.xlu0 %2475
  %2477 = vrot.lane.b32.xlu0 %v1841, 95
  %v2478 = vpop.permute.xlu0 %2477
  %2479 = vrot.lane.b32.xlu0 %v1845, 95
  %v2480 = vpop.permute.xlu0 %2479
  %v2481 = vsel %vm762, %v2476, %v2478
  %v2482 = vsel %vm762, %v2478, %v2480
  %v2486 = vsel %vm91, %v2474, 0
  %2488 = vmatprep.subr.mxu0 %v2482
  %2489 = vmatpush1.msra.mxu0 %v2481
  %2490 = vmatprep.subr.mxu0 0.0
  %2491 = vmatpush1.msra.mxu0 0.0
  %2492 = vmatprep.subr.mxu0 0.0
  %2493 = vmatpush1.msra.mxu0 0.0
  %2494 = vmatprep.subr.mxu0 0.0
  %2495 = vmatpush1.msra.mxu0 0.0
  %2496 = vmatprep.subr.mxu0 0.0
  %2497 = vmatpush1.msra.mxu0 0.0
  %2498 = vmatprep.subr.mxu0 0.0
  %2499 = vmatpush1.msra.mxu0 0.0
  %2500 = vmatprep.subr.mxu0 0.0
  %2501 = vmatpush1.msra.mxu0 0.0
  %2502 = vmatprep.subr.mxu0 0.0
  %2503 = vmatpush1.msra.mxu0 0.0
  %2504 = vmatprep.subr.mxu0 0.0
  %2505 = vmatpush1.msra.mxu0 0.0
  %2506 = vmatprep.subr.mxu0 0.0
  %2507 = vmatpush1.msra.mxu0 0.0
  %2508 = vmatprep.subr.mxu0 0.0
  %2509 = vmatpush1.msra.mxu0 0.0
  %2510 = vmatprep.subr.mxu0 0.0
  %2511 = vmatpush1.msra.mxu0 0.0
  %2512 = vmatprep.subr.mxu0 0.0
  %2513 = vmatpush1.msra.mxu0 0.0
  %2514 = vmatprep.subr.mxu0 0.0
  %2515 = vmatpush1.msra.mxu0 0.0
  %2516 = vmatprep.subr.mxu0 0.0
  %2517 = vmatpush1.msra.mxu0 0.0
  %2518 = vmatprep.subr.mxu0 0.0
  %2519 = vmatpush1.msra.mxu0 0.0
  %2520 = vmatprep.subr.mxu0 0.0
  %2521 = vmatpush1.msra.mxu0 0.0
  %2522 = vmatprep.subr.mxu0 0.0
  %2523 = vmatpush1.msra.mxu0 0.0
  %2524 = vmatprep.subr.mxu0 0.0
  %2525 = vmatpush1.msra.mxu0 0.0
  %2526 = vmatprep.subr.mxu0 0.0
  %2527 = vmatpush1.msra.mxu0 0.0
  %2528 = vmatprep.subr.mxu0 0.0
  %2529 = vmatpush1.msra.mxu0 0.0
  %2530 = vmatprep.subr.mxu0 0.0
  %2531 = vmatpush1.msra.mxu0 0.0
  %2532 = vmatprep.subr.mxu0 0.0
  %2533 = vmatpush1.msra.mxu0 0.0
  %2534 = vmatprep.subr.mxu0 0.0
  %2535 = vmatpush1.msra.mxu0 0.0
  %2536 = vmatprep.subr.mxu0 0.0
  %2537 = vmatpush1.msra.mxu0 0.0
  %2538 = vmatprep.subr.mxu0 0.0
  %2539 = vmatpush1.msra.mxu0 0.0
  %2540 = vmatprep.subr.mxu0 0.0
  %2541 = vmatpush1.msra.mxu0 0.0
  %2542 = vmatprep.subr.mxu0 0.0
  %2543 = vmatpush1.msra.mxu0 0.0
  %2544 = vmatprep.subr.mxu0 0.0
  %2545 = vmatpush1.msra.mxu0 0.0
  %2546 = vmatprep.subr.mxu0 0.0
  %2547 = vmatpush1.msra.mxu0 0.0
  %2548 = vmatprep.subr.mxu0 0.0
  %2549 = vmatpush1.msra.mxu0 0.0
  %2550 = vmatprep.subr.mxu0 0.0
  %2551 = vmatpush1.msra.mxu0 0.0
  %2552 = vmatprep.mubr.f32.mxu0 0.0
  %2553 = vmatmul.mubr.f32.gmra.mrb[0].mxu0 %v2486
  %v2554 = vpop.f32.mrb[0].mxu0
  %v2555 = vadd.f32 0.0, %v2554
  %v2556 = vpop.f32.mrb[0].mxu0
  %v2557 = vadd.f32 0.0, %v2556
  %2558 = vdwg.mxu0
  %v2559 = vadd.f32 %v2471, %v2555
  %v2560 = vadd.f32 %v2472, %v2557
  %v2561 = vmul.f32 %v1840, %v844
  %v2562 = vmul.f32 %v1841, %v848
  %v2563 = vmul.f32 %v1845, %v846
  %s2564 = scalar_lea.vmem %s2, 64
  %v2565 = vld [vmem:[%s2564] sm:$0xff]
  %2569 = vrot.lane.b32.xlu0 %v2561, 94
  %v2570 = vpop.permute.xlu0 %2569
  %2571 = vrot.lane.b32.xlu0 %v2562, 94
  %v2572 = vpop.permute.xlu0 %2571
  %2573 = vrot.lane.b32.xlu0 %v2563, 94
  %v2574 = vpop.permute.xlu0 %2573
  %v2575 = vsel %vm866, %v2570, %v2572
  %v2576 = vsel %vm866, %v2572, %v2574
  %v2580 = vsel %vm91, %v2565, 0
  %2582 = vmatprep.subr.mxu0 %v2576
  %2583 = vmatpush1.msra.mxu0 %v2575
  %2584 = vmatprep.subr.mxu0 0.0
  %2585 = vmatpush1.msra.mxu0 0.0
  %2586 = vmatprep.subr.mxu0 0.0
  %2587 = vmatpush1.msra.mxu0 0.0
  %2588 = vmatprep.subr.mxu0 0.0
  %2589 = vmatpush1.msra.mxu0 0.0
  %2590 = vmatprep.subr.mxu0 0.0
  %2591 = vmatpush1.msra.mxu0 0.0
  %2592 = vmatprep.subr.mxu0 0.0
  %2593 = vmatpush1.msra.mxu0 0.0
  %2594 = vmatprep.subr.mxu0 0.0
  %2595 = vmatpush1.msra.mxu0 0.0
  %2596 = vmatprep.subr.mxu0 0.0
  %2597 = vmatpush1.msra.mxu0 0.0
  %2598 = vmatprep.subr.mxu0 0.0
  %2599 = vmatpush1.msra.mxu0 0.0
  %2600 = vmatprep.subr.mxu0 0.0
  %2601 = vmatpush1.msra.mxu0 0.0
  %2602 = vmatprep.subr.mxu0 0.0
  %2603 = vmatpush1.msra.mxu0 0.0
  %2604 = vmatprep.subr.mxu0 0.0
  %2605 = vmatpush1.msra.mxu0 0.0
  %2606 = vmatprep.subr.mxu0 0.0
  %2607 = vmatpush1.msra.mxu0 0.0
  %2608 = vmatprep.subr.mxu0 0.0
  %2609 = vmatpush1.msra.mxu0 0.0
  %2610 = vmatprep.subr.mxu0 0.0
  %2611 = vmatpush1.msra.mxu0 0.0
  %2612 = vmatprep.subr.mxu0 0.0
  %2613 = vmatpush1.msra.mxu0 0.0
  %2614 = vmatprep.subr.mxu0 0.0
  %2615 = vmatpush1.msra.mxu0 0.0
  %2616 = vmatprep.subr.mxu0 0.0
  %2617 = vmatpush1.msra.mxu0 0.0
  %2618 = vmatprep.subr.mxu0 0.0
  %2619 = vmatpush1.msra.mxu0 0.0
  %2620 = vmatprep.subr.mxu0 0.0
  %2621 = vmatpush1.msra.mxu0 0.0
  %2622 = vmatprep.subr.mxu0 0.0
  %2623 = vmatpush1.msra.mxu0 0.0
  %2624 = vmatprep.subr.mxu0 0.0
  %2625 = vmatpush1.msra.mxu0 0.0
  %2626 = vmatprep.subr.mxu0 0.0
  %2627 = vmatpush1.msra.mxu0 0.0
  %2628 = vmatprep.subr.mxu0 0.0
  %2629 = vmatpush1.msra.mxu0 0.0
  %2630 = vmatprep.subr.mxu0 0.0
  %2631 = vmatpush1.msra.mxu0 0.0
  %2632 = vmatprep.subr.mxu0 0.0
  %2633 = vmatpush1.msra.mxu0 0.0
  %2634 = vmatprep.subr.mxu0 0.0
  %2635 = vmatpush1.msra.mxu0 0.0
  %2636 = vmatprep.subr.mxu0 0.0
  %2637 = vmatpush1.msra.mxu0 0.0
  %2638 = vmatprep.subr.mxu0 0.0
  %2639 = vmatpush1.msra.mxu0 0.0
  %2640 = vmatprep.subr.mxu0 0.0
  %2641 = vmatpush1.msra.mxu0 0.0
  %2642 = vmatprep.subr.mxu0 0.0
  %2643 = vmatpush1.msra.mxu0 0.0
  %2644 = vmatprep.subr.mxu0 0.0
  %2645 = vmatpush1.msra.mxu0 0.0
  %2646 = vmatprep.mubr.f32.mxu0 0.0
  %2647 = vmatmul.mubr.f32.gmra.mrb[0].mxu0 %v2580
  %v2648 = vpop.f32.mrb[0].mxu0
  %v2649 = vadd.f32 0.0, %v2648
  %v2650 = vpop.f32.mrb[0].mxu0
  %v2651 = vadd.f32 0.0, %v2650
  %2652 = vdwg.mxu0
  %v2653 = vadd.f32 %v2559, %v2649
  %v2654 = vadd.f32 %v2560, %v2651
  %2657 = vrot.lane.b32.xlu0 %v1824, 17
  %v2658 = vpop.permute.xlu0 %2657
  %2659 = vrot.lane.b32.xlu0 %v1825, 17
  %v2660 = vpop.permute.xlu0 %2659
  %v2661 = vsel %vm32, %v2658, %v2660
  %2665 = vst.msk [vmem:[#allocation2] sm:$0xff] %vm1836, %v2658
  %2666 = vst [vmem:[#allocation2 + $0x8] sm:$0xff] %v2661
  %2667 = vst.msk [vmem:[#allocation2 + $0x10] sm:$0xff] %vm32, %v2660
  %v2668 = vld [vmem:[#allocation2] sm:$0xff]
  %v2669 = vld [vmem:[#allocation2 + $0x8] sm:$0xff]
  %v2670 = vmul.f32 %v2668, %v64
  %v2671 = vmul.f32 %v2669, %v68
  %v2672 = vld [vmem:[%s2] sm:$0xff]
  %v2673 = vld [vmem:[#allocation2 + $0x10] sm:$0xff]
  %v2674 = vld [vmem:[%s1846] sm:$0xff]
  %2678 = vrot.lane.b32.xlu0 %v2668, 127
  %v2679 = vpop.permute.xlu0 %2678
  %2680 = vrot.lane.b32.xlu0 %v2669, 127
  %v2681 = vpop.permute.xlu0 %2680
  %2682 = vrot.lane.b32.xlu0 %v2673, 127
  %v2683 = vpop.permute.xlu0 %2682
  %v2684 = vsel %vm86, %v2679, %v2681
  %v2685 = vsel %vm86, %v2681, %v2683
  %v2689 = vsel %vm91, %v2674, 0
  %2691 = vmatprep.subr.mxu0 %v2685
  %2692 = vmatpush1.msra.mxu0 %v2684
  %2693 = vmatprep.subr.mxu0 0.0
  %2694 = vmatpush1.msra.mxu0 0.0
  %2695 = vmatprep.subr.mxu0 0.0
  %2696 = vmatpush1.msra.mxu0 0.0
  %2697 = vmatprep.subr.mxu0 0.0
  %2698 = vmatpush1.msra.mxu0 0.0
  %2699 = vmatprep.subr.mxu0 0.0
  %2700 = vmatpush1.msra.mxu0 0.0
  %2701 = vmatprep.subr.mxu0 0.0
  %2702 = vmatpush1.msra.mxu0 0.0
  %2703 = vmatprep.subr.mxu0 0.0
  %2704 = vmatpush1.msra.mxu0 0.0
  %2705 = vmatprep.subr.mxu0 0.0
  %2706 = vmatpush1.msra.mxu0 0.0
  %2707 = vmatprep.subr.mxu0 0.0
  %2708 = vmatpush1.msra.mxu0 0.0
  %2709 = vmatprep.subr.mxu0 0.0
  %2710 = vmatpush1.msra.mxu0 0.0
  %2711 = vmatprep.subr.mxu0 0.0
  %2712 = vmatpush1.msra.mxu0 0.0
  %2713 = vmatprep.subr.mxu0 0.0
  %2714 = vmatpush1.msra.mxu0 0.0
  %2715 = vmatprep.subr.mxu0 0.0
  %2716 = vmatpush1.msra.mxu0 0.0
  %2717 = vmatprep.subr.mxu0 0.0
  %2718 = vmatpush1.msra.mxu0 0.0
  %2719 = vmatprep.subr.mxu0 0.0
  %2720 = vmatpush1.msra.mxu0 0.0
  %2721 = vmatprep.subr.mxu0 0.0
  %2722 = vmatpush1.msra.mxu0 0.0
  %2723 = vmatprep.subr.mxu0 0.0
  %2724 = vmatpush1.msra.mxu0 0.0
  %2725 = vmatprep.subr.mxu0 0.0
  %2726 = vmatpush1.msra.mxu0 0.0
  %2727 = vmatprep.subr.mxu0 0.0
  %2728 = vmatpush1.msra.mxu0 0.0
  %2729 = vmatprep.subr.mxu0 0.0
  %2730 = vmatpush1.msra.mxu0 0.0
  %2731 = vmatprep.subr.mxu0 0.0
  %2732 = vmatpush1.msra.mxu0 0.0
  %2733 = vmatprep.subr.mxu0 0.0
  %2734 = vmatpush1.msra.mxu0 0.0
  %2735 = vmatprep.subr.mxu0 0.0
  %2736 = vmatpush1.msra.mxu0 0.0
  %2737 = vmatprep.subr.mxu0 0.0
  %2738 = vmatpush1.msra.mxu0 0.0
  %2739 = vmatprep.subr.mxu0 0.0
  %2740 = vmatpush1.msra.mxu0 0.0
  %2741 = vmatprep.subr.mxu0 0.0
  %2742 = vmatpush1.msra.mxu0 0.0
  %2743 = vmatprep.subr.mxu0 0.0
  %2744 = vmatpush1.msra.mxu0 0.0
  %2745 = vmatprep.subr.mxu0 0.0
  %2746 = vmatpush1.msra.mxu0 0.0
  %2747 = vmatprep.subr.mxu0 0.0
  %2748 = vmatpush1.msra.mxu0 0.0
  %2749 = vmatprep.subr.mxu0 0.0
  %2750 = vmatpush1.msra.mxu0 0.0
  %2751 = vmatprep.subr.mxu0 0.0
  %2752 = vmatpush1.msra.mxu0 0.0
  %2753 = vmatprep.subr.mxu0 0.0
  %2754 = vmatpush1.msra.mxu0 0.0
  %2755 = vmatprep.mubr.f32.mxu0 0.0
  %2756 = vmatmul.mubr.f32.gmra.mrb[0].mxu0 %v2689
  %v2757 = vpop.f32.mrb[0].mxu0
  %v2758 = vadd.f32 0.0, %v2757
  %v2759 = vpop.f32.mrb[0].mxu0
  %v2760 = vadd.f32 0.0, %v2759
  %2761 = vdwg.mxu0
  %v2763 = vsel %vm91, %v2672, 0
  %2765 = vmatprep.subr.mxu0 %v2671
  %2766 = vmatpush1.msra.mxu0 %v2670
  %2767 = vmatprep.subr.mxu0 0.0
  %2768 = vmatpush1.msra.mxu0 0.0
  %2769 = vmatprep.subr.mxu0 0.0
  %2770 = vmatpush1.msra.mxu0 0.0
  %2771 = vmatprep.subr.mxu0 0.0
  %2772 = vmatpush1.msra.mxu0 0.0
  %2773 = vmatprep.subr.mxu0 0.0
  %2774 = vmatpush1.msra.mxu0 0.0
  %2775 = vmatprep.subr.mxu0 0.0
  %2776 = vmatpush1.msra.mxu0 0.0
  %2777 = vmatprep.subr.mxu0 0.0
  %2778 = vmatpush1.msra.mxu0 0.0
  %2779 = vmatprep.subr.mxu0 0.0
  %2780 = vmatpush1.msra.mxu0 0.0
  %2781 = vmatprep.subr.mxu0 0.0
  %2782 = vmatpush1.msra.mxu0 0.0
  %2783 = vmatprep.subr.mxu0 0.0
  %2784 = vmatpush1.msra.mxu0 0.0
  %2785 = vmatprep.subr.mxu0 0.0
  %2786 = vmatpush1.msra.mxu0 0.0
  %2787 = vmatprep.subr.mxu0 0.0
  %2788 = vmatpush1.msra.mxu0 0.0
  %2789 = vmatprep.subr.mxu0 0.0
  %2790 = vmatpush1.msra.mxu0 0.0
  %2791 = vmatprep.subr.mxu0 0.0
  %2792 = vmatpush1.msra.mxu0 0.0
  %2793 = vmatprep.subr.mxu0 0.0
  %2794 = vmatpush1.msra.mxu0 0.0
  %2795 = vmatprep.subr.mxu0 0.0
  %2796 = vmatpush1.msra.mxu0 0.0
  %2797 = vmatprep.subr.mxu0 0.0
  %2798 = vmatpush1.msra.mxu0 0.0
  %2799 = vmatprep.subr.mxu0 0.0
  %2800 = vmatpush1.msra.mxu0 0.0
  %2801 = vmatprep.subr.mxu0 0.0
  %2802 = vmatpush1.msra.mxu0 0.0
  %2803 = vmatprep.subr.mxu0 0.0
  %2804 = vmatpush1.msra.mxu0 0.0
  %2805 = vmatprep.subr.mxu0 0.0
  %2806 = vmatpush1.msra.mxu0 0.0
  %2807 = vmatprep.subr.mxu0 0.0
  %2808 = vmatpush1.msra.mxu0 0.0
  %2809 = vmatprep.subr.mxu0 0.0
  %2810 = vmatpush1.msra.mxu0 0.0
  %2811 = vmatprep.subr.mxu0 0.0
  %2812 = vmatpush1.msra.mxu0 0.0
  %2813 = vmatprep.subr.mxu0 0.0
  %2814 = vmatpush1.msra.mxu0 0.0
  %2815 = vmatprep.subr.mxu0 0.0
  %2816 = vmatpush1.msra.mxu0 0.0
  %2817 = vmatprep.subr.mxu0 0.0
  %2818 = vmatpush1.msra.mxu0 0.0
  %2819 = vmatprep.subr.mxu0 0.0
  %2820 = vmatpush1.msra.mxu0 0.0
  %2821 = vmatprep.subr.mxu0 0.0
  %2822 = vmatpush1.msra.mxu0 0.0
  %2823 = vmatprep.subr.mxu0 0.0
  %2824 = vmatpush1.msra.mxu0 0.0
  %2825 = vmatprep.subr.mxu0 0.0
  %2826 = vmatpush1.msra.mxu0 0.0
  %2827 = vmatprep.subr.mxu0 0.0
  %2828 = vmatpush1.msra.mxu0 0.0
  %2829 = vmatprep.mubr.f32.mxu0 0.0
  %2830 = vmatmul.mubr.f32.gmra.mrb[0].mxu0 %v2763
  %v2831 = vpop.f32.mrb[0].mxu0
  %v2832 = vadd.f32 %v2758, %v2831
  %v2833 = vpop.f32.mrb[0].mxu0
  %v2834 = vadd.f32 %v2760, %v2833
  %2835 = vdwg.mxu0
  %v2836 = vmul.f32 %v2668, %v250
  %v2837 = vmul.f32 %v2669, %v254
  %v2838 = vmul.f32 %v2673, %v252
  %v2839 = vld [vmem:[%s2012] sm:$0xff]
  %2843 = vrot.lane.b32.xlu0 %v2836, 126
  %v2844 = vpop.permute.xlu0 %2843
  %2845 = vrot.lane.b32.xlu0 %v2837, 126
  %v2846 = vpop.permute.xlu0 %2845
  %2847 = vrot.lane.b32.xlu0 %v2838, 126
  %v2848 = vpop.permute.xlu0 %2847
  %v2849 = vsel %vm272, %v2844, %v2846
  %v2850 = vsel %vm272, %v2846, %v2848
  %v2854 = vsel %vm91, %v2839, 0
  %2856 = vmatprep.subr.mxu0 %v2850
  %2857 = vmatpush1.msra.mxu0 %v2849
  %2858 = vmatprep.subr.mxu0 0.0
  %2859 = vmatpush1.msra.mxu0 0.0
  %2860 = vmatprep.subr.mxu0 0.0
  %2861 = vmatpush1.msra.mxu0 0.0
  %2862 = vmatprep.subr.mxu0 0.0
  %2863 = vmatpush1.msra.mxu0 0.0
  %2864 = vmatprep.subr.mxu0 0.0
  %2865 = vmatpush1.msra.mxu0 0.0
  %2866 = vmatprep.subr.mxu0 0.0
  %2867 = vmatpush1.msra.mxu0 0.0
  %2868 = vmatprep.subr.mxu0 0.0
  %2869 = vmatpush1.msra.mxu0 0.0
  %2870 = vmatprep.subr.mxu0 0.0
  %2871 = vmatpush1.msra.mxu0 0.0
  %2872 = vmatprep.subr.mxu0 0.0
  %2873 = vmatpush1.msra.mxu0 0.0
  %2874 = vmatprep.subr.mxu0 0.0
  %2875 = vmatpush1.msra.mxu0 0.0
  %2876 = vmatprep.subr.mxu0 0.0
  %2877 = vmatpush1.msra.mxu0 0.0
  %2878 = vmatprep.subr.mxu0 0.0
  %2879 = vmatpush1.msra.mxu0 0.0
  %2880 = vmatprep.subr.mxu0 0.0
  %2881 = vmatpush1.msra.mxu0 0.0
  %2882 = vmatprep.subr.mxu0 0.0
  %2883 = vmatpush1.msra.mxu0 0.0
  %2884 = vmatprep.subr.mxu0 0.0
  %2885 = vmatpush1.msra.mxu0 0.0
  %2886 = vmatprep.subr.mxu0 0.0
  %2887 = vmatpush1.msra.mxu0 0.0
  %2888 = vmatprep.subr.mxu0 0.0
  %2889 = vmatpush1.msra.mxu0 0.0
  %2890 = vmatprep.subr.mxu0 0.0
  %2891 = vmatpush1.msra.mxu0 0.0
  %2892 = vmatprep.subr.mxu0 0.0
  %2893 = vmatpush1.msra.mxu0 0.0
  %2894 = vmatprep.subr.mxu0 0.0
  %2895 = vmatpush1.msra.mxu0 0.0
  %2896 = vmatprep.subr.mxu0 0.0
  %2897 = vmatpush1.msra.mxu0 0.0
  %2898 = vmatprep.subr.mxu0 0.0
  %2899 = vmatpush1.msra.mxu0 0.0
  %2900 = vmatprep.subr.mxu0 0.0
  %2901 = vmatpush1.msra.mxu0 0.0
  %2902 = vmatprep.subr.mxu0 0.0
  %2903 = vmatpush1.msra.mxu0 0.0
  %2904 = vmatprep.subr.mxu0 0.0
  %2905 = vmatpush1.msra.mxu0 0.0
  %2906 = vmatprep.subr.mxu0 0.0
  %2907 = vmatpush1.msra.mxu0 0.0
  %2908 = vmatprep.subr.mxu0 0.0
  %2909 = vmatpush1.msra.mxu0 0.0
  %2910 = vmatprep.subr.mxu0 0.0
  %2911 = vmatpush1.msra.mxu0 0.0
  %2912 = vmatprep.subr.mxu0 0.0
  %2913 = vmatpush1.msra.mxu0 0.0
  %2914 = vmatprep.subr.mxu0 0.0
  %2915 = vmatpush1.msra.mxu0 0.0
  %2916 = vmatprep.subr.mxu0 0.0
  %2917 = vmatpush1.msra.mxu0 0.0
  %2918 = vmatprep.subr.mxu0 0.0
  %2919 = vmatpush1.msra.mxu0 0.0
  %2920 = vmatprep.mubr.f32.mxu0 0.0
  %2921 = vmatmul.mubr.f32.gmra.mrb[0].mxu0 %v2854
  %v2922 = vpop.f32.mrb[0].mxu0
  %v2923 = vadd.f32 0.0, %v2922
  %v2924 = vpop.f32.mrb[0].mxu0
  %v2925 = vadd.f32 0.0, %v2924
  %2926 = vdwg.mxu0
  %v2927 = vadd.f32 %v2832, %v2923
  %v2928 = vadd.f32 %v2834, %v2925
  %v2929 = vmul.f32 %v2668, %v354
  %v2930 = vmul.f32 %v2669, %v358
  %v2931 = vmul.f32 %v2673, %v356
  %v2932 = vld [vmem:[%s2106] sm:$0xff]
  %2936 = vrot.lane.b32.xlu0 %v2929, 112
  %v2937 = vpop.permute.xlu0 %2936
  %2938 = vrot.lane.b32.xlu0 %v2930, 112
  %v2939 = vpop.permute.xlu0 %2938
  %2940 = vrot.lane.b32.xlu0 %v2931, 112
  %v2941 = vpop.permute.xlu0 %2940
  %v2942 = vsel %vm376, %v2937, %v2939
  %v2943 = vsel %vm376, %v2939, %v2941
  %v2947 = vsel %vm91, %v2932, 0
  %2949 = vmatprep.subr.mxu0 %v2943
  %2950 = vmatpush1.msra.mxu0 %v2942
  %2951 = vmatprep.subr.mxu0 0.0
  %2952 = vmatpush1.msra.mxu0 0.0
  %2953 = vmatprep.subr.mxu0 0.0
  %2954 = vmatpush1.msra.mxu0 0.0
  %2955 = vmatprep.subr.mxu0 0.0
  %2956 = vmatpush1.msra.mxu0 0.0
  %2957 = vmatprep.subr.mxu0 0.0
  %2958 = vmatpush1.msra.mxu0 0.0
  %2959 = vmatprep.subr.mxu0 0.0
  %2960 = vmatpush1.msra.mxu0 0.0
  %2961 = vmatprep.subr.mxu0 0.0
  %2962 = vmatpush1.msra.mxu0 0.0
  %2963 = vmatprep.subr.mxu0 0.0
  %2964 = vmatpush1.msra.mxu0 0.0
  %2965 = vmatprep.subr.mxu0 0.0
  %2966 = vmatpush1.msra.mxu0 0.0
  %2967 = vmatprep.subr.mxu0 0.0
  %2968 = vmatpush1.msra.mxu0 0.0
  %2969 = vmatprep.subr.mxu0 0.0
  %2970 = vmatpush1.msra.mxu0 0.0
  %2971 = vmatprep.subr.mxu0 0.0
  %2972 = vmatpush1.msra.mxu0 0.0
  %2973 = vmatprep.subr.mxu0 0.0
  %2974 = vmatpush1.msra.mxu0 0.0
  %2975 = vmatprep.subr.mxu0 0.0
  %2976 = vmatpush1.msra.mxu0 0.0
  %2977 = vmatprep.subr.mxu0 0.0
  %2978 = vmatpush1.msra.mxu0 0.0
  %2979 = vmatprep.subr.mxu0 0.0
  %2980 = vmatpush1.msra.mxu0 0.0
  %2981 = vmatprep.subr.mxu0 0.0
  %2982 = vmatpush1.msra.mxu0 0.0
  %2983 = vmatprep.subr.mxu0 0.0
  %2984 = vmatpush1.msra.mxu0 0.0
  %2985 = vmatprep.subr.mxu0 0.0
  %2986 = vmatpush1.msra.mxu0 0.0
  %2987 = vmatprep.subr.mxu0 0.0
  %2988 = vmatpush1.msra.mxu0 0.0
  %2989 = vmatprep.subr.mxu0 0.0
  %2990 = vmatpush1.msra.mxu0 0.0
  %2991 = vmatprep.subr.mxu0 0.0
  %2992 = vmatpush1.msra.mxu0 0.0
  %2993 = vmatprep.subr.mxu0 0.0
  %2994 = vmatpush1.msra.mxu0 0.0
  %2995 = vmatprep.subr.mxu0 0.0
  %2996 = vmatpush1.msra.mxu0 0.0
  %2997 = vmatprep.subr.mxu0 0.0
  %2998 = vmatpush1.msra.mxu0 0.0
  %2999 = vmatprep.subr.mxu0 0.0
  %3000 = vmatpush1.msra.mxu0 0.0
  %3001 = vmatprep.subr.mxu0 0.0
  %3002 = vmatpush1.msra.mxu0 0.0
  %3003 = vmatprep.subr.mxu0 0.0
  %3004 = vmatpush1.msra.mxu0 0.0
  %3005 = vmatprep.subr.mxu0 0.0
  %3006 = vmatpush1.msra.mxu0 0.0
  %3007 = vmatprep.subr.mxu0 0.0
  %3008 = vmatpush1.msra.mxu0 0.0
  %3009 = vmatprep.subr.mxu0 0.0
  %3010 = vmatpush1.msra.mxu0 0.0
  %3011 = vmatprep.subr.mxu0 0.0
  %3012 = vmatpush1.msra.mxu0 0.0
  %3013 = vmatprep.mubr.f32.mxu0 0.0
  %3014 = vmatmul.mubr.f32.gmra.mrb[0].mxu0 %v2947
  %v3015 = vpop.f32.mrb[0].mxu0
  %v3016 = vadd.f32 0.0, %v3015
  %v3017 = vpop.f32.mrb[0].mxu0
  %v3018 = vadd.f32 0.0, %v3017
  %3019 = vdwg.mxu0
  %v3020 = vadd.f32 %v2927, %v3016
  %v3021 = vadd.f32 %v2928, %v3018
  %v3022 = vld [vmem:[%s2197] sm:$0xff]
  %3023 = vrot.lane.b32.xlu0 %v2668, 111
  %v3024 = vpop.permute.xlu0 %3023
  %3025 = vrot.lane.b32.xlu0 %v2669, 111
  %v3026 = vpop.permute.xlu0 %3025
  %3027 = vrot.lane.b32.xlu0 %v2673, 111
  %v3028 = vpop.permute.xlu0 %3027
  %v3029 = vsel %vm465, %v3024, %v3026
  %v3030 = vsel %vm465, %v3026, %v3028
  %v3034 = vsel %vm91, %v3022, 0
  %3036 = vmatprep.subr.mxu0 %v3030
  %3037 = vmatpush1.msra.mxu0 %v3029
  %3038 = vmatprep.subr.mxu0 0.0
  %3039 = vmatpush1.msra.mxu0 0.0
  %3040 = vmatprep.subr.mxu0 0.0
  %3041 = vmatpush1.msra.mxu0 0.0
  %3042 = vmatprep.subr.mxu0 0.0
  %3043 = vmatpush1.msra.mxu0 0.0
  %3044 = vmatprep.subr.mxu0 0.0
  %3045 = vmatpush1.msra.mxu0 0.0
  %3046 = vmatprep.subr.mxu0 0.0
  %3047 = vmatpush1.msra.mxu0 0.0
  %3048 = vmatprep.subr.mxu0 0.0
  %3049 = vmatpush1.msra.mxu0 0.0
  %3050 = vmatprep.subr.mxu0 0.0
  %3051 = vmatpush1.msra.mxu0 0.0
  %3052 = vmatprep.subr.mxu0 0.0
  %3053 = vmatpush1.msra.mxu0 0.0
  %3054 = vmatprep.subr.mxu0 0.0
  %3055 = vmatpush1.msra.mxu0 0.0
  %3056 = vmatprep.subr.mxu0 0.0
  %3057 = vmatpush1.msra.mxu0 0.0
  %3058 = vmatprep.subr.mxu0 0.0
  %3059 = vmatpush1.msra.mxu0 0.0
  %3060 = vmatprep.subr.mxu0 0.0
  %3061 = vmatpush1.msra.mxu0 0.0
  %3062 = vmatprep.subr.mxu0 0.0
  %3063 = vmatpush1.msra.mxu0 0.0
  %3064 = vmatprep.subr.mxu0 0.0
  %3065 = vmatpush1.msra.mxu0 0.0
  %3066 = vmatprep.subr.mxu0 0.0
  %3067 = vmatpush1.msra.mxu0 0.0
  %3068 = vmatprep.subr.mxu0 0.0
  %3069 = vmatpush1.msra.mxu0 0.0
  %3070 = vmatprep.subr.mxu0 0.0
  %3071 = vmatpush1.msra.mxu0 0.0
  %3072 = vmatprep.subr.mxu0 0.0
  %3073 = vmatpush1.msra.mxu0 0.0
  %3074 = vmatprep.subr.mxu0 0.0
  %3075 = vmatpush1.msra.mxu0 0.0
  %3076 = vmatprep.subr.mxu0 0.0
  %3077 = vmatpush1.msra.mxu0 0.0
  %3078 = vmatprep.subr.mxu0 0.0
  %3079 = vmatpush1.msra.mxu0 0.0
  %3080 = vmatprep.subr.mxu0 0.0
  %3081 = vmatpush1.msra.mxu0 0.0
  %3082 = vmatprep.subr.mxu0 0.0
  %3083 = vmatpush1.msra.mxu0 0.0
  %3084 = vmatprep.subr.mxu0 0.0
  %3085 = vmatpush1.msra.mxu0 0.0
  %3086 = vmatprep.subr.mxu0 0.0
  %3087 = vmatpush1.msra.mxu0 0.0
  %3088 = vmatprep.subr.mxu0 0.0
  %3089 = vmatpush1.msra.mxu0 0.0
  %3090 = vmatprep.subr.mxu0 0.0
  %3091 = vmatpush1.msra.mxu0 0.0
  %3092 = vmatprep.subr.mxu0 0.0
  %3093 = vmatpush1.msra.mxu0 0.0
  %3094 = vmatprep.subr.mxu0 0.0
  %3095 = vmatpush1.msra.mxu0 0.0
  %3096 = vmatprep.subr.mxu0 0.0
  %3097 = vmatpush1.msra.mxu0 0.0
  %3098 = vmatprep.subr.mxu0 0.0
  %3099 = vmatpush1.msra.mxu0 0.0
  %3100 = vmatprep.mubr.f32.mxu0 0.0
  %3101 = vmatmul.mubr.f32.gmra.mrb[0].mxu0 %v3034
  %v3102 = vpop.f32.mrb[0].mxu0
  %v3103 = vadd.f32 0.0, %v3102
  %v3104 = vpop.f32.mrb[0].mxu0
  %v3105 = vadd.f32 0.0, %v3104
  %3106 = vdwg.mxu0
  %v3107 = vadd.f32 %v3020, %v3103
  %v3108 = vadd.f32 %v3021, %v3105
  %v3109 = vmul.f32 %v2668, %v547
  %v3110 = vmul.f32 %v2669, %v551
  %v3111 = vmul.f32 %v2673, %v549
  %v3112 = vld [vmem:[%s2288] sm:$0xff]
  %3116 = vrot.lane.b32.xlu0 %v3109, 110
  %v3117 = vpop.permute.xlu0 %3116
  %3118 = vrot.lane.b32.xlu0 %v3110, 110
  %v3119 = vpop.permute.xlu0 %3118
  %3120 = vrot.lane.b32.xlu0 %v3111, 110
  %v3121 = vpop.permute.xlu0 %3120
  %v3122 = vsel %vm569, %v3117, %v3119
  %v3123 = vsel %vm569, %v3119, %v3121
  %v3127 = vsel %vm91, %v3112, 0
  %3129 = vmatprep.subr.mxu0 %v3123
  %3130 = vmatpush1.msra.mxu0 %v3122
  %3131 = vmatprep.subr.mxu0 0.0
  %3132 = vmatpush1.msra.mxu0 0.0
  %3133 = vmatprep.subr.mxu0 0.0
  %3134 = vmatpush1.msra.mxu0 0.0
  %3135 = vmatprep.subr.mxu0 0.0
  %3136 = vmatpush1.msra.mxu0 0.0
  %3137 = vmatprep.subr.mxu0 0.0
  %3138 = vmatpush1.msra.mxu0 0.0
  %3139 = vmatprep.subr.mxu0 0.0
  %3140 = vmatpush1.msra.mxu0 0.0
  %3141 = vmatprep.subr.mxu0 0.0
  %3142 = vmatpush1.msra.mxu0 0.0
  %3143 = vmatprep.subr.mxu0 0.0
  %3144 = vmatpush1.msra.mxu0 0.0
  %3145 = vmatprep.subr.mxu0 0.0
  %3146 = vmatpush1.msra.mxu0 0.0
  %3147 = vmatprep.subr.mxu0 0.0
  %3148 = vmatpush1.msra.mxu0 0.0
  %3149 = vmatprep.subr.mxu0 0.0
  %3150 = vmatpush1.msra.mxu0 0.0
  %3151 = vmatprep.subr.mxu0 0.0
  %3152 = vmatpush1.msra.mxu0 0.0
  %3153 = vmatprep.subr.mxu0 0.0
  %3154 = vmatpush1.msra.mxu0 0.0
  %3155 = vmatprep.subr.mxu0 0.0
  %3156 = vmatpush1.msra.mxu0 0.0
  %3157 = vmatprep.subr.mxu0 0.0
  %3158 = vmatpush1.msra.mxu0 0.0
  %3159 = vmatprep.subr.mxu0 0.0
  %3160 = vmatpush1.msra.mxu0 0.0
  %3161 = vmatprep.subr.mxu0 0.0
  %3162 = vmatpush1.msra.mxu0 0.0
  %3163 = vmatprep.subr.mxu0 0.0
  %3164 = vmatpush1.msra.mxu0 0.0
  %3165 = vmatprep.subr.mxu0 0.0
  %3166 = vmatpush1.msra.mxu0 0.0
  %3167 = vmatprep.subr.mxu0 0.0
  %3168 = vmatpush1.msra.mxu0 0.0
  %3169 = vmatprep.subr.mxu0 0.0
  %3170 = vmatpush1.msra.mxu0 0.0
  %3171 = vmatprep.subr.mxu0 0.0
  %3172 = vmatpush1.msra.mxu0 0.0
  %3173 = vmatprep.subr.mxu0 0.0
  %3174 = vmatpush1.msra.mxu0 0.0
  %3175 = vmatprep.subr.mxu0 0.0
  %3176 = vmatpush1.msra.mxu0 0.0
  %3177 = vmatprep.subr.mxu0 0.0
  %3178 = vmatpush1.msra.mxu0 0.0
  %3179 = vmatprep.subr.mxu0 0.0
  %3180 = vmatpush1.msra.mxu0 0.0
  %3181 = vmatprep.subr.mxu0 0.0
  %3182 = vmatpush1.msra.mxu0 0.0
  %3183 = vmatprep.subr.mxu0 0.0
  %3184 = vmatpush1.msra.mxu0 0.0
  %3185 = vmatprep.subr.mxu0 0.0
  %3186 = vmatpush1.msra.mxu0 0.0
  %3187 = vmatprep.subr.mxu0 0.0
  %3188 = vmatpush1.msra.mxu0 0.0
  %3189 = vmatprep.subr.mxu0 0.0
  %3190 = vmatpush1.msra.mxu0 0.0
  %3191 = vmatprep.subr.mxu0 0.0
  %3192 = vmatpush1.msra.mxu0 0.0
  %3193 = vmatprep.mubr.f32.mxu0 0.0
  %3194 = vmatmul.mubr.f32.gmra.mrb[0].mxu0 %v3127
  %v3195 = vpop.f32.mrb[0].mxu0
  %v3196 = vadd.f32 0.0, %v3195
  %v3197 = vpop.f32.mrb[0].mxu0
  %v3198 = vadd.f32 0.0, %v3197
  %3199 = vdwg.mxu0
  %v3200 = vadd.f32 %v3107, %v3196
  %v3201 = vadd.f32 %v3108, %v3198
  %v3202 = vmul.f32 %v2668, %v651
  %v3203 = vmul.f32 %v2669, %v655
  %v3204 = vmul.f32 %v2673, %v653
  %v3205 = vld [vmem:[%s2382] sm:$0xff]
  %3209 = vrot.lane.b32.xlu0 %v3202, 96
  %v3210 = vpop.permute.xlu0 %3209
  %3211 = vrot.lane.b32.xlu0 %v3203, 96
  %v3212 = vpop.permute.xlu0 %3211
  %3213 = vrot.lane.b32.xlu0 %v3204, 96
  %v3214 = vpop.permute.xlu0 %3213
  %v3215 = vsel %vm673, %v3210, %v3212
  %v3216 = vsel %vm673, %v3212, %v3214
  %v3220 = vsel %vm91, %v3205, 0
  %3222 = vmatprep.subr.mxu0 %v3216
  %3223 = vmatpush1.msra.mxu0 %v3215
  %3224 = vmatprep.subr.mxu0 0.0
  %3225 = vmatpush1.msra.mxu0 0.0
  %3226 = vmatprep.subr.mxu0 0.0
  %3227 = vmatpush1.msra.mxu0 0.0
  %3228 = vmatprep.subr.mxu0 0.0
  %3229 = vmatpush1.msra.mxu0 0.0
  %3230 = vmatprep.subr.mxu0 0.0
  %3231 = vmatpush1.msra.mxu0 0.0
  %3232 = vmatprep.subr.mxu0 0.0
  %3233 = vmatpush1.msra.mxu0 0.0
  %3234 = vmatprep.subr.mxu0 0.0
  %3235 = vmatpush1.msra.mxu0 0.0
  %3236 = vmatprep.subr.mxu0 0.0
  %3237 = vmatpush1.msra.mxu0 0.0
  %3238 = vmatprep.subr.mxu0 0.0
  %3239 = vmatpush1.msra.mxu0 0.0
  %3240 = vmatprep.subr.mxu0 0.0
  %3241 = vmatpush1.msra.mxu0 0.0
  %3242 = vmatprep.subr.mxu0 0.0
  %3243 = vmatpush1.msra.mxu0 0.0
  %3244 = vmatprep.subr.mxu0 0.0
  %3245 = vmatpush1.msra.mxu0 0.0
  %3246 = vmatprep.subr.mxu0 0.0
  %3247 = vmatpush1.msra.mxu0 0.0
  %3248 = vmatprep.subr.mxu0 0.0
  %3249 = vmatpush1.msra.mxu0 0.0
  %3250 = vmatprep.subr.mxu0 0.0
  %3251 = vmatpush1.msra.mxu0 0.0
  %3252 = vmatprep.subr.mxu0 0.0
  %3253 = vmatpush1.msra.mxu0 0.0
  %3254 = vmatprep.subr.mxu0 0.0
  %3255 = vmatpush1.msra.mxu0 0.0
  %3256 = vmatprep.subr.mxu0 0.0
  %3257 = vmatpush1.msra.mxu0 0.0
  %3258 = vmatprep.subr.mxu0 0.0
  %3259 = vmatpush1.msra.mxu0 0.0
  %3260 = vmatprep.subr.mxu0 0.0
  %3261 = vmatpush1.msra.mxu0 0.0
  %3262 = vmatprep.subr.mxu0 0.0
  %3263 = vmatpush1.msra.mxu0 0.0
  %3264 = vmatprep.subr.mxu0 0.0
  %3265 = vmatpush1.msra.mxu0 0.0
  %3266 = vmatprep.subr.mxu0 0.0
  %3267 = vmatpush1.msra.mxu0 0.0
  %3268 = vmatprep.subr.mxu0 0.0
  %3269 = vmatpush1.msra.mxu0 0.0
  %3270 = vmatprep.subr.mxu0 0.0
  %3271 = vmatpush1.msra.mxu0 0.0
  %3272 = vmatprep.subr.mxu0 0.0
  %3273 = vmatpush1.msra.mxu0 0.0
  %3274 = vmatprep.subr.mxu0 0.0
  %3275 = vmatpush1.msra.mxu0 0.0
  %3276 = vmatprep.subr.mxu0 0.0
  %3277 = vmatpush1.msra.mxu0 0.0
  %3278 = vmatprep.subr.mxu0 0.0
  %3279 = vmatpush1.msra.mxu0 0.0
  %3280 = vmatprep.subr.mxu0 0.0
  %3281 = vmatpush1.msra.mxu0 0.0
  %3282 = vmatprep.subr.mxu0 0.0
  %3283 = vmatpush1.msra.mxu0 0.0
  %3284 = vmatprep.subr.mxu0 0.0
  %3285 = vmatpush1.msra.mxu0 0.0
  %3286 = vmatprep.mubr.f32.mxu0 0.0
  %3287 = vmatmul.mubr.f32.gmra.mrb[0].mxu0 %v3220
  %v3288 = vpop.f32.mrb[0].mxu0
  %v3289 = vadd.f32 0.0, %v3288
  %v3290 = vpop.f32.mrb[0].mxu0
  %v3291 = vadd.f32 0.0, %v3290
  %3292 = vdwg.mxu0
  %v3293 = vadd.f32 %v3200, %v3289
  %v3294 = vadd.f32 %v3201, %v3291
  %v3295 = vld [vmem:[%s2473] sm:$0xff]
  %3296 = vrot.lane.b32.xlu0 %v2668, 95
  %v3297 = vpop.permute.xlu0 %3296
  %3298 = vrot.lane.b32.xlu0 %v2669, 95
  %v3299 = vpop.permute.xlu0 %3298
  %3300 = vrot.lane.b32.xlu0 %v2673, 95
  %v3301 = vpop.permute.xlu0 %3300
  %v3302 = vsel %vm762, %v3297, %v3299
  %v3303 = vsel %vm762, %v3299, %v3301
  %v3307 = vsel %vm91, %v3295, 0
  %3309 = vmatprep.subr.mxu0 %v3303
  %3310 = vmatpush1.msra.mxu0 %v3302
  %3311 = vmatprep.subr.mxu0 0.0
  %3312 = vmatpush1.msra.mxu0 0.0
  %3313 = vmatprep.subr.mxu0 0.0
  %3314 = vmatpush1.msra.mxu0 0.0
  %3315 = vmatprep.subr.mxu0 0.0
  %3316 = vmatpush1.msra.mxu0 0.0
  %3317 = vmatprep.subr.mxu0 0.0
  %3318 = vmatpush1.msra.mxu0 0.0
  %3319 = vmatprep.subr.mxu0 0.0
  %3320 = vmatpush1.msra.mxu0 0.0
  %3321 = vmatprep.subr.mxu0 0.0
  %3322 = vmatpush1.msra.mxu0 0.0
  %3323 = vmatprep.subr.mxu0 0.0
  %3324 = vmatpush1.msra.mxu0 0.0
  %3325 = vmatprep.subr.mxu0 0.0
  %3326 = vmatpush1.msra.mxu0 0.0
  %3327 = vmatprep.subr.mxu0 0.0
  %3328 = vmatpush1.msra.mxu0 0.0
  %3329 = vmatprep.subr.mxu0 0.0
  %3330 = vmatpush1.msra.mxu0 0.0
  %3331 = vmatprep.subr.mxu0 0.0
  %3332 = vmatpush1.msra.mxu0 0.0
  %3333 = vmatprep.subr.mxu0 0.0
  %3334 = vmatpush1.msra.mxu0 0.0
  %3335 = vmatprep.subr.mxu0 0.0
  %3336 = vmatpush1.msra.mxu0 0.0
  %3337 = vmatprep.subr.mxu0 0.0
  %3338 = vmatpush1.msra.mxu0 0.0
  %3339 = vmatprep.subr.mxu0 0.0
  %3340 = vmatpush1.msra.mxu0 0.0
  %3341 = vmatprep.subr.mxu0 0.0
  %3342 = vmatpush1.msra.mxu0 0.0
  %3343 = vmatprep.subr.mxu0 0.0
  %3344 = vmatpush1.msra.mxu0 0.0
  %3345 = vmatprep.subr.mxu0 0.0
  %3346 = vmatpush1.msra.mxu0 0.0
  %3347 = vmatprep.subr.mxu0 0.0
  %3348 = vmatpush1.msra.mxu0 0.0
  %3349 = vmatprep.subr.mxu0 0.0
  %3350 = vmatpush1.msra.mxu0 0.0
  %3351 = vmatprep.subr.mxu0 0.0
  %3352 = vmatpush1.msra.mxu0 0.0
  %3353 = vmatprep.subr.mxu0 0.0
  %3354 = vmatpush1.msra.mxu0 0.0
  %3355 = vmatprep.subr.mxu0 0.0
  %3356 = vmatpush1.msra.mxu0 0.0
  %3357 = vmatprep.subr.mxu0 0.0
  %3358 = vmatpush1.msra.mxu0 0.0
  %3359 = vmatprep.subr.mxu0 0.0
  %3360 = vmatpush1.msra.mxu0 0.0
  %3361 = vmatprep.subr.mxu0 0.0
  %3362 = vmatpush1.msra.mxu0 0.0
  %3363 = vmatprep.subr.mxu0 0.0
  %3364 = vmatpush1.msra.mxu0 0.0
  %3365 = vmatprep.subr.mxu0 0.0
  %3366 = vmatpush1.msra.mxu0 0.0
  %3367 = vmatprep.subr.mxu0 0.0
  %3368 = vmatpush1.msra.mxu0 0.0
  %3369 = vmatprep.subr.mxu0 0.0
  %3370 = vmatpush1.msra.mxu0 0.0
  %3371 = vmatprep.subr.mxu0 0.0
  %3372 = vmatpush1.msra.mxu0 0.0
  %3373 = vmatprep.mubr.f32.mxu0 0.0
  %3374 = vmatmul.mubr.f32.gmra.mrb[0].mxu0 %v3307
  %v3375 = vpop.f32.mrb[0].mxu0
  %v3376 = vadd.f32 0.0, %v3375
  %v3377 = vpop.f32.mrb[0].mxu0
  %v3378 = vadd.f32 0.0, %v3377
  %3379 = vdwg.mxu0
  %v3380 = vadd.f32 %v3293, %v3376
  %v3381 = vadd.f32 %v3294, %v3378
  %v3382 = vmul.f32 %v2668, %v844
  %v3383 = vmul.f32 %v2669, %v848
  %v3384 = vmul.f32 %v2673, %v846
  %v3385 = vld [vmem:[%s2564] sm:$0xff]
  %3389 = vrot.lane.b32.xlu0 %v3382, 94
  %v3390 = vpop.permute.xlu0 %3389
  %3391 = vrot.lane.b32.xlu0 %v3383, 94
  %v3392 = vpop.permute.xlu0 %3391
  %3393 = vrot.lane.b32.xlu0 %v3384, 94
  %v3394 = vpop.permute.xlu0 %3393
  %v3395 = vsel %vm866, %v3390, %v3392
  %v3396 = vsel %vm866, %v3392, %v3394
  %v3400 = vsel %vm91, %v3385, 0
  %3402 = vmatprep.subr.mxu0 %v3396
  %3403 = vmatpush1.msra.mxu0 %v3395
  %3404 = vmatprep.subr.mxu0 0.0
  %3405 = vmatpush1.msra.mxu0 0.0
  %3406 = vmatprep.subr.mxu0 0.0
  %3407 = vmatpush1.msra.mxu0 0.0
  %3408 = vmatprep.subr.mxu0 0.0
  %3409 = vmatpush1.msra.mxu0 0.0
  %3410 = vmatprep.subr.mxu0 0.0
  %3411 = vmatpush1.msra.mxu0 0.0
  %3412 = vmatprep.subr.mxu0 0.0
  %3413 = vmatpush1.msra.mxu0 0.0
  %3414 = vmatprep.subr.mxu0 0.0
  %3415 = vmatpush1.msra.mxu0 0.0
  %3416 = vmatprep.subr.mxu0 0.0
  %3417 = vmatpush1.msra.mxu0 0.0
  %3418 = vmatprep.subr.mxu0 0.0
  %3419 = vmatpush1.msra.mxu0 0.0
  %3420 = vmatprep.subr.mxu0 0.0
  %3421 = vmatpush1.msra.mxu0 0.0
  %3422 = vmatprep.subr.mxu0 0.0
  %3423 = vmatpush1.msra.mxu0 0.0
  %3424 = vmatprep.subr.mxu0 0.0
  %3425 = vmatpush1.msra.mxu0 0.0
  %3426 = vmatprep.subr.mxu0 0.0
  %3427 = vmatpush1.msra.mxu0 0.0
  %3428 = vmatprep.subr.mxu0 0.0
  %3429 = vmatpush1.msra.mxu0 0.0
  %3430 = vmatprep.subr.mxu0 0.0
  %3431 = vmatpush1.msra.mxu0 0.0
  %3432 = vmatprep.subr.mxu0 0.0
  %3433 = vmatpush1.msra.mxu0 0.0
  %3434 = vmatprep.subr.mxu0 0.0
  %3435 = vmatpush1.msra.mxu0 0.0
  %3436 = vmatprep.subr.mxu0 0.0
  %3437 = vmatpush1.msra.mxu0 0.0
  %3438 = vmatprep.subr.mxu0 0.0
  %3439 = vmatpush1.msra.mxu0 0.0
  %3440 = vmatprep.subr.mxu0 0.0
  %3441 = vmatpush1.msra.mxu0 0.0
  %3442 = vmatprep.subr.mxu0 0.0
  %3443 = vmatpush1.msra.mxu0 0.0
  %3444 = vmatprep.subr.mxu0 0.0
  %3445 = vmatpush1.msra.mxu0 0.0
  %3446 = vmatprep.subr.mxu0 0.0
  %3447 = vmatpush1.msra.mxu0 0.0
  %3448 = vmatprep.subr.mxu0 0.0
  %3449 = vmatpush1.msra.mxu0 0.0
  %3450 = vmatprep.subr.mxu0 0.0
  %3451 = vmatpush1.msra.mxu0 0.0
  %3452 = vmatprep.subr.mxu0 0.0
  %3453 = vmatpush1.msra.mxu0 0.0
  %3454 = vmatprep.subr.mxu0 0.0
  %3455 = vmatpush1.msra.mxu0 0.0
  %3456 = vmatprep.subr.mxu0 0.0
  %3457 = vmatpush1.msra.mxu0 0.0
  %3458 = vmatprep.subr.mxu0 0.0
  %3459 = vmatpush1.msra.mxu0 0.0
  %3460 = vmatprep.subr.mxu0 0.0
  %3461 = vmatpush1.msra.mxu0 0.0
  %3462 = vmatprep.subr.mxu0 0.0
  %3463 = vmatpush1.msra.mxu0 0.0
  %3464 = vmatprep.subr.mxu0 0.0
  %3465 = vmatpush1.msra.mxu0 0.0
  %3466 = vmatprep.mubr.f32.mxu0 0.0
  %3467 = vmatmul.mubr.f32.gmra.mrb[0].mxu0 %v3400
  %v3468 = vpop.f32.mrb[0].mxu0
  %v3469 = vadd.f32 0.0, %v3468
  %v3470 = vpop.f32.mrb[0].mxu0
  %v3471 = vadd.f32 0.0, %v3470
  %3472 = vdwg.mxu0
  %v3473 = vadd.f32 %v3380, %v3469
  %v3474 = vadd.f32 %v3381, %v3471
  %v3475 = vld [vmem:[%s5] sm:$0xff]
  %v3476 = vld [vmem:[%s6] sm:$0xff]
  %v3477 = vadd.f32 %v2653, %v2654
  %3478 = vadd.xlane.f32.xlu0 %v3477
  %v3479 = vpop.xlane.xlu0 %3478
  %v3480 = vadd.f32 %v3479, 0.0
  %v3481 = vadd.f32 %v3473, %v3474
  %3482 = vadd.xlane.f32.xlu0 %v3481
  %v3483 = vpop.xlane.xlu0 %3482
  %v3484 = vadd.f32 %v3480, %v3483
  %v3485 = vmul.f32 %v3484, 0.001953125
  %v3486 = vsub.f32 %v2653, %v3485
  %v3487 = vsub.f32 %v2654, %v3485
  %v3488 = vmul.f32 %v3486, %v3486
  %v3489 = vmul.f32 %v3487, %v3487
  %v3490 = vadd.f32 %v3488, %v3489
  %3491 = vadd.xlane.f32.xlu0 %v3490
  %v3492 = vpop.xlane.xlu0 %3491
  %v3493 = vadd.f32 %v3492, 0.0
  %v3494 = vsub.f32 %v3473, %v3485
  %v3495 = vsub.f32 %v3474, %v3485
  %v3496 = vmul.f32 %v3494, %v3494
  %v3497 = vmul.f32 %v3495, %v3495
  %v3498 = vadd.f32 %v3496, %v3497
  %3499 = vadd.xlane.f32.xlu0 %v3498
  %v3500 = vpop.xlane.xlu0 %3499
  %v3501 = vadd.f32 %v3493, %v3500
  %v3502 = vmul.f32 %v3501, 0.001953125
  %v3503 = vadd.f32 %v3502, 1e-05
  %v3504 = vrsqrt.pop %v3503
  %v3505 = vmul.f32 %v3475, %v3504
  %v3506 = vmul.f32 %v3485, %v3505
  %v3507 = vsub.f32 %v3476, %v3506
  %3509 = vset.pattern.permute.xlu0 0
  %3510 = vperm.xlu0 %3509, %v3505
  %v3511 = vpop.permute.xlu0 %3510
  %v3513 = vmul.f32 %v2653, %v3511
  %v3514 = vmul.f32 %v2654, %v3511
  %3516 = vset.pattern.permute.xlu0 0
  %3517 = vperm.xlu0 %3516, %v3507
  %v3518 = vpop.permute.xlu0 %3517
  %v3520 = vadd.f32 %v3513, %v3518
  %v3521 = vadd.f32 %v3514, %v3518
  %v3522 = vmax.f32 %v3520, 0.0
  %v3523 = vmax.f32 %v3521, 0.0
  %v3524 = vmul.f32 %v3473, %v3511
  %v3525 = vmul.f32 %v3474, %v3511
  %v3526 = vadd.f32 %v3524, %v3518
  %v3527 = vadd.f32 %v3525, %v3518
  %v3528 = vmax.f32 %v3526, 0.0
  %v3529 = vmax.f32 %v3527, 0.0
  %3530 = vst [vmem:[%s8] sm:$0xff] %v3522
  %3531 = vst [vmem:[%s8 + $0x8] sm:$0xff] %v3523
  %3532 = vst [vmem:[%s8 + $0x10] sm:$0xff] %v3528
  %3533 = vst [vmem:[%s8 + $0x18] sm:$0xff] %v3529
  // Predicated region
  $region34: #{double_conv_forward.1} parent=0 // pred_check
    _
  $region35: #{double_conv_forward.1} parent=0 // pred_check_branch
    %3535 = sbr.rel (0) target = $region37
  $region36: #{double_conv_forward.1} parent=0 // pred_region
    _
  $region37: #{double_conv_forward.1} parent=0 // pred_fallthru
    _
  // Predicated region
  $region38: #{double_conv_forward.1} parent=0 // pred_check
    _
  $region39: #{double_conv_forward.1} parent=0 // pred_check_branch
    %3537 = sbr.rel (0) target = $region41
  $region40: #{double_conv_forward.1} parent=0 // pred_region
    _
  $region41: #{double_conv_forward.1} parent=0 // pred_fallthru
    _

</llo_original>
